<compile_context>
chip_gen: v6e
topology: v6e:2x2x1
jax: 0.10.0
libtpu: 0.0.40
codegen_flags: <defaults>
</compile_context>

<pallas_src>
import jax
import jax.numpy as jnp
from jax.experimental import pallas as pl
from jax.experimental.pallas import tpu as pltpu


# ----------------------------------------------------------------------------
# Fused Pallas kernel (one batch element per grid step)
# ----------------------------------------------------------------------------
def _inception_kernel(x_ref,
                      wf_ref, bf_ref,      # fused 1x1   (Cin, c1+r2+r3) bf16 / (1, c1+r2+r3) f32
                      w23_ref, b23_ref,    # im2col 3x3  (9*(r2+r3), c3+c5) bf16 / (1, c3+c5) f32
                      w4_ref, b4_ref,      # pool proj   (Cin, pp) bf16 / (1, pp) f32
                      o_ref,
                      pad23_ref, padp_ref):
    _, H, W, Cin = x_ref.shape
    r23 = pad23_ref.shape[-1]             # r2 + r3
    c1 = wf_ref.shape[1] - r23            # branch1 width
    c35 = w23_ref.shape[1]                # c3 + c5

    x3d = x_ref[0]                        # (H, W, Cin), channels on lanes
    x2d = x3d.reshape(H * W, Cin)
    x2d_bf = x2d.astype(jnp.bfloat16)

    # ---- fused 1x1 stage: one MXU pass produces [br1 | r2 | r3] -------------
    y = jnp.dot(x2d_bf, wf_ref[...], preferred_element_type=jnp.float32)
    y = jnp.maximum(y + bf_ref[...], 0.0)           # bias + ReLU in f32
    br1 = y[:, :c1]                                  # (H*W, c1)
    r23v = y[:, c1:]                                 # (H*W, r2+r3)

    # ---- branches 2+3 merged: halo-only zero init, interior overwrite -------
    zrow = jnp.zeros((1, W + 2, r23), jnp.float32)
    zcol = jnp.zeros((H, 1, r23), jnp.float32)
    pad23_ref[0:1, :, :] = zrow
    pad23_ref[H + 1:H + 2, :, :] = zrow
    pad23_ref[1:H + 1, 0:1, :] = zcol
    pad23_ref[1:H + 1, W + 1:W + 2, :] = zcol
    pad23_ref[1:H + 1, 1:W + 1, :] = r23v.reshape(H, W, r23)

    # im2col window buffer (H*W, 9*(r2+r3)); tap order k = kh*3 + kw matches
    # the prepared block-diagonal weight rows.
    cols = [pad23_ref[dh:dh + H, dw:dw + W, :].reshape(H * W, r23)
            for dh in range(3) for dw in range(3)]
    im2col = jnp.concatenate(cols, axis=-1).astype(jnp.bfloat16)
    br23 = jnp.dot(im2col, w23_ref[...], preferred_element_type=jnp.float32)
    br23 = jnp.maximum(br23 + b23_ref[...], 0.0)     # (H*W, c3+c5) = [br2 | br3]

    # ---- branch 4: separable 3x3 max pool (s=1, -inf pad), then 1x1 proj ----
    ninf_row = jnp.full((1, W + 2, Cin), -jnp.inf, jnp.float32)
    ninf_col = jnp.full((H, 1, Cin), -jnp.inf, jnp.float32)
    padp_ref[0:1, :, :] = ninf_row
    padp_ref[H + 1:H + 2, :, :] = ninf_row
    padp_ref[1:H + 1, 0:1, :] = ninf_col
    padp_ref[1:H + 1, W + 1:W + 2, :] = ninf_col
    padp_ref[1:H + 1, 1:W + 1, :] = x3d

    rowm = jnp.maximum(jnp.maximum(padp_ref[:, 0:W, :], padp_ref[:, 1:W + 1, :]),
                       padp_ref[:, 2:W + 2, :])        # (H+2, W, Cin)
    pooled = jnp.maximum(jnp.maximum(rowm[0:H], rowm[1:H + 1]), rowm[2:H + 2])
    pooled_bf = pooled.reshape(H * W, Cin).astype(jnp.bfloat16)
    br4 = jnp.dot(pooled_bf, w4_ref[...], preferred_element_type=jnp.float32)
    br4 = jnp.maximum(br4 + b4_ref[...], 0.0)          # (H*W, pp)

    # ---- store each slab straight into its lane slice (no concat) -----------
    o_ref[0, :, :, 0:c1] = br1.reshape(H, W, c1).astype(o_ref.dtype)
    o_ref[0, :, :, c1:c1 + c35] = br23.reshape(H, W, c35).astype(o_ref.dtype)
    o_ref[0, :, :, c1 + c35:] = br4.reshape(H, W, -1).astype(o_ref.dtype)


# ----------------------------------------------------------------------------
# Parameter setup (PyTorch layout) + one-time weight-side layout prep
# ----------------------------------------------------------------------------
def init_params(key, in_channels, ch1x1, ch3x3red, ch3x3, ch5x5red, ch5x5, pool_proj):
    """Parameters in PyTorch Conv2d layout: weight (O, I, kh, kw), bias (O,)."""
    ks = jax.random.split(key, 12)
    s = 0.1

    def w(k, o, i, kh, kw):
        return s * jax.random.normal(k, (o, i, kh, kw), jnp.float32)

    def b(k, o):
        return s * jax.random.normal(k, (o,), jnp.float32)

    return {
        "b1_w": w(ks[0], ch1x1, in_channels, 1, 1),      "b1_b": b(ks[1], ch1x1),
        "b2a_w": w(ks[2], ch3x3red, in_channels, 1, 1),  "b2a_b": b(ks[3], ch3x3red),
        "b2b_w": w(ks[4], ch3x3, ch3x3red, 3, 3),        "b2b_b": b(ks[5], ch3x3),
        "b3a_w": w(ks[6], ch5x5red, in_channels, 1, 1),  "b3a_b": b(ks[7], ch5x5red),
        "b3b_w": w(ks[8], ch5x5, ch5x5red, 3, 3),        "b3b_b": b(ks[9], ch5x5),
        "b4_w": w(ks[10], pool_proj, in_channels, 1, 1), "b4_b": b(ks[11], pool_proj),
    }


def prepare_params(params):
    """One-time, weight-side layout prep:
       * fused 1x1 weight  (Cin, c1+r2+r3)  = [w1 | w2a | w3a]           (bf16)
       * block-diagonal im2col 3x3 weight (9*(r2+r3), c3+c5) emitting [br2|br3] (bf16)
       * pool-proj 1x1 weight (Cin, pp)                                  (bf16)
       Biases stay f32 (VPU epilogue)."""
    c1 = params["b1_w"].shape[0]
    r2, c3 = params["b2a_w"].shape[0], params["b2b_w"].shape[0]
    r3, c5 = params["b3a_w"].shape[0], params["b3b_w"].shape[0]
    r23 = r2 + r3

    def t1x1(w):   # (O, I, 1, 1) -> (I, O)
        return jnp.transpose(w[:, :, 0, 0], (1, 0))

    wf = jnp.concatenate([t1x1(params["b1_w"]), t1x1(params["b2a_w"]),
                          t1x1(params["b3a_w"])], axis=1)          # (Cin, c1+r2+r3)
    bf = jnp.concatenate([params["b1_b"], params["b2a_b"], params["b3a_b"]])

    # (O, I, 3, 3) -> (k, I, O) with k = kh*3 + kw
    w2b = jnp.transpose(params["b2b_w"], (2, 3, 1, 0)).reshape(9, r2, c3)
    w3b = jnp.transpose(params["b3b_w"], (2, 3, 1, 0)).reshape(9, r3, c5)
    w23 = jnp.zeros((9 * r23, c3 + c5), jnp.float32)
    for k in range(9):
        w23 = w23.at[k * r23:k * r23 + r2, :c3].set(w2b[k])
        w23 = w23.at[k * r23 + r2:(k + 1) * r23, c3:].set(w3b[k])
    b23 = jnp.concatenate([params["b2b_b"], params["b3b_b"]])

    return {
        "wf": wf.astype(jnp.bfloat16),  "bf": bf.reshape(1, -1),
        "w23": w23.astype(jnp.bfloat16), "b23": b23.reshape(1, -1),
        "w4": t1x1(params["b4_w"]).astype(jnp.bfloat16),
        "b4": params["b4_b"].reshape(1, -1),
    }


# ----------------------------------------------------------------------------
# Forward wrapper
# ----------------------------------------------------------------------------
def inception_forward(x, kp):
    """x: NCHW float32 (N, Cin, H, W) -> NCHW float32 (N, Cout, H, W)."""
    N, Cin, H, W = x.shape
    r23 = kp["w23"].shape[0] // 9
    c1 = kp["wf"].shape[1] - r23
    c35 = kp["w23"].shape[1]
    pp = kp["w4"].shape[1]
    cout = c1 + c35 + pp

    x_nhwc = jnp.transpose(x, (0, 2, 3, 1))   # channels -> lane axis

    flops = 2 * N * H * W * (Cin * (c1 + r23) + 9 * r23 * c35 + Cin * pp)
    param_bytes = sum(int(v.size) * v.dtype.itemsize for v in kp.values())
    bytes_accessed = 4 * N * H * W * (Cin + cout) + param_bytes

    full2d = lambda n: (0, 0)

    out_nhwc = pl.pallas_call(
        _inception_kernel,
        out_shape=jax.ShapeDtypeStruct((N, H, W, cout), jnp.float32),
        grid=(N,),
        in_specs=[
            pl.BlockSpec((1, H, W, Cin), lambda n: (n, 0, 0, 0)),
            pl.BlockSpec(kp["wf"].shape, full2d),  pl.BlockSpec(kp["bf"].shape, full2d),
            pl.BlockSpec(kp["w23"].shape, full2d), pl.BlockSpec(kp["b23"].shape, full2d),
            pl.BlockSpec(kp["w4"].shape, full2d),  pl.BlockSpec(kp["b4"].shape, full2d),
        ],
        out_specs=pl.BlockSpec((1, H, W, cout), lambda n: (n, 0, 0, 0)),
        scratch_shapes=[
            pltpu.VMEM((H + 2, W + 2, r23), jnp.float32),   # shared padded r2|r3 reduce
            pltpu.VMEM((H + 2, W + 2, Cin), jnp.float32),   # -inf padded input (maxpool)
        ],
        compiler_params=pltpu.CompilerParams(
            dimension_semantics=("parallel",)),
        cost_estimate=pl.CostEstimate(
            flops=flops, transcendentals=0, bytes_accessed=bytes_accessed),
    )(x_nhwc, kp["wf"], kp["bf"], kp["w23"], kp["b23"], kp["w4"], kp["b4"])

    return jnp.transpose(out_nhwc, (0, 3, 1, 2))


# ----------------------------------------------------------------------------
# Pure-JAX reference for correctness checking
# ----------------------------------------------------------------------------
def _conv2d_nchw(x, w, b, pad):
    y = jax.lax.conv_general_dilated(
        x, w, window_strides=(1, 1),
        padding=((pad, pad), (pad, pad)),
        dimension_numbers=("NCHW", "OIHW", "NCHW"),
        precision=jax.lax.Precision.HIGHEST)
    return y + b[None, :, None, None]


def inception_reference(x, params):
    relu = lambda t: jnp.maximum(t, 0.0)
    br1 = relu(_conv2d_nchw(x, params["b1_w"], params["b1_b"], 0))
    br2 = relu(_conv2d_nchw(
        relu(_conv2d_nchw(x, params["b2a_w"], params["b2a_b"], 0)),
        params["b2b_w"], params["b2b_b"], 1))
    br3 = relu(_conv2d_nchw(
        relu(_conv2d_nchw(x, params["b3a_w"], params["b3a_b"], 0)),
        params["b3b_w"], params["b3b_b"], 1))
    pooled = jax.lax.reduce_window(
        x, -jnp.inf, jax.lax.max,
        window_dimensions=(1, 1, 3, 3), window_strides=(1, 1, 1, 1),
        padding=((0, 0), (0, 0), (1, 1), (1, 1)))
    br4 = relu(_conv2d_nchw(pooled, params["b4_w"], params["b4_b"], 0))
    return jnp.concatenate([br1, br2, br3, br4], axis=1)


if __name__ == "__main__":
    # Small but TPU-friendly shapes: Cout = 32+64+16+16 = 128 (lane-dense output).
    N, C_IN, H, W = 2, 32, 16, 16
    CH1X1, CH3X3RED, CH3X3, CH5X5RED, CH5X5, POOL_PROJ = 32, 16, 64, 8, 16, 16

    key = jax.random.PRNGKey(0)
    kx, kparam = jax.random.split(key)
    x = jax.random.normal(kx, (N, C_IN, H, W), jnp.float32)

    params = init_params(kparam, C_IN, CH1X1, CH3X3RED, CH3X3,
                         CH5X5RED, CH5X5, POOL_PROJ)
    kp = prepare_params(params)   # one-time weight-side layout prep (bf16 MXU operands)

    out = jax.jit(inception_forward)(x, kp)
    out = jax.block_until_ready(out)

    ref = inception_reference(x, params)
    assert out.shape == (N, CH1X1 + CH3X3 + CH5X5 + POOL_PROJ, H, W), out.shape
    max_err = float(jnp.max(jnp.abs(out - ref)))
    # Tolerance sized for bf16 MXU operands (f32 accumulate) vs f32 HIGHEST reference.
    assert jnp.allclose(out, ref, atol=2e-2, rtol=2e-2), (
        f"mismatch vs reference (max |err| = {max_err})")
    print("KERNEL_OK")
</pallas_src>

<mosaic_0001>
module attributes {stable_mosaic.version = 11 : i64} {
  func.func @_inception_kernel(%arg0: i32, %arg1: memref<1x16x16x32xf32, #tpu.memory_space<vmem>>, %arg2: memref<32x56xbf16, #tpu.memory_space<vmem>>, %arg3: memref<1x56xf32, #tpu.memory_space<vmem>>, %arg4: memref<216x80xbf16, #tpu.memory_space<vmem>>, %arg5: memref<1x80xf32, #tpu.memory_space<vmem>>, %arg6: memref<32x16xbf16, #tpu.memory_space<vmem>>, %arg7: memref<1x16xf32, #tpu.memory_space<vmem>>, %arg8: memref<1x16x16x128xf32, #tpu.memory_space<vmem>>, %arg9: memref<18x18x24xf32, #tpu.memory_space<vmem>>, %arg10: memref<18x18x32xf32, #tpu.memory_space<vmem>>) attributes {dimension_semantics = [#tpu.dimension_semantics<parallel>], iteration_bounds = array<i64: 2>, scalar_prefetch = 0 : i64, scratch_operands = 2 : i64, tpu.core_type = #tpu.core_type<tc>, window_params = [{transform_indices = @transform_0, window_bounds = array<i64: 1, 16, 16, 32>}, {pipeline_mode = #tpu.pipeline_mode<synchronous>, transform_indices = @transform_1, window_bounds = array<i64: 32, 56>}, {pipeline_mode = #tpu.pipeline_mode<synchronous>, transform_indices = @transform_2, window_bounds = array<i64: 1, 56>}, {pipeline_mode = #tpu.pipeline_mode<synchronous>, transform_indices = @transform_3, window_bounds = array<i64: 216, 80>}, {pipeline_mode = #tpu.pipeline_mode<synchronous>, transform_indices = @transform_4, window_bounds = array<i64: 1, 80>}, {pipeline_mode = #tpu.pipeline_mode<synchronous>, transform_indices = @transform_5, window_bounds = array<i64: 32, 16>}, {pipeline_mode = #tpu.pipeline_mode<synchronous>, transform_indices = @transform_6, window_bounds = array<i64: 1, 16>}, {transform_indices = @transform_7, window_bounds = array<i64: 1, 16, 16, 128>}]} {
    %c0 = arith.constant 0 : index
    %c0_0 = arith.constant 0 : index
    %c0_1 = arith.constant 0 : index
    %c0_2 = arith.constant 0 : index
    %0 = vector.load %arg1[%c0, %c0_0, %c0_1, %c0_2] : memref<1x16x16x32xf32, #tpu.memory_space<vmem>>, vector<1x16x16x32xf32>
    %1 = vector.shape_cast %0 : vector<1x16x16x32xf32> to vector<16x16x32xf32>
    %2 = vector.shape_cast %1 : vector<16x16x32xf32> to vector<256x32xf32>
    %3 = arith.truncf %2 : vector<256x32xf32> to vector<256x32xbf16>
    %c0_3 = arith.constant 0 : index
    %c0_4 = arith.constant 0 : index
    %4 = vector.load %arg2[%c0_3, %c0_4] : memref<32x56xbf16, #tpu.memory_space<vmem>>, vector<32x56xbf16>
    %cst = arith.constant dense<0.000000e+00> : vector<256x56xf32>
    %5 = tpu.matmul %3, %4, %cst {dimension_numbers = #tpu.dot_dimension_numbers<[1], [0], [0], [1], [0, 0, 1, 1], [], []>} : vector<256x32xbf16>, vector<32x56xbf16>, vector<256x56xf32> -> vector<256x56xf32>
    %c0_5 = arith.constant 0 : index
    %c0_6 = arith.constant 0 : index
    %6 = vector.load %arg3[%c0_5, %c0_6] : memref<1x56xf32, #tpu.memory_space<vmem>>, vector<1x56xf32>
    %7 = vector.broadcast %6 : vector<1x56xf32> to vector<256x56xf32>
    %8 = arith.addf %5, %7 : vector<256x56xf32>
    %cst_7 = arith.constant 0.000000e+00 : f32
    %9 = vector.broadcast %cst_7 : f32 to vector<256x56xf32>
    %10 = arith.maximumf %8, %9 : vector<256x56xf32>
    %11 = vector.extract_strided_slice %10 {offsets = [0, 0], sizes = [256, 32], strides = [1, 1]} : vector<256x56xf32> to vector<256x32xf32>
    %12 = vector.extract_strided_slice %10 {offsets = [0, 32], sizes = [256, 24], strides = [1, 1]} : vector<256x56xf32> to vector<256x24xf32>
    %cst_8 = arith.constant 0.000000e+00 : f32
    %13 = vector.broadcast %cst_8 : f32 to vector<1x18x24xf32>
    %cst_9 = arith.constant 0.000000e+00 : f32
    %14 = vector.broadcast %cst_9 : f32 to vector<16x1x24xf32>
    %c0_10 = arith.constant 0 : index
    %c0_11 = arith.constant 0 : index
    %c0_12 = arith.constant 0 : index
    %15 = vector.load %arg9[%c0_10, %c0_11, %c0_12] : memref<18x18x24xf32, #tpu.memory_space<vmem>>, vector<1x18x24xf32>
    tpu.vector_store %arg9[%c0_10, %c0_11, %c0_12], %13 {strides = array<i32>} : memref<18x18x24xf32, #tpu.memory_space<vmem>>, vector<1x18x24xf32>,
    %c17 = arith.constant 17 : index
    %c0_13 = arith.constant 0 : index
    %c0_14 = arith.constant 0 : index
    %16 = vector.load %arg9[%c17, %c0_13, %c0_14] : memref<18x18x24xf32, #tpu.memory_space<vmem>>, vector<1x18x24xf32>
    tpu.vector_store %arg9[%c17, %c0_13, %c0_14], %13 {strides = array<i32>} : memref<18x18x24xf32, #tpu.memory_space<vmem>>, vector<1x18x24xf32>,
    %c1 = arith.constant 1 : index
    %c0_15 = arith.constant 0 : index
    %c0_16 = arith.constant 0 : index
    %17 = vector.load %arg9[%c1, %c0_15, %c0_16] : memref<18x18x24xf32, #tpu.memory_space<vmem>>, vector<16x1x24xf32>
    tpu.vector_store %arg9[%c1, %c0_15, %c0_16], %14 {strides = array<i32>} : memref<18x18x24xf32, #tpu.memory_space<vmem>>, vector<16x1x24xf32>,
    %c1_17 = arith.constant 1 : index
    %c17_18 = arith.constant 17 : index
    %c0_19 = arith.constant 0 : index
    %18 = vector.load %arg9[%c1_17, %c17_18, %c0_19] : memref<18x18x24xf32, #tpu.memory_space<vmem>>, vector<16x1x24xf32>
    tpu.vector_store %arg9[%c1_17, %c17_18, %c0_19], %14 {strides = array<i32>} : memref<18x18x24xf32, #tpu.memory_space<vmem>>, vector<16x1x24xf32>,
    %19 = vector.shape_cast %12 : vector<256x24xf32> to vector<16x16x24xf32>
    %c1_20 = arith.constant 1 : index
    %c1_21 = arith.constant 1 : index
    %c0_22 = arith.constant 0 : index
    %20 = vector.load %arg9[%c1_20, %c1_21, %c0_22] : memref<18x18x24xf32, #tpu.memory_space<vmem>>, vector<16x16x24xf32>
    tpu.vector_store %arg9[%c1_20, %c1_21, %c0_22], %19 {strides = array<i32>} : memref<18x18x24xf32, #tpu.memory_space<vmem>>, vector<16x16x24xf32>,
    %c0_23 = arith.constant 0 : index
    %c0_24 = arith.constant 0 : index
    %c0_25 = arith.constant 0 : index
    %21 = vector.load %arg9[%c0_23, %c0_24, %c0_25] : memref<18x18x24xf32, #tpu.memory_space<vmem>>, vector<16x16x24xf32>
    %22 = vector.shape_cast %21 : vector<16x16x24xf32> to vector<256x24xf32>
    %c0_26 = arith.constant 0 : index
    %c1_27 = arith.constant 1 : index
    %c0_28 = arith.constant 0 : index
    %23 = vector.load %arg9[%c0_26, %c1_27, %c0_28] : memref<18x18x24xf32, #tpu.memory_space<vmem>>, vector<16x16x24xf32>
    %24 = vector.shape_cast %23 : vector<16x16x24xf32> to vector<256x24xf32>
    %c0_29 = arith.constant 0 : index
    %c2 = arith.constant 2 : index
    %c0_30 = arith.constant 0 : index
    %25 = vector.load %arg9[%c0_29, %c2, %c0_30] : memref<18x18x24xf32, #tpu.memory_space<vmem>>, vector<16x16x24xf32>
    %26 = vector.shape_cast %25 : vector<16x16x24xf32> to vector<256x24xf32>
    %c1_31 = arith.constant 1 : index
    %c0_32 = arith.constant 0 : index
    %c0_33 = arith.constant 0 : index
    %27 = vector.load %arg9[%c1_31, %c0_32, %c0_33] : memref<18x18x24xf32, #tpu.memory_space<vmem>>, vector<16x16x24xf32>
    %28 = vector.shape_cast %27 : vector<16x16x24xf32> to vector<256x24xf32>
    %c1_34 = arith.constant 1 : index
    %c1_35 = arith.constant 1 : index
    %c0_36 = arith.constant 0 : index
    %29 = vector.load %arg9[%c1_34, %c1_35, %c0_36] : memref<18x18x24xf32, #tpu.memory_space<vmem>>, vector<16x16x24xf32>
    %30 = vector.shape_cast %29 : vector<16x16x24xf32> to vector<256x24xf32>
    %c1_37 = arith.constant 1 : index
    %c2_38 = arith.constant 2 : index
    %c0_39 = arith.constant 0 : index
    %31 = vector.load %arg9[%c1_37, %c2_38, %c0_39] : memref<18x18x24xf32, #tpu.memory_space<vmem>>, vector<16x16x24xf32>
    %32 = vector.shape_cast %31 : vector<16x16x24xf32> to vector<256x24xf32>
    %c2_40 = arith.constant 2 : index
    %c0_41 = arith.constant 0 : index
    %c0_42 = arith.constant 0 : index
    %33 = vector.load %arg9[%c2_40, %c0_41, %c0_42] : memref<18x18x24xf32, #tpu.memory_space<vmem>>, vector<16x16x24xf32>
    %34 = vector.shape_cast %33 : vector<16x16x24xf32> to vector<256x24xf32>
    %c2_43 = arith.constant 2 : index
    %c1_44 = arith.constant 1 : index
    %c0_45 = arith.constant 0 : index
    %35 = vector.load %arg9[%c2_43, %c1_44, %c0_45] : memref<18x18x24xf32, #tpu.memory_space<vmem>>, vector<16x16x24xf32>
    %36 = vector.shape_cast %35 : vector<16x16x24xf32> to vector<256x24xf32>
    %c2_46 = arith.constant 2 : index
    %c2_47 = arith.constant 2 : index
    %c0_48 = arith.constant 0 : index
    %37 = vector.load %arg9[%c2_46, %c2_47, %c0_48] : memref<18x18x24xf32, #tpu.memory_space<vmem>>, vector<16x16x24xf32>
    %38 = vector.shape_cast %37 : vector<16x16x24xf32> to vector<256x24xf32>
    %39 = tpu.concatenate %22, %24, %26, %28, %30, %32, %34, %36, %38 in 1 : vector<256x24xf32>, vector<256x24xf32>, vector<256x24xf32>, vector<256x24xf32>, vector<256x24xf32>, vector<256x24xf32>, vector<256x24xf32>, vector<256x24xf32>, vector<256x24xf32> -> vector<256x216xf32>
    %40 = arith.truncf %39 : vector<256x216xf32> to vector<256x216xbf16>
    %c0_49 = arith.constant 0 : index
    %c0_50 = arith.constant 0 : index
    %41 = vector.load %arg4[%c0_49, %c0_50] : memref<216x80xbf16, #tpu.memory_space<vmem>>, vector<216x80xbf16>
    %cst_51 = arith.constant dense<0.000000e+00> : vector<256x80xf32>
    %42 = tpu.matmul %40, %41, %cst_51 {dimension_numbers = #tpu.dot_dimension_numbers<[1], [0], [0], [1], [0, 0, 1, 1], [], []>} : vector<256x216xbf16>, vector<216x80xbf16>, vector<256x80xf32> -> vector<256x80xf32>
    %c0_52 = arith.constant 0 : index
    %c0_53 = arith.constant 0 : index
    %43 = vector.load %arg5[%c0_52, %c0_53] : memref<1x80xf32, #tpu.memory_space<vmem>>, vector<1x80xf32>
    %44 = vector.broadcast %43 : vector<1x80xf32> to vector<256x80xf32>
    %45 = arith.addf %42, %44 : vector<256x80xf32>
    %cst_54 = arith.constant 0.000000e+00 : f32
    %46 = vector.broadcast %cst_54 : f32 to vector<256x80xf32>
    %47 = arith.maximumf %45, %46 : vector<256x80xf32>
    %cst_55 = arith.constant 0xFF800000 : f32
    %48 = vector.broadcast %cst_55 : f32 to vector<1x18x32xf32>
    %cst_56 = arith.constant 0xFF800000 : f32
    %49 = vector.broadcast %cst_56 : f32 to vector<16x1x32xf32>
    %c0_57 = arith.constant 0 : index
    %c0_58 = arith.constant 0 : index
    %c0_59 = arith.constant 0 : index
    %50 = vector.load %arg10[%c0_57, %c0_58, %c0_59] : memref<18x18x32xf32, #tpu.memory_space<vmem>>, vector<1x18x32xf32>
    tpu.vector_store %arg10[%c0_57, %c0_58, %c0_59], %48 {strides = array<i32>} : memref<18x18x32xf32, #tpu.memory_space<vmem>>, vector<1x18x32xf32>,
    %c17_60 = arith.constant 17 : index
    %c0_61 = arith.constant 0 : index
    %c0_62 = arith.constant 0 : index
    %51 = vector.load %arg10[%c17_60, %c0_61, %c0_62] : memref<18x18x32xf32, #tpu.memory_space<vmem>>, vector<1x18x32xf32>
    tpu.vector_store %arg10[%c17_60, %c0_61, %c0_62], %48 {strides = array<i32>} : memref<18x18x32xf32, #tpu.memory_space<vmem>>, vector<1x18x32xf32>,
    %c1_63 = arith.constant 1 : index
    %c0_64 = arith.constant 0 : index
    %c0_65 = arith.constant 0 : index
    %52 = vector.load %arg10[%c1_63, %c0_64, %c0_65] : memref<18x18x32xf32, #tpu.memory_space<vmem>>, vector<16x1x32xf32>
    tpu.vector_store %arg10[%c1_63, %c0_64, %c0_65], %49 {strides = array<i32>} : memref<18x18x32xf32, #tpu.memory_space<vmem>>, vector<16x1x32xf32>,
    %c1_66 = arith.constant 1 : index
    %c17_67 = arith.constant 17 : index
    %c0_68 = arith.constant 0 : index
    %53 = vector.load %arg10[%c1_66, %c17_67, %c0_68] : memref<18x18x32xf32, #tpu.memory_space<vmem>>, vector<16x1x32xf32>
    tpu.vector_store %arg10[%c1_66, %c17_67, %c0_68], %49 {strides = array<i32>} : memref<18x18x32xf32, #tpu.memory_space<vmem>>, vector<16x1x32xf32>,
    %c1_69 = arith.constant 1 : index
    %c1_70 = arith.constant 1 : index
    %c0_71 = arith.constant 0 : index
    %54 = vector.load %arg10[%c1_69, %c1_70, %c0_71] : memref<18x18x32xf32, #tpu.memory_space<vmem>>, vector<16x16x32xf32>
    tpu.vector_store %arg10[%c1_69, %c1_70, %c0_71], %1 {strides = array<i32>} : memref<18x18x32xf32, #tpu.memory_space<vmem>>, vector<16x16x32xf32>,
    %c0_72 = arith.constant 0 : index
    %c0_73 = arith.constant 0 : index
    %c0_74 = arith.constant 0 : index
    %55 = vector.load %arg10[%c0_72, %c0_73, %c0_74] : memref<18x18x32xf32, #tpu.memory_space<vmem>>, vector<18x16x32xf32>
    %c0_75 = arith.constant 0 : index
    %c1_76 = arith.constant 1 : index
    %c0_77 = arith.constant 0 : index
    %56 = vector.load %arg10[%c0_75, %c1_76, %c0_77] : memref<18x18x32xf32, #tpu.memory_space<vmem>>, vector<18x16x32xf32>
    %57 = arith.maximumf %55, %56 : vector<18x16x32xf32>
    %c0_78 = arith.constant 0 : index
    %c2_79 = arith.constant 2 : index
    %c0_80 = arith.constant 0 : index
    %58 = vector.load %arg10[%c0_78, %c2_79, %c0_80] : memref<18x18x32xf32, #tpu.memory_space<vmem>>, vector<18x16x32xf32>
    %59 = arith.maximumf %57, %58 : vector<18x16x32xf32>
    %60 = vector.extract_strided_slice %59 {offsets = [0, 0, 0], sizes = [16, 16, 32], strides = [1, 1, 1]} : vector<18x16x32xf32> to vector<16x16x32xf32>
    %61 = vector.extract_strided_slice %59 {offsets = [1, 0, 0], sizes = [16, 16, 32], strides = [1, 1, 1]} : vector<18x16x32xf32> to vector<16x16x32xf32>
    %62 = arith.maximumf %60, %61 : vector<16x16x32xf32>
    %63 = vector.extract_strided_slice %59 {offsets = [2, 0, 0], sizes = [16, 16, 32], strides = [1, 1, 1]} : vector<18x16x32xf32> to vector<16x16x32xf32>
    %64 = arith.maximumf %62, %63 : vector<16x16x32xf32>
    %65 = vector.shape_cast %64 : vector<16x16x32xf32> to vector<256x32xf32>
    %66 = arith.truncf %65 : vector<256x32xf32> to vector<256x32xbf16>
    %c0_81 = arith.constant 0 : index
    %c0_82 = arith.constant 0 : index
    %67 = vector.load %arg6[%c0_81, %c0_82] : memref<32x16xbf16, #tpu.memory_space<vmem>>, vector<32x16xbf16>
    %cst_83 = arith.constant dense<0.000000e+00> : vector<256x16xf32>
    %68 = tpu.matmul %66, %67, %cst_83 {dimension_numbers = #tpu.dot_dimension_numbers<[1], [0], [0], [1], [0, 0, 1, 1], [], []>} : vector<256x32xbf16>, vector<32x16xbf16>, vector<256x16xf32> -> vector<256x16xf32>
    %c0_84 = arith.constant 0 : index
    %c0_85 = arith.constant 0 : index
    %69 = vector.load %arg7[%c0_84, %c0_85] : memref<1x16xf32, #tpu.memory_space<vmem>>, vector<1x16xf32>
    %70 = vector.broadcast %69 : vector<1x16xf32> to vector<256x16xf32>
    %71 = arith.addf %68, %70 : vector<256x16xf32>
    %cst_86 = arith.constant 0.000000e+00 : f32
    %72 = vector.broadcast %cst_86 : f32 to vector<256x16xf32>
    %73 = arith.maximumf %71, %72 : vector<256x16xf32>
    %74 = vector.shape_cast %11 : vector<256x32xf32> to vector<16x16x32xf32>
    %c0_87 = arith.constant 0 : index
    %c0_88 = arith.constant 0 : index
    %c0_89 = arith.constant 0 : index
    %c0_90 = arith.constant 0 : index
    %75 = vector.load %arg8[%c0_87, %c0_88, %c0_89, %c0_90] : memref<1x16x16x128xf32, #tpu.memory_space<vmem>>, vector<1x16x16x32xf32>
    %76 = vector.shape_cast %75 : vector<1x16x16x32xf32> to vector<16x16x32xf32>
    %77 = vector.shape_cast %74 : vector<16x16x32xf32> to vector<1x16x16x32xf32>
    tpu.vector_store %arg8[%c0_87, %c0_88, %c0_89, %c0_90], %77 {strides = array<i32>} : memref<1x16x16x128xf32, #tpu.memory_space<vmem>>, vector<1x16x16x32xf32>,
    %78 = vector.shape_cast %47 : vector<256x80xf32> to vector<16x16x80xf32>
    %c0_91 = arith.constant 0 : index
    %c0_92 = arith.constant 0 : index
    %c0_93 = arith.constant 0 : index
    %c32 = arith.constant 32 : index
    %79 = vector.load %arg8[%c0_91, %c0_92, %c0_93, %c32] : memref<1x16x16x128xf32, #tpu.memory_space<vmem>>, vector<1x16x16x80xf32>
    %80 = vector.shape_cast %79 : vector<1x16x16x80xf32> to vector<16x16x80xf32>
    %81 = vector.shape_cast %78 : vector<16x16x80xf32> to vector<1x16x16x80xf32>
    tpu.vector_store %arg8[%c0_91, %c0_92, %c0_93, %c32], %81 {strides = array<i32>} : memref<1x16x16x128xf32, #tpu.memory_space<vmem>>, vector<1x16x16x80xf32>,
    %82 = vector.shape_cast %73 : vector<256x16xf32> to vector<16x16x16xf32>
    %c0_94 = arith.constant 0 : index
    %c0_95 = arith.constant 0 : index
    %c0_96 = arith.constant 0 : index
    %c112 = arith.constant 112 : index
    %83 = vector.load %arg8[%c0_94, %c0_95, %c0_96, %c112] : memref<1x16x16x128xf32, #tpu.memory_space<vmem>>, vector<1x16x16x16xf32>
    %84 = vector.shape_cast %83 : vector<1x16x16x16xf32> to vector<16x16x16xf32>
    %85 = vector.shape_cast %82 : vector<16x16x16xf32> to vector<1x16x16x16xf32>
    tpu.vector_store %arg8[%c0_94, %c0_95, %c0_96, %c112], %85 {strides = array<i32>} : memref<1x16x16x128xf32, #tpu.memory_space<vmem>>, vector<1x16x16x16xf32>,
    return
  }
  func.func @transform_0(%arg0: i32) -> (i32, i32, i32, i32) {
    %c0_i32 = arith.constant 0 : i32
    %c0_i32_0 = arith.constant 0 : i32
    %c0_i32_1 = arith.constant 0 : i32
    %c0_i32_2 = arith.constant 0 : i32
    return %arg0, %c0_i32, %c0_i32_0, %c0_i32_1 : i32, i32, i32, i32
  }
  func.func @transform_1(%arg0: i32) -> (i32, i32) {
    %c0_i32 = arith.constant 0 : i32
    %c0_i32_0 = arith.constant 0 : i32
    %c0_i32_1 = arith.constant 0 : i32
    return %c0_i32, %c0_i32_0 : i32, i32
  }
  func.func @transform_2(%arg0: i32) -> (i32, i32) {
    %c0_i32 = arith.constant 0 : i32
    %c0_i32_0 = arith.constant 0 : i32
    %c0_i32_1 = arith.constant 0 : i32
    return %c0_i32, %c0_i32_0 : i32, i32
  }
  func.func @transform_3(%arg0: i32) -> (i32, i32) {
    %c0_i32 = arith.constant 0 : i32
    %c0_i32_0 = arith.constant 0 : i32
    %c0_i32_1 = arith.constant 0 : i32
    return %c0_i32, %c0_i32_0 : i32, i32
  }
  func.func @transform_4(%arg0: i32) -> (i32, i32) {
    %c0_i32 = arith.constant 0 : i32
    %c0_i32_0 = arith.constant 0 : i32
    %c0_i32_1 = arith.constant 0 : i32
    return %c0_i32, %c0_i32_0 : i32, i32
  }
  func.func @transform_5(%arg0: i32) -> (i32, i32) {
    %c0_i32 = arith.constant 0 : i32
    %c0_i32_0 = arith.constant 0 : i32
    %c0_i32_1 = arith.constant 0 : i32
    return %c0_i32, %c0_i32_0 : i32, i32
  }
  func.func @transform_6(%arg0: i32) -> (i32, i32) {
    %c0_i32 = arith.constant 0 : i32
    %c0_i32_0 = arith.constant 0 : i32
    %c0_i32_1 = arith.constant 0 : i32
    return %c0_i32, %c0_i32_0 : i32, i32
  }
  func.func @transform_7(%arg0: i32) -> (i32, i32, i32, i32) {
    %c0_i32 = arith.constant 0 : i32
    %c0_i32_0 = arith.constant 0 : i32
    %c0_i32_1 = arith.constant 0 : i32
    %c0_i32_2 = arith.constant 0 : i32
    return %arg0, %c0_i32, %c0_i32_0, %c0_i32_1 : i32, i32, i32, i32
  }
}

</mosaic_0001>

<llo_original>
// kernel: inception_forward.1
$region0: #{inception_forward.1}
  #allocation0 [shape = 'u32[]', space=smem, size = 0x4, offset = 0x4, fixed_abs, tag = 'smem constant byte address 0x4 - core index']
  #allocation1 [shape = 'u32[144,128]{1,0:T(1,128)}', space=vmem, size = 0x12000, scoped, tag = 'internal scratch']
  #allocation2 [shape = 'f32[18,18,24]{2,1,0:T(8,128)}', space=vmem, size = 0x36000, scoped, tag = 'scratch operand']
  #allocation3 [shape = 'f32[18,18,32]{2,1,0:T(8,128)}', space=vmem, size = 0x36000, scoped, tag = 'scratch operand']
  %s0 = inlined_call_operand.hbm [shape: f32[2,16,16,32], index: 0, kind: input, shape index: {}]
  %s1 = inlined_call_operand.vmem [shape: bf16[32,56], index: 1, kind: input, shape index: {}]
  %s2 = inlined_call_operand.vmem [shape: f32[1,56], index: 2, kind: input, shape index: {}]
  %s3 = inlined_call_operand.vmem [shape: bf16[216,80], index: 3, kind: input, shape index: {}]
  %s4 = inlined_call_operand.vmem [shape: f32[1,80], index: 4, kind: input, shape index: {}]
  %s5 = inlined_call_operand.vmem [shape: bf16[32,16], index: 5, kind: input, shape index: {}]
  %s6 = inlined_call_operand.vmem [shape: f32[1,16], index: 6, kind: input, shape index: {}]
  %s7 = inlined_call_operand.hbm [shape: f32[2,16,16,128], index: 7, kind: output, shape index: {}]
  %s8 = sld [smem:[#allocation0]]
  $region65: #{inception_forward.1} parent=0
    _
  %s10 = ssub.s32 1, %s8
  %s11 = scalar_select 0, %s10, %s8
  $region1: #{inception_forward.1} parent=0
    #allocation4 [shape = 'u8[262144]{0}', space=vmem, size = 0x40000, scoped, tag = 'input window, operand 0']
    #allocation5 [shape = 's32[2]{0}', space=sflag, size = 0x8, scoped, tag = 'scoped memory for inception_forward.1']
    #allocation6 [shape = 's32[2]{0}', space=sflag, size = 0x8, scoped, tag = 'scoped memory for inception_forward.1']
    #allocation7 [shape = 'u8[262144]{0}', space=vmem, size = 0x40000, scoped, tag = 'output window, operand 0']
    %12 = vsyncpa [#allocation5], 0
    %s13 = scalar_lea.sflag [#allocation5], 1
    %14 = vsyncpa %s13, 0
    %15 = vsyncpa [#allocation6], 0
    %s16 = scalar_lea.sflag [#allocation6], 1
    %17 = vsyncpa %s16, 0
    loop: start=0, step=1, limit=4
    $region2: #{inception_forward.1} parent=1 // loop_pre_header
      _
    $region3: #{inception_forward.1} parent=1 // loop_header
      %s19 = sphi 0, %s23
      %p20 = scmp.ge.s32.totalorder %s19, 4
      %s29 = sphi 0, %s31
      %s32 = sphi 0, %s29
      %s33 = sphi 0, %s32
      %s49 = sphi 0, %s33
      %s53 = sphi 0, %s53
      %s55 = sphi 0, %s53
      %s56 = sphi 0, %s55
      %s70 = sphi 0, %s56
      %s74 = sphi 0, %s74
      %s76 = sphi 0, %s74
      %s77 = sphi 0, %s76
      %s91 = sphi 0, %s77
      %s95 = sphi 0, %s95
      %s97 = sphi 0, %s95
      %s98 = sphi 0, %s97
      %s112 = sphi 0, %s98
      %s116 = sphi 0, %s116
      %s118 = sphi 0, %s116
      %s119 = sphi 0, %s118
      %s133 = sphi 0, %s119
      %s137 = sphi 0, %s137
      %s139 = sphi 0, %s137
      %s140 = sphi 0, %s139
      %s154 = sphi 0, %s140
      %s158 = sphi 0, %s158
      %s160 = sphi 0, %s158
      %s161 = sphi 0, %s160
      %s175 = sphi 0, %s161
      %s181 = sphi 0, %s183
      %s184 = sphi 0, %s181
      %s185 = sphi 0, %s184
      %s201 = sphi 0, %s185
    $region4: #{inception_forward.1} parent=1 // loop_header_branch
      %22 = sbr.rel (%p20) target = $region8
    $region5: #{inception_forward.1} parent=1 // loop_body
      %s24 = ssub.s32 %s19, 1
      %s25 = ssub.s32 %s19, 2
      %s26 = sadd.s32 %s19, 1
      %s27 = ssub.s32 %s19, %s26
      %p28 = scmp.eq.s32.totalorder %s27, 0
      %s30 = sadd.s32 %s29, 1
      %s31 = scalar_select %p28, %s29, %s30
      %p34 = pneg %p28
      %p35 = scmp.eq.s32.totalorder %s19, 1
      %p36 = por %p34, %p35
      %p37 = scmp.ne.s32.totalorder %s29, %s32
      %p38 = scmp.eq.s32.totalorder %s19, 0
      %p39 = por %p37, %p38
      %p40 = scmp.ne.s32.totalorder %s29, %s32
      %p41 = scmp.eq.s32.totalorder %s24, 1
      %p42 = por %p40, %p41
      %p43 = scmp.ne.s32.totalorder %s32, %s33
      %p44 = scmp.eq.s32.totalorder %s24, 0
      %p45 = por %p43, %p44
      %p46 = scmp.ne.s32.totalorder %s32, %s33
      %p47 = scmp.eq.s32.totalorder %s25, 1
      %p48 = por %p46, %p47
      %p50 = scmp.ne.s32.totalorder %s33, %s49
      %p51 = scmp.eq.s32.totalorder %s25, 0
      %p52 = por %p50, %p51
      %s54 = sadd.s32 %s53, 1
      %p57 = scmp.eq.s32.totalorder %s19, 1
      %p58 = scmp.ne.s32.totalorder %s53, %s55
      %p59 = scmp.eq.s32.totalorder %s19, 0
      %p60 = por %p58, %p59
      %p61 = scmp.ne.s32.totalorder %s53, %s55
      %p62 = scmp.eq.s32.totalorder %s24, 1
      %p63 = por %p61, %p62
      %p64 = scmp.ne.s32.totalorder %s55, %s56
      %p65 = scmp.eq.s32.totalorder %s24, 0
      %p66 = por %p64, %p65
      %p67 = scmp.ne.s32.totalorder %s55, %s56
      %p68 = scmp.eq.s32.totalorder %s25, 1
      %p69 = por %p67, %p68
      %p71 = scmp.ne.s32.totalorder %s56, %s70
      %p72 = scmp.eq.s32.totalorder %s25, 0
      %p73 = por %p71, %p72
      %s75 = sadd.s32 %s74, 1
      %p78 = scmp.eq.s32.totalorder %s19, 1
      %p79 = scmp.ne.s32.totalorder %s74, %s76
      %p80 = scmp.eq.s32.totalorder %s19, 0
      %p81 = por %p79, %p80
      %p82 = scmp.ne.s32.totalorder %s74, %s76
      %p83 = scmp.eq.s32.totalorder %s24, 1
      %p84 = por %p82, %p83
      %p85 = scmp.ne.s32.totalorder %s76, %s77
      %p86 = scmp.eq.s32.totalorder %s24, 0
      %p87 = por %p85, %p86
      %p88 = scmp.ne.s32.totalorder %s76, %s77
      %p89 = scmp.eq.s32.totalorder %s25, 1
      %p90 = por %p88, %p89
      %p92 = scmp.ne.s32.totalorder %s77, %s91
      %p93 = scmp.eq.s32.totalorder %s25, 0
      %p94 = por %p92, %p93
      %s96 = sadd.s32 %s95, 1
      %p99 = scmp.eq.s32.totalorder %s19, 1
      %p100 = scmp.ne.s32.totalorder %s95, %s97
      %p101 = scmp.eq.s32.totalorder %s19, 0
      %p102 = por %p100, %p101
      %p103 = scmp.ne.s32.totalorder %s95, %s97
      %p104 = scmp.eq.s32.totalorder %s24, 1
      %p105 = por %p103, %p104
      %p106 = scmp.ne.s32.totalorder %s97, %s98
      %p107 = scmp.eq.s32.totalorder %s24, 0
      %p108 = por %p106, %p107
      %p109 = scmp.ne.s32.totalorder %s97, %s98
      %p110 = scmp.eq.s32.totalorder %s25, 1
      %p111 = por %p109, %p110
      %p113 = scmp.ne.s32.totalorder %s98, %s112
      %p114 = scmp.eq.s32.totalorder %s25, 0
      %p115 = por %p113, %p114
      %s117 = sadd.s32 %s116, 1
      %p120 = scmp.eq.s32.totalorder %s19, 1
      %p121 = scmp.ne.s32.totalorder %s116, %s118
      %p122 = scmp.eq.s32.totalorder %s19, 0
      %p123 = por %p121, %p122
      %p124 = scmp.ne.s32.totalorder %s116, %s118
      %p125 = scmp.eq.s32.totalorder %s24, 1
      %p126 = por %p124, %p125
      %p127 = scmp.ne.s32.totalorder %s118, %s119
      %p128 = scmp.eq.s32.totalorder %s24, 0
      %p129 = por %p127, %p128
      %p130 = scmp.ne.s32.totalorder %s118, %s119
      %p131 = scmp.eq.s32.totalorder %s25, 1
      %p132 = por %p130, %p131
      %p134 = scmp.ne.s32.totalorder %s119, %s133
      %p135 = scmp.eq.s32.totalorder %s25, 0
      %p136 = por %p134, %p135
      %s138 = sadd.s32 %s137, 1
      %p141 = scmp.eq.s32.totalorder %s19, 1
      %p142 = scmp.ne.s32.totalorder %s137, %s139
      %p143 = scmp.eq.s32.totalorder %s19, 0
      %p144 = por %p142, %p143
      %p145 = scmp.ne.s32.totalorder %s137, %s139
      %p146 = scmp.eq.s32.totalorder %s24, 1
      %p147 = por %p145, %p146
      %p148 = scmp.ne.s32.totalorder %s139, %s140
      %p149 = scmp.eq.s32.totalorder %s24, 0
      %p150 = por %p148, %p149
      %p151 = scmp.ne.s32.totalorder %s139, %s140
      %p152 = scmp.eq.s32.totalorder %s25, 1
      %p153 = por %p151, %p152
      %p155 = scmp.ne.s32.totalorder %s140, %s154
      %p156 = scmp.eq.s32.totalorder %s25, 0
      %p157 = por %p155, %p156
      %s159 = sadd.s32 %s158, 1
      %p162 = scmp.eq.s32.totalorder %s19, 1
      %p163 = scmp.ne.s32.totalorder %s158, %s160
      %p164 = scmp.eq.s32.totalorder %s19, 0
      %p165 = por %p163, %p164
      %p166 = scmp.ne.s32.totalorder %s158, %s160
      %p167 = scmp.eq.s32.totalorder %s24, 1
      %p168 = por %p166, %p167
      %p169 = scmp.ne.s32.totalorder %s160, %s161
      %p170 = scmp.eq.s32.totalorder %s24, 0
      %p171 = por %p169, %p170
      %p172 = scmp.ne.s32.totalorder %s160, %s161
      %p173 = scmp.eq.s32.totalorder %s25, 1
      %p174 = por %p172, %p173
      %p176 = scmp.ne.s32.totalorder %s161, %s175
      %p177 = scmp.eq.s32.totalorder %s25, 0
      %p178 = por %p176, %p177
      %s179 = ssub.s32 %s19, %s26
      %p180 = scmp.eq.s32.totalorder %s179, 0
      %s182 = sadd.s32 %s181, 1
      %s183 = scalar_select %p180, %s181, %s182
      %p186 = pneg %p180
      %p187 = scmp.eq.s32.totalorder %s19, 1
      %p188 = por %p186, %p187
      %p189 = scmp.ne.s32.totalorder %s181, %s184
      %p190 = scmp.eq.s32.totalorder %s19, 0
      %p191 = por %p189, %p190
      %p192 = scmp.ne.s32.totalorder %s181, %s184
      %p193 = scmp.eq.s32.totalorder %s24, 1
      %p194 = por %p192, %p193
      %p195 = scmp.ne.s32.totalorder %s184, %s185
      %p196 = scmp.eq.s32.totalorder %s24, 0
      %p197 = por %p195, %p196
      %p198 = scmp.ne.s32.totalorder %s184, %s185
      %p199 = scmp.eq.s32.totalorder %s25, 1
      %p200 = por %p198, %p199
      %p202 = scmp.ne.s32.totalorder %s185, %s201
      %p203 = scmp.eq.s32.totalorder %s25, 0
      %p204 = por %p202, %p203
      %p205 = scmp.le.s32.totalorder 1, %s19
      %p206 = scmp.lt.s32.totalorder %s19, 3
      %p207 = pnand %p205, %p206
      %p208 = pneg %p207
      // Predicated region
      $region9: #{inception_forward.1} parent=5 // pred_check
        _
      $region10: #{inception_forward.1} parent=5 // pred_check_branch
        %210 = sbr.rel (%p207) target = $region12
      $region11: #{inception_forward.1} parent=5 // pred_region
        %s211 = ssub.s32 %s19, 1
        // Predicated region
        $region13: #{inception_forward.1} parent=11 // pred_check
          %p212 = pneg %p66
        $region14: #{inception_forward.1} parent=11 // pred_check_branch
          %214 = sbr.rel (%p212) target = $region16
        $region15: #{inception_forward.1} parent=11 // pred_region
          _
        $region16: #{inception_forward.1} parent=11 // pred_fallthru
          _
        // Predicated region
        $region17: #{inception_forward.1} parent=11 // pred_check
          %p215 = pneg %p87
        $region18: #{inception_forward.1} parent=11 // pred_check_branch
          %217 = sbr.rel (%p215) target = $region20
        $region19: #{inception_forward.1} parent=11 // pred_region
          _
        $region20: #{inception_forward.1} parent=11 // pred_fallthru
          _
        // Predicated region
        $region21: #{inception_forward.1} parent=11 // pred_check
          %p218 = pneg %p108
        $region22: #{inception_forward.1} parent=11 // pred_check_branch
          %220 = sbr.rel (%p218) target = $region24
        $region23: #{inception_forward.1} parent=11 // pred_region
          _
        $region24: #{inception_forward.1} parent=11 // pred_fallthru
          _
        // Predicated region
        $region25: #{inception_forward.1} parent=11 // pred_check
          %p221 = pneg %p129
        $region26: #{inception_forward.1} parent=11 // pred_check_branch
          %223 = sbr.rel (%p221) target = $region28
        $region27: #{inception_forward.1} parent=11 // pred_region
          _
        $region28: #{inception_forward.1} parent=11 // pred_fallthru
          _
        // Predicated region
        $region29: #{inception_forward.1} parent=11 // pred_check
          %p224 = pneg %p150
        $region30: #{inception_forward.1} parent=11 // pred_check_branch
          %226 = sbr.rel (%p224) target = $region32
        $region31: #{inception_forward.1} parent=11 // pred_region
          _
        $region32: #{inception_forward.1} parent=11 // pred_fallthru
          _
        // Predicated region
        $region33: #{inception_forward.1} parent=11 // pred_check
          %p227 = pneg %p171
        $region34: #{inception_forward.1} parent=11 // pred_check_branch
          %229 = sbr.rel (%p227) target = $region36
        $region35: #{inception_forward.1} parent=11 // pred_region
          _
        $region36: #{inception_forward.1} parent=11 // pred_fallthru
          _
      $region12: #{inception_forward.1} parent=5 // pred_fallthru
        _
      %p230 = scmp.lt.s32.totalorder %s19, 2
      // Predicated region
      $region37: #{inception_forward.1} parent=5 // pred_check
        %p231 = pneg %p230
      $region38: #{inception_forward.1} parent=5 // pred_check_branch
        %233 = sbr.rel (%p231) target = $region40
      $region39: #{inception_forward.1} parent=5 // pred_region
        // Predicated region
        $region41: #{inception_forward.1} parent=39 // pred_check
          %p234 = pneg %p39
        $region42: #{inception_forward.1} parent=39 // pred_check_branch
          %236 = sbr.rel (%p234) target = $region44
        $region43: #{inception_forward.1} parent=39 // pred_region
          %s237 = sand.u32 %s29, 1
          %s238 = scalar_lea.sflag [#allocation5], %s237
          %s239 = sand.u32 %s29, 1
          %s240 = smul.addr %s239, 256
          %s241 = scalar_lea.vmem [#allocation4], %s240
          %s243 = ssub.s32 4096, 4096
          %244 = vsyncadd %s238, %s243
          %s245 = smul.addr %s19, 32
          %s246 = smul.addr %s245, 128
          %s247 = scalar_lea.hbm %s0, %s246
          %s248 = sshll.u32 %s241, 4
          %s249 = int_to_ptr.vmem [resolvable:$true] %s248
          %254 = dma.hbm_to_vmem [thread:$0]  %s247, 4096, %s249, %s238, 128, 128, 8
        $region44: #{inception_forward.1} parent=39 // pred_fallthru
          _
      $region40: #{inception_forward.1} parent=5 // pred_fallthru
        _
      %p255 = scmp.le.s32.totalorder 1, %s19
      %p256 = scmp.lt.s32.totalorder %s19, 3
      %p257 = pnand %p255, %p256
      %p258 = pneg %p257
      // Predicated region
      $region45: #{inception_forward.1} parent=5 // pred_check
        _
      $region46: #{inception_forward.1} parent=5 // pred_check_branch
        %260 = sbr.rel (%p257) target = $region48
      $region47: #{inception_forward.1} parent=5 // pred_region
        %s261 = ssub.s32 %s19, 1
        %s262 = sand.u32 %s32, 1
        %s263 = scalar_lea.sflag [#allocation5], %s262
        %s264 = sand.u32 %s32, 1
        %s265 = smul.addr %s264, 256
        %s266 = scalar_lea.vmem [#allocation4], %s265
        // Predicated region
        $region49: #{inception_forward.1} parent=47 // pred_check
          %p267 = pneg %p45
        $region50: #{inception_forward.1} parent=47 // pred_check_branch
          %269 = sbr.rel (%p267) target = $region52
        $region51: #{inception_forward.1} parent=47 // pred_region
          %270 = dma.done %s263, 4096
        $region52: #{inception_forward.1} parent=47 // pred_fallthru
          _
        %s271 = sand.u32 %s32, 1
        %s272 = scalar_lea.sflag [#allocation5], %s271
        %s273 = sand.u32 %s32, 1
        %s274 = smul.addr %s273, 256
        %s275 = scalar_lea.vmem [#allocation4], %s274
        %p276 = pneg %p45
        %p277 = pneg %p42
        %p278 = pneg %p66
        %p279 = pneg %p63
        %p280 = pneg %p87
        %p281 = pneg %p84
        %p282 = pneg %p108
        %p283 = pneg %p105
        %p284 = pneg %p129
        %p285 = pneg %p126
        %p286 = pneg %p150
        %p287 = pneg %p147
        %p288 = pneg %p171
        %p289 = pneg %p168
        %p290 = pneg %p197
        %p291 = pneg %p194
        %s292 = sand.u32 %s184, 1
        %s293 = scalar_lea.sflag [#allocation6], %s292
        %s294 = sand.u32 %s184, 1
        %s295 = smul.addr %s294, 256
        %s296 = scalar_lea.vmem [#allocation7], %s295
        %v298 = vld [vmem:[%s266] sm:$0xff]
        %v299 = vld [vmem:[%s266 + $0x8] sm:$0xff]
        %v300 = vld [vmem:[%s266 + $0x10] sm:$0xff]
        %v301 = vld [vmem:[%s266 + $0x18] sm:$0xff]
        %v302 = vld [vmem:[%s266 + $0x20] sm:$0xff]
        %v303 = vld [vmem:[%s266 + $0x28] sm:$0xff]
        %v304 = vld [vmem:[%s266 + $0x30] sm:$0xff]
        %v305 = vld [vmem:[%s266 + $0x38] sm:$0xff]
        %v306 = vld [vmem:[%s266 + $0x40] sm:$0xff]
        %v307 = vld [vmem:[%s266 + $0x48] sm:$0xff]
        %v308 = vld [vmem:[%s266 + $0x50] sm:$0xff]
        %v309 = vld [vmem:[%s266 + $0x58] sm:$0xff]
        %v310 = vld [vmem:[%s266 + $0x60] sm:$0xff]
        %v311 = vld [vmem:[%s266 + $0x68] sm:$0xff]
        %v312 = vld [vmem:[%s266 + $0x70] sm:$0xff]
        %v313 = vld [vmem:[%s266 + $0x78] sm:$0xff]
        %v314 = vld [vmem:[%s266 + $0x80] sm:$0xff]
        %v315 = vld [vmem:[%s266 + $0x88] sm:$0xff]
        %v316 = vld [vmem:[%s266 + $0x90] sm:$0xff]
        %v317 = vld [vmem:[%s266 + $0x98] sm:$0xff]
        %v318 = vld [vmem:[%s266 + $0xa0] sm:$0xff]
        %v319 = vld [vmem:[%s266 + $0xa8] sm:$0xff]
        %v320 = vld [vmem:[%s266 + $0xb0] sm:$0xff]
        %v321 = vld [vmem:[%s266 + $0xb8] sm:$0xff]
        %v322 = vld [vmem:[%s266 + $0xc0] sm:$0xff]
        %v323 = vld [vmem:[%s266 + $0xc8] sm:$0xff]
        %v324 = vld [vmem:[%s266 + $0xd0] sm:$0xff]
        %v325 = vld [vmem:[%s266 + $0xd8] sm:$0xff]
        %v326 = vld [vmem:[%s266 + $0xe0] sm:$0xff]
        %v327 = vld [vmem:[%s266 + $0xe8] sm:$0xff]
        %v328 = vld [vmem:[%s266 + $0xf0] sm:$0xff]
        %v329 = vld [vmem:[%s266 + $0xf8] sm:$0xff]
        %v330 = vpack.c.bf16 %v299, %v298
        %v331 = vpack.c.bf16 %v301, %v300
        %v332 = vpack.c.bf16 %v303, %v302
        %v333 = vpack.c.bf16 %v305, %v304
        %v334 = vpack.c.bf16 %v307, %v306
        %v335 = vpack.c.bf16 %v309, %v308
        %v336 = vpack.c.bf16 %v311, %v310
        %v337 = vpack.c.bf16 %v313, %v312
        %v338 = vpack.c.bf16 %v315, %v314
        %v339 = vpack.c.bf16 %v317, %v316
        %v340 = vpack.c.bf16 %v319, %v318
        %v341 = vpack.c.bf16 %v321, %v320
        %v342 = vpack.c.bf16 %v323, %v322
        %v343 = vpack.c.bf16 %v325, %v324
        %v344 = vpack.c.bf16 %v327, %v326
        %v345 = vpack.c.bf16 %v329, %v328
        %v346 = vld [vmem:[%s1] sm:$0xf]
        %v347 = vld [vmem:[%s1 + $0x4] sm:$0xf]
        %v348 = vld [vmem:[%s1 + $0x8] sm:$0xf]
        %v349 = vld [vmem:[%s1 + $0xc] sm:$0xf]
        %v350 = vld [vmem:[%s2] sm:$0x1]
        %v352 = vlaneseq
        %v353 = vshrl.u32 %v352, 7
        %v354 = vsub.s32 0, %v353
        %v355 = vrot.slane %v350, %v354
        %v361 = vunpack.c.l.b16 %v346
        %v362 = vunpack.c.l.b16 %v347
        %v363 = vunpack.c.l.b16 %v348
        %v364 = vunpack.c.l.b16 %v349
        %v365 = vpack.c.b16 %v362, %v361
        %v366 = vpack.c.b16 %v364, %v363
        %vm369 = vcmask 261120
        %v371 = vsel %vm369, %v330, 0
        %v374 = vsel %vm369, %v331, 0
        %v377 = vsel %vm369, %v332, 0
        %v380 = vsel %vm369, %v333, 0
        %v383 = vsel %vm369, %v334, 0
        %v386 = vsel %vm369, %v335, 0
        %v389 = vsel %vm369, %v336, 0
        %v392 = vsel %vm369, %v337, 0
        %v395 = vsel %vm369, %v338, 0
        %v398 = vsel %vm369, %v339, 0
        %v401 = vsel %vm369, %v340, 0
        %v404 = vsel %vm369, %v341, 0
        %v407 = vsel %vm369, %v342, 0
        %v410 = vsel %vm369, %v343, 0
        %v413 = vsel %vm369, %v344, 0
        %v416 = vsel %vm369, %v345, 0
        %418 = vmatprep.subr.bf16.mxu0 0
        %419 = vmatpush1.bf16.msra.mxu0 0
        %420 = vmatprep.subr.bf16.mxu0 0
        %421 = vmatpush1.bf16.msra.mxu0 0
        %422 = vmatprep.subr.bf16.mxu0 0
        %423 = vmatpush1.bf16.msra.mxu0 0
        %424 = vmatprep.subr.bf16.mxu0 0
        %425 = vmatpush1.bf16.msra.mxu0 0
        %426 = vmatprep.subr.bf16.mxu0 0
        %427 = vmatpush1.bf16.msra.mxu0 0
        %428 = vmatprep.subr.bf16.mxu0 0
        %429 = vmatpush1.bf16.msra.mxu0 0
        %430 = vmatprep.subr.bf16.mxu0 0
        %431 = vmatpush1.bf16.msra.mxu0 %v366
        %432 = vmatprep.subr.bf16.mxu0 0
        %433 = vmatpush1.bf16.msra.mxu0 %v365
        %434 = vmatprep.subr.bf16.mxu0 0
        %435 = vmatpush2.bf16.msra.mxu0 0
        %436 = vmatprep.subr.bf16.mxu0 0
        %437 = vmatpush2.bf16.msra.mxu0 0
        %438 = vmatprep.subr.bf16.mxu0 0
        %439 = vmatpush2.bf16.msra.mxu0 0
        %440 = vmatprep.subr.bf16.mxu0 0
        %441 = vmatpush2.bf16.msra.mxu0 0
        %442 = vmatprep.subr.bf16.mxu0 0
        %443 = vmatpush2.bf16.msra.mxu0 0
        %444 = vmatprep.subr.bf16.mxu0 0
        %445 = vmatpush2.bf16.msra.mxu0 0
        %446 = vmatprep.subr.bf16.mxu0 0
        %447 = vmatpush2.bf16.msra.mxu0 0
        %448 = vmatprep.subr.bf16.mxu0 0
        %449 = vmatpush2.bf16.msra.mxu0 0
        %450 = vmatprep.mubr.bf16.mxu0 0
        %451 = vmatmul.mubr.bf16.gmra.mxu0 %v371
        %v452 = vpop.f32.mrf.mxu0
        %v453 = vadd.f32 %v355, %v452
        %v454 = vpop.f32.mrf.mxu0
        %v455 = vpop.f32.mrf.mxu0
        %v456 = vadd.f32 %v355, %v455
        %v457 = vpop.f32.mrf.mxu0
        %458 = vmatprep.mubr.bf16.mxu0 0
        %459 = vmatmul.mubr.bf16.gmra.mxu0 %v374
        %v460 = vpop.f32.mrf.mxu0
        %v461 = vadd.f32 %v355, %v460
        %v462 = vpop.f32.mrf.mxu0
        %v463 = vpop.f32.mrf.mxu0
        %v464 = vadd.f32 %v355, %v463
        %v465 = vpop.f32.mrf.mxu0
        %466 = vmatprep.mubr.bf16.mxu0 0
        %467 = vmatmul.mubr.bf16.gmra.mxu0 %v377
        %v468 = vpop.f32.mrf.mxu0
        %v469 = vadd.f32 %v355, %v468
        %v470 = vpop.f32.mrf.mxu0
        %v471 = vpop.f32.mrf.mxu0
        %v472 = vadd.f32 %v355, %v471
        %v473 = vpop.f32.mrf.mxu0
        %474 = vmatprep.mubr.bf16.mxu0 0
        %475 = vmatmul.mubr.bf16.gmra.mxu0 %v380
        %v476 = vpop.f32.mrf.mxu0
        %v477 = vadd.f32 %v355, %v476
        %v478 = vpop.f32.mrf.mxu0
        %v479 = vpop.f32.mrf.mxu0
        %v480 = vadd.f32 %v355, %v479
        %v481 = vpop.f32.mrf.mxu0
        %482 = vmatprep.mubr.bf16.mxu0 0
        %483 = vmatmul.mubr.bf16.gmra.mxu0 %v383
        %v484 = vpop.f32.mrf.mxu0
        %v485 = vadd.f32 %v355, %v484
        %v486 = vpop.f32.mrf.mxu0
        %v487 = vpop.f32.mrf.mxu0
        %v488 = vadd.f32 %v355, %v487
        %v489 = vpop.f32.mrf.mxu0
        %490 = vmatprep.mubr.bf16.mxu0 0
        %491 = vmatmul.mubr.bf16.gmra.mxu0 %v386
        %v492 = vpop.f32.mrf.mxu0
        %v493 = vadd.f32 %v355, %v492
        %v494 = vpop.f32.mrf.mxu0
        %v495 = vpop.f32.mrf.mxu0
        %v496 = vadd.f32 %v355, %v495
        %v497 = vpop.f32.mrf.mxu0
        %498 = vmatprep.mubr.bf16.mxu0 0
        %499 = vmatmul.mubr.bf16.gmra.mxu0 %v389
        %v500 = vpop.f32.mrf.mxu0
        %v501 = vadd.f32 %v355, %v500
        %v502 = vpop.f32.mrf.mxu0
        %v503 = vpop.f32.mrf.mxu0
        %v504 = vadd.f32 %v355, %v503
        %v505 = vpop.f32.mrf.mxu0
        %506 = vmatprep.mubr.bf16.mxu0 0
        %507 = vmatmul.mubr.bf16.gmra.mxu0 %v392
        %v508 = vpop.f32.mrf.mxu0
        %v509 = vadd.f32 %v355, %v508
        %v510 = vpop.f32.mrf.mxu0
        %v511 = vpop.f32.mrf.mxu0
        %v512 = vadd.f32 %v355, %v511
        %v513 = vpop.f32.mrf.mxu0
        %514 = vmatprep.mubr.bf16.mxu0 0
        %515 = vmatmul.mubr.bf16.gmra.mxu0 %v395
        %v516 = vpop.f32.mrf.mxu0
        %v517 = vadd.f32 %v355, %v516
        %v518 = vpop.f32.mrf.mxu0
        %v519 = vpop.f32.mrf.mxu0
        %v520 = vadd.f32 %v355, %v519
        %v521 = vpop.f32.mrf.mxu0
        %522 = vmatprep.mubr.bf16.mxu0 0
        %523 = vmatmul.mubr.bf16.gmra.mxu0 %v398
        %v524 = vpop.f32.mrf.mxu0
        %v525 = vadd.f32 %v355, %v524
        %v526 = vpop.f32.mrf.mxu0
        %v527 = vpop.f32.mrf.mxu0
        %v528 = vadd.f32 %v355, %v527
        %v529 = vpop.f32.mrf.mxu0
        %530 = vmatprep.mubr.bf16.mxu0 0
        %531 = vmatmul.mubr.bf16.gmra.mxu0 %v401
        %v532 = vpop.f32.mrf.mxu0
        %v533 = vadd.f32 %v355, %v532
        %v534 = vpop.f32.mrf.mxu0
        %v535 = vpop.f32.mrf.mxu0
        %v536 = vadd.f32 %v355, %v535
        %v537 = vpop.f32.mrf.mxu0
        %538 = vmatprep.mubr.bf16.mxu0 0
        %539 = vmatmul.mubr.bf16.gmra.mxu0 %v404
        %v540 = vpop.f32.mrf.mxu0
        %v541 = vadd.f32 %v355, %v540
        %v542 = vpop.f32.mrf.mxu0
        %v543 = vpop.f32.mrf.mxu0
        %v544 = vadd.f32 %v355, %v543
        %v545 = vpop.f32.mrf.mxu0
        %546 = vmatprep.mubr.bf16.mxu0 0
        %547 = vmatmul.mubr.bf16.gmra.mxu0 %v407
        %v548 = vpop.f32.mrf.mxu0
        %v549 = vadd.f32 %v355, %v548
        %v550 = vpop.f32.mrf.mxu0
        %v551 = vpop.f32.mrf.mxu0
        %v552 = vadd.f32 %v355, %v551
        %v553 = vpop.f32.mrf.mxu0
        %554 = vmatprep.mubr.bf16.mxu0 0
        %555 = vmatmul.mubr.bf16.gmra.mxu0 %v410
        %v556 = vpop.f32.mrf.mxu0
        %v557 = vadd.f32 %v355, %v556
        %v558 = vpop.f32.mrf.mxu0
        %v559 = vpop.f32.mrf.mxu0
        %v560 = vadd.f32 %v355, %v559
        %v561 = vpop.f32.mrf.mxu0
        %562 = vmatprep.mubr.bf16.mxu0 0
        %563 = vmatmul.mubr.bf16.gmra.mxu0 %v413
        %v564 = vpop.f32.mrf.mxu0
        %v565 = vadd.f32 %v355, %v564
        %v566 = vpop.f32.mrf.mxu0
        %v567 = vpop.f32.mrf.mxu0
        %v568 = vadd.f32 %v355, %v567
        %v569 = vpop.f32.mrf.mxu0
        %570 = vmatprep.mubr.bf16.mxu0 0
        %571 = vmatmul.mubr.bf16.gmra.mxu0 %v416
        %v572 = vpop.f32.mrf.mxu0
        %v573 = vadd.f32 %v355, %v572
        %v574 = vpop.f32.mrf.mxu0
        %v575 = vpop.f32.mrf.mxu0
        %v576 = vadd.f32 %v355, %v575
        %v577 = vpop.f32.mrf.mxu0
        %578 = vdwg.mxu0
        %v579 = vmax.f32 %v453, 0.0
        %v580 = vmax.f32 %v456, 0.0
        %v581 = vmax.f32 %v461, 0.0
        %v582 = vmax.f32 %v464, 0.0
        %v583 = vmax.f32 %v469, 0.0
        %v584 = vmax.f32 %v472, 0.0
        %v585 = vmax.f32 %v477, 0.0
        %v586 = vmax.f32 %v480, 0.0
        %v587 = vmax.f32 %v485, 0.0
        %v588 = vmax.f32 %v488, 0.0
        %v589 = vmax.f32 %v493, 0.0
        %v590 = vmax.f32 %v496, 0.0
        %v591 = vmax.f32 %v501, 0.0
        %v592 = vmax.f32 %v504, 0.0
        %v593 = vmax.f32 %v509, 0.0
        %v594 = vmax.f32 %v512, 0.0
        %v595 = vmax.f32 %v517, 0.0
        %v596 = vmax.f32 %v520, 0.0
        %v597 = vmax.f32 %v525, 0.0
        %v598 = vmax.f32 %v528, 0.0
        %v599 = vmax.f32 %v533, 0.0
        %v600 = vmax.f32 %v536, 0.0
        %v601 = vmax.f32 %v541, 0.0
        %v602 = vmax.f32 %v544, 0.0
        %v603 = vmax.f32 %v549, 0.0
        %v604 = vmax.f32 %v552, 0.0
        %v605 = vmax.f32 %v557, 0.0
        %v606 = vmax.f32 %v560, 0.0
        %v607 = vmax.f32 %v565, 0.0
        %v608 = vmax.f32 %v568, 0.0
        %v609 = vmax.f32 %v573, 0.0
        %v610 = vmax.f32 %v576, 0.0
        %vm611 = vcmask 195584
        %612 = vst.msk [vmem:[#allocation2] sm:$0xff] %vm611, 0.0
        %613 = vst.msk [vmem:[#allocation2 + $0x8] sm:$0xff] %vm611, 0.0
        %vm614 = vcmask 189440
        %615 = vst.msk [vmem:[#allocation2 + $0x10] sm:$0x3] %vm614, 0.0
        %s616 = scalar_lea.vmem [#allocation2], 408
        %617 = vst.msk [vmem:[%s616] sm:$0xff] %vm611, 0.0
        %618 = vst.msk [vmem:[%s616 + $0x8] sm:$0xff] %vm611, 0.0
        %619 = vst.msk [vmem:[%s616 + $0x10] sm:$0x3] %vm614, 0.0
        %s620 = scalar_lea.vmem [#allocation2], 24
        %vm621 = vcmask 188416
        %622 = vst.msk [vmem:[%s620] sm:$0x1] %vm621, 0.0
        %623 = vst.msk [vmem:[%s620 + $0x18] sm:$0x1] %vm621, 0.0
        %624 = vst.msk [vmem:[%s620 + $0x30] sm:$0x1] %vm621, 0.0
        %625 = vst.msk [vmem:[%s620 + $0x48] sm:$0x1] %vm621, 0.0
        %626 = vst.msk [vmem:[%s620 + $0x60] sm:$0x1] %vm621, 0.0
        %627 = vst.msk [vmem:[%s620 + $0x78] sm:$0x1] %vm621, 0.0
        %628 = vst.msk [vmem:[%s620 + $0x90] sm:$0x1] %vm621, 0.0
        %629 = vst.msk [vmem:[%s620 + $0xa8] sm:$0x1] %vm621, 0.0
        %630 = vst.msk [vmem:[%s620 + $0xc0] sm:$0x1] %vm621, 0.0
        %631 = vst.msk [vmem:[%s620 + $0xd8] sm:$0x1] %vm621, 0.0
        %632 = vst.msk [vmem:[%s620 + $0xf0] sm:$0x1] %vm621, 0.0
        %633 = vst.msk [vmem:[%s620 + $0x108] sm:$0x1] %vm621, 0.0
        %634 = vst.msk [vmem:[%s620 + $0x120] sm:$0x1] %vm621, 0.0
        %635 = vst.msk [vmem:[%s620 + $0x138] sm:$0x1] %vm621, 0.0
        %636 = vst.msk [vmem:[%s620 + $0x150] sm:$0x1] %vm621, 0.0
        %637 = vst.msk [vmem:[%s620 + $0x168] sm:$0x1] %vm621, 0.0
        %638 = vst.msk [vmem:[%s620 + $0x11] sm:$0x1] %vm621, 0.0
        %639 = vst.msk [vmem:[%s620 + $0x29] sm:$0x1] %vm621, 0.0
        %640 = vst.msk [vmem:[%s620 + $0x41] sm:$0x1] %vm621, 0.0
        %641 = vst.msk [vmem:[%s620 + $0x59] sm:$0x1] %vm621, 0.0
        %642 = vst.msk [vmem:[%s620 + $0x71] sm:$0x1] %vm621, 0.0
        %643 = vst.msk [vmem:[%s620 + $0x89] sm:$0x1] %vm621, 0.0
        %644 = vst.msk [vmem:[%s620 + $0xa1] sm:$0x1] %vm621, 0.0
        %645 = vst.msk [vmem:[%s620 + $0xb9] sm:$0x1] %vm621, 0.0
        %646 = vst.msk [vmem:[%s620 + $0xd1] sm:$0x1] %vm621, 0.0
        %647 = vst.msk [vmem:[%s620 + $0xe9] sm:$0x1] %vm621, 0.0
        %648 = vst.msk [vmem:[%s620 + $0x101] sm:$0x1] %vm621, 0.0
        %649 = vst.msk [vmem:[%s620 + $0x119] sm:$0x1] %vm621, 0.0
        %650 = vst.msk [vmem:[%s620 + $0x131] sm:$0x1] %vm621, 0.0
        %651 = vst.msk [vmem:[%s620 + $0x149] sm:$0x1] %vm621, 0.0
        %652 = vst.msk [vmem:[%s620 + $0x161] sm:$0x1] %vm621, 0.0
        %653 = vst.msk [vmem:[%s620 + $0x179] sm:$0x1] %vm621, 0.0
        %686 = vrot.lane.b32.xlu0 %v579, 96
        %v687 = vpop.permute.xlu0 %686
        %688 = vrot.lane.b32.xlu0 %v580, 96
        %v689 = vpop.permute.xlu0 %688
        %690 = vrot.lane.b32.xlu0 %v581, 96
        %v691 = vpop.permute.xlu0 %690
        %692 = vrot.lane.b32.xlu0 %v582, 96
        %v693 = vpop.permute.xlu0 %692
        %694 = vrot.lane.b32.xlu0 %v583, 96
        %v695 = vpop.permute.xlu0 %694
        %696 = vrot.lane.b32.xlu0 %v584, 96
        %v697 = vpop.permute.xlu0 %696
        %698 = vrot.lane.b32.xlu0 %v585, 96
        %v699 = vpop.permute.xlu0 %698
        %700 = vrot.lane.b32.xlu0 %v586, 96
        %v701 = vpop.permute.xlu0 %700
        %702 = vrot.lane.b32.xlu0 %v587, 96
        %v703 = vpop.permute.xlu0 %702
        %704 = vrot.lane.b32.xlu0 %v588, 96
        %v705 = vpop.permute.xlu0 %704
        %706 = vrot.lane.b32.xlu0 %v589, 96
        %v707 = vpop.permute.xlu0 %706
        %708 = vrot.lane.b32.xlu0 %v590, 96
        %v709 = vpop.permute.xlu0 %708
        %710 = vrot.lane.b32.xlu0 %v591, 96
        %v711 = vpop.permute.xlu0 %710
        %712 = vrot.lane.b32.xlu0 %v592, 96
        %v713 = vpop.permute.xlu0 %712
        %714 = vrot.lane.b32.xlu0 %v593, 96
        %v715 = vpop.permute.xlu0 %714
        %716 = vrot.lane.b32.xlu0 %v594, 96
        %v717 = vpop.permute.xlu0 %716
        %718 = vrot.lane.b32.xlu0 %v595, 96
        %v719 = vpop.permute.xlu0 %718
        %720 = vrot.lane.b32.xlu0 %v596, 96
        %v721 = vpop.permute.xlu0 %720
        %722 = vrot.lane.b32.xlu0 %v597, 96
        %v723 = vpop.permute.xlu0 %722
        %724 = vrot.lane.b32.xlu0 %v598, 96
        %v725 = vpop.permute.xlu0 %724
        %726 = vrot.lane.b32.xlu0 %v599, 96
        %v727 = vpop.permute.xlu0 %726
        %728 = vrot.lane.b32.xlu0 %v600, 96
        %v729 = vpop.permute.xlu0 %728
        %730 = vrot.lane.b32.xlu0 %v601, 96
        %v731 = vpop.permute.xlu0 %730
        %732 = vrot.lane.b32.xlu0 %v602, 96
        %v733 = vpop.permute.xlu0 %732
        %734 = vrot.lane.b32.xlu0 %v603, 96
        %v735 = vpop.permute.xlu0 %734
        %736 = vrot.lane.b32.xlu0 %v604, 96
        %v737 = vpop.permute.xlu0 %736
        %738 = vrot.lane.b32.xlu0 %v605, 96
        %v739 = vpop.permute.xlu0 %738
        %740 = vrot.lane.b32.xlu0 %v606, 96
        %v741 = vpop.permute.xlu0 %740
        %742 = vrot.lane.b32.xlu0 %v607, 96
        %v743 = vpop.permute.xlu0 %742
        %744 = vrot.lane.b32.xlu0 %v608, 96
        %v745 = vpop.permute.xlu0 %744
        %746 = vrot.lane.b32.xlu0 %v609, 96
        %v747 = vpop.permute.xlu0 %746
        %748 = vrot.lane.b32.xlu0 %v610, 96
        %v749 = vpop.permute.xlu0 %748
        %782 = vst.msk [vmem:[%s620 + $0x1] sm:$0xff] %vm611, %v687
        %783 = vst.msk [vmem:[%s620 + $0x9] sm:$0xff] %vm611, %v689
        %784 = vst.msk [vmem:[%s620 + $0x19] sm:$0xff] %vm611, %v691
        %785 = vst.msk [vmem:[%s620 + $0x21] sm:$0xff] %vm611, %v693
        %786 = vst.msk [vmem:[%s620 + $0x31] sm:$0xff] %vm611, %v695
        %787 = vst.msk [vmem:[%s620 + $0x39] sm:$0xff] %vm611, %v697
        %788 = vst.msk [vmem:[%s620 + $0x49] sm:$0xff] %vm611, %v699
        %789 = vst.msk [vmem:[%s620 + $0x51] sm:$0xff] %vm611, %v701
        %790 = vst.msk [vmem:[%s620 + $0x61] sm:$0xff] %vm611, %v703
        %791 = vst.msk [vmem:[%s620 + $0x69] sm:$0xff] %vm611, %v705
        %792 = vst.msk [vmem:[%s620 + $0x79] sm:$0xff] %vm611, %v707
        %793 = vst.msk [vmem:[%s620 + $0x81] sm:$0xff] %vm611, %v709
        %794 = vst.msk [vmem:[%s620 + $0x91] sm:$0xff] %vm611, %v711
        %795 = vst.msk [vmem:[%s620 + $0x99] sm:$0xff] %vm611, %v713
        %796 = vst.msk [vmem:[%s620 + $0xa9] sm:$0xff] %vm611, %v715
        %797 = vst.msk [vmem:[%s620 + $0xb1] sm:$0xff] %vm611, %v717
        %798 = vst.msk [vmem:[%s620 + $0xc1] sm:$0xff] %vm611, %v719
        %799 = vst.msk [vmem:[%s620 + $0xc9] sm:$0xff] %vm611, %v721
        %800 = vst.msk [vmem:[%s620 + $0xd9] sm:$0xff] %vm611, %v723
        %801 = vst.msk [vmem:[%s620 + $0xe1] sm:$0xff] %vm611, %v725
        %802 = vst.msk [vmem:[%s620 + $0xf1] sm:$0xff] %vm611, %v727
        %803 = vst.msk [vmem:[%s620 + $0xf9] sm:$0xff] %vm611, %v729
        %804 = vst.msk [vmem:[%s620 + $0x109] sm:$0xff] %vm611, %v731
        %805 = vst.msk [vmem:[%s620 + $0x111] sm:$0xff] %vm611, %v733
        %806 = vst.msk [vmem:[%s620 + $0x121] sm:$0xff] %vm611, %v735
        %807 = vst.msk [vmem:[%s620 + $0x129] sm:$0xff] %vm611, %v737
        %808 = vst.msk [vmem:[%s620 + $0x139] sm:$0xff] %vm611, %v739
        %809 = vst.msk [vmem:[%s620 + $0x141] sm:$0xff] %vm611, %v741
        %810 = vst.msk [vmem:[%s620 + $0x151] sm:$0xff] %vm611, %v743
        %811 = vst.msk [vmem:[%s620 + $0x159] sm:$0xff] %vm611, %v745
        %812 = vst.msk [vmem:[%s620 + $0x169] sm:$0xff] %vm611, %v747
        %813 = vst.msk [vmem:[%s620 + $0x171] sm:$0xff] %vm611, %v749
        %v814 = vld [vmem:[#allocation2] sm:$0xff]
        %v815 = vld [vmem:[#allocation2 + $0x8] sm:$0xff]
        %v816 = vld [vmem:[#allocation2 + $0x18] sm:$0xff]
        %v817 = vld [vmem:[#allocation2 + $0x20] sm:$0xff]
        %v818 = vld [vmem:[#allocation2 + $0x30] sm:$0xff]
        %v819 = vld [vmem:[#allocation2 + $0x38] sm:$0xff]
        %v820 = vld [vmem:[#allocation2 + $0x48] sm:$0xff]
        %v821 = vld [vmem:[#allocation2 + $0x50] sm:$0xff]
        %v822 = vld [vmem:[#allocation2 + $0x60] sm:$0xff]
        %v823 = vld [vmem:[#allocation2 + $0x68] sm:$0xff]
        %v824 = vld [vmem:[#allocation2 + $0x78] sm:$0xff]
        %v825 = vld [vmem:[#allocation2 + $0x80] sm:$0xff]
        %v826 = vld [vmem:[#allocation2 + $0x90] sm:$0xff]
        %v827 = vld [vmem:[#allocation2 + $0x98] sm:$0xff]
        %v828 = vld [vmem:[#allocation2 + $0xa8] sm:$0xff]
        %v829 = vld [vmem:[#allocation2 + $0xb0] sm:$0xff]
        %v830 = vld [vmem:[#allocation2 + $0xc0] sm:$0xff]
        %v831 = vld [vmem:[#allocation2 + $0xc8] sm:$0xff]
        %v832 = vld [vmem:[#allocation2 + $0xd8] sm:$0xff]
        %v833 = vld [vmem:[#allocation2 + $0xe0] sm:$0xff]
        %v834 = vld [vmem:[#allocation2 + $0xf0] sm:$0xff]
        %v835 = vld [vmem:[#allocation2 + $0xf8] sm:$0xff]
        %v836 = vld [vmem:[#allocation2 + $0x108] sm:$0xff]
        %v837 = vld [vmem:[#allocation2 + $0x110] sm:$0xff]
        %v838 = vld [vmem:[#allocation2 + $0x120] sm:$0xff]
        %v839 = vld [vmem:[#allocation2 + $0x128] sm:$0xff]
        %v840 = vld [vmem:[#allocation2 + $0x138] sm:$0xff]
        %v841 = vld [vmem:[#allocation2 + $0x140] sm:$0xff]
        %v842 = vld [vmem:[#allocation2 + $0x150] sm:$0xff]
        %v843 = vld [vmem:[#allocation2 + $0x158] sm:$0xff]
        %v844 = vld [vmem:[#allocation2 + $0x168] sm:$0xff]
        %v845 = vld [vmem:[#allocation2 + $0x170] sm:$0xff]
        %v846 = vld [vmem:[#allocation2 + $0x1] sm:$0xff]
        %v847 = vld [vmem:[#allocation2 + $0x9] sm:$0xff]
        %v848 = vld [vmem:[#allocation2 + $0x19] sm:$0xff]
        %v849 = vld [vmem:[#allocation2 + $0x21] sm:$0xff]
        %v850 = vld [vmem:[#allocation2 + $0x31] sm:$0xff]
        %v851 = vld [vmem:[#allocation2 + $0x39] sm:$0xff]
        %v852 = vld [vmem:[#allocation2 + $0x49] sm:$0xff]
        %v853 = vld [vmem:[#allocation2 + $0x51] sm:$0xff]
        %v854 = vld [vmem:[#allocation2 + $0x61] sm:$0xff]
        %v855 = vld [vmem:[#allocation2 + $0x69] sm:$0xff]
        %v856 = vld [vmem:[#allocation2 + $0x79] sm:$0xff]
        %v857 = vld [vmem:[#allocation2 + $0x81] sm:$0xff]
        %v858 = vld [vmem:[#allocation2 + $0x91] sm:$0xff]
        %v859 = vld [vmem:[#allocation2 + $0x99] sm:$0xff]
        %v860 = vld [vmem:[#allocation2 + $0xa9] sm:$0xff]
        %v861 = vld [vmem:[#allocation2 + $0xb1] sm:$0xff]
        %v862 = vld [vmem:[#allocation2 + $0xc1] sm:$0xff]
        %v863 = vld [vmem:[#allocation2 + $0xc9] sm:$0xff]
        %v864 = vld [vmem:[#allocation2 + $0xd9] sm:$0xff]
        %v865 = vld [vmem:[#allocation2 + $0xe1] sm:$0xff]
        %v866 = vld [vmem:[#allocation2 + $0xf1] sm:$0xff]
        %v867 = vld [vmem:[#allocation2 + $0xf9] sm:$0xff]
        %v868 = vld [vmem:[#allocation2 + $0x109] sm:$0xff]
        %v869 = vld [vmem:[#allocation2 + $0x111] sm:$0xff]
        %v870 = vld [vmem:[#allocation2 + $0x121] sm:$0xff]
        %v871 = vld [vmem:[#allocation2 + $0x129] sm:$0xff]
        %v872 = vld [vmem:[#allocation2 + $0x139] sm:$0xff]
        %v873 = vld [vmem:[#allocation2 + $0x141] sm:$0xff]
        %v874 = vld [vmem:[#allocation2 + $0x151] sm:$0xff]
        %v875 = vld [vmem:[#allocation2 + $0x159] sm:$0xff]
        %v876 = vld [vmem:[#allocation2 + $0x169] sm:$0xff]
        %v877 = vld [vmem:[#allocation2 + $0x171] sm:$0xff]
        %v878 = vld [vmem:[#allocation2 + $0x2] sm:$0xff]
        %v879 = vld [vmem:[#allocation2 + $0xa] sm:$0xff]
        %v880 = vld [vmem:[#allocation2 + $0x1a] sm:$0xff]
        %v881 = vld [vmem:[#allocation2 + $0x22] sm:$0xff]
        %v882 = vld [vmem:[#allocation2 + $0x32] sm:$0xff]
        %v883 = vld [vmem:[#allocation2 + $0x3a] sm:$0xff]
        %v884 = vld [vmem:[#allocation2 + $0x4a] sm:$0xff]
        %v885 = vld [vmem:[#allocation2 + $0x52] sm:$0xff]
        %v886 = vld [vmem:[#allocation2 + $0x62] sm:$0xff]
        %v887 = vld [vmem:[#allocation2 + $0x6a] sm:$0xff]
        %v888 = vld [vmem:[#allocation2 + $0x7a] sm:$0xff]
        %v889 = vld [vmem:[#allocation2 + $0x82] sm:$0xff]
        %v890 = vld [vmem:[#allocation2 + $0x92] sm:$0xff]
        %v891 = vld [vmem:[#allocation2 + $0x9a] sm:$0xff]
        %v892 = vld [vmem:[#allocation2 + $0xaa] sm:$0xff]
        %v893 = vld [vmem:[#allocation2 + $0xb2] sm:$0xff]
        %v894 = vld [vmem:[#allocation2 + $0xc2] sm:$0xff]
        %v895 = vld [vmem:[#allocation2 + $0xca] sm:$0xff]
        %v896 = vld [vmem:[#allocation2 + $0xda] sm:$0xff]
        %v897 = vld [vmem:[#allocation2 + $0xe2] sm:$0xff]
        %v898 = vld [vmem:[#allocation2 + $0xf2] sm:$0xff]
        %v899 = vld [vmem:[#allocation2 + $0xfa] sm:$0xff]
        %v900 = vld [vmem:[#allocation2 + $0x10a] sm:$0xff]
        %v901 = vld [vmem:[#allocation2 + $0x112] sm:$0xff]
        %v902 = vld [vmem:[#allocation2 + $0x122] sm:$0xff]
        %v903 = vld [vmem:[#allocation2 + $0x12a] sm:$0xff]
        %v904 = vld [vmem:[#allocation2 + $0x13a] sm:$0xff]
        %v905 = vld [vmem:[#allocation2 + $0x142] sm:$0xff]
        %v906 = vld [vmem:[#allocation2 + $0x152] sm:$0xff]
        %v907 = vld [vmem:[#allocation2 + $0x15a] sm:$0xff]
        %v908 = vld [vmem:[#allocation2 + $0x16a] sm:$0xff]
        %v909 = vld [vmem:[#allocation2 + $0x172] sm:$0xff]
        %v910 = vld [vmem:[%s620] sm:$0xff]
        %v911 = vld [vmem:[%s620 + $0x8] sm:$0xff]
        %v912 = vld [vmem:[%s620 + $0x18] sm:$0xff]
        %v913 = vld [vmem:[%s620 + $0x20] sm:$0xff]
        %v914 = vld [vmem:[%s620 + $0x30] sm:$0xff]
        %v915 = vld [vmem:[%s620 + $0x38] sm:$0xff]
        %v916 = vld [vmem:[%s620 + $0x48] sm:$0xff]
        %v917 = vld [vmem:[%s620 + $0x50] sm:$0xff]
        %v918 = vld [vmem:[%s620 + $0x60] sm:$0xff]
        %v919 = vld [vmem:[%s620 + $0x68] sm:$0xff]
        %v920 = vld [vmem:[%s620 + $0x78] sm:$0xff]
        %v921 = vld [vmem:[%s620 + $0x80] sm:$0xff]
        %v922 = vld [vmem:[%s620 + $0x90] sm:$0xff]
        %v923 = vld [vmem:[%s620 + $0x98] sm:$0xff]
        %v924 = vld [vmem:[%s620 + $0xa8] sm:$0xff]
        %v925 = vld [vmem:[%s620 + $0xb0] sm:$0xff]
        %v926 = vld [vmem:[%s620 + $0xc0] sm:$0xff]
        %v927 = vld [vmem:[%s620 + $0xc8] sm:$0xff]
        %v928 = vld [vmem:[%s620 + $0xd8] sm:$0xff]
        %v929 = vld [vmem:[%s620 + $0xe0] sm:$0xff]
        %v930 = vld [vmem:[%s620 + $0xf0] sm:$0xff]
        %v931 = vld [vmem:[%s620 + $0xf8] sm:$0xff]
        %v932 = vld [vmem:[%s620 + $0x108] sm:$0xff]
        %v933 = vld [vmem:[%s620 + $0x110] sm:$0xff]
        %v934 = vld [vmem:[%s620 + $0x120] sm:$0xff]
        %v935 = vld [vmem:[%s620 + $0x128] sm:$0xff]
        %v936 = vld [vmem:[%s620 + $0x138] sm:$0xff]
        %v937 = vld [vmem:[%s620 + $0x140] sm:$0xff]
        %v938 = vld [vmem:[%s620 + $0x150] sm:$0xff]
        %v939 = vld [vmem:[%s620 + $0x158] sm:$0xff]
        %v940 = vld [vmem:[%s620 + $0x168] sm:$0xff]
        %v941 = vld [vmem:[%s620 + $0x170] sm:$0xff]
        %v942 = vld [vmem:[%s620 + $0x1] sm:$0xff]
        %v943 = vld [vmem:[%s620 + $0x9] sm:$0xff]
        %v944 = vld [vmem:[%s620 + $0x19] sm:$0xff]
        %v945 = vld [vmem:[%s620 + $0x21] sm:$0xff]
        %v946 = vld [vmem:[%s620 + $0x31] sm:$0xff]
        %v947 = vld [vmem:[%s620 + $0x39] sm:$0xff]
        %v948 = vld [vmem:[%s620 + $0x49] sm:$0xff]
        %v949 = vld [vmem:[%s620 + $0x51] sm:$0xff]
        %v950 = vld [vmem:[%s620 + $0x61] sm:$0xff]
        %v951 = vld [vmem:[%s620 + $0x69] sm:$0xff]
        %v952 = vld [vmem:[%s620 + $0x79] sm:$0xff]
        %v953 = vld [vmem:[%s620 + $0x81] sm:$0xff]
        %v954 = vld [vmem:[%s620 + $0x91] sm:$0xff]
        %v955 = vld [vmem:[%s620 + $0x99] sm:$0xff]
        %v956 = vld [vmem:[%s620 + $0xa9] sm:$0xff]
        %v957 = vld [vmem:[%s620 + $0xb1] sm:$0xff]
        %v958 = vld [vmem:[%s620 + $0xc1] sm:$0xff]
        %v959 = vld [vmem:[%s620 + $0xc9] sm:$0xff]
        %v960 = vld [vmem:[%s620 + $0xd9] sm:$0xff]
        %v961 = vld [vmem:[%s620 + $0xe1] sm:$0xff]
        %v962 = vld [vmem:[%s620 + $0xf1] sm:$0xff]
        %v963 = vld [vmem:[%s620 + $0xf9] sm:$0xff]
        %v964 = vld [vmem:[%s620 + $0x109] sm:$0xff]
        %v965 = vld [vmem:[%s620 + $0x111] sm:$0xff]
        %v966 = vld [vmem:[%s620 + $0x121] sm:$0xff]
        %v967 = vld [vmem:[%s620 + $0x129] sm:$0xff]
        %v968 = vld [vmem:[%s620 + $0x139] sm:$0xff]
        %v969 = vld [vmem:[%s620 + $0x141] sm:$0xff]
        %v970 = vld [vmem:[%s620 + $0x151] sm:$0xff]
        %v971 = vld [vmem:[%s620 + $0x159] sm:$0xff]
        %v972 = vld [vmem:[%s620 + $0x169] sm:$0xff]
        %v973 = vld [vmem:[%s620 + $0x171] sm:$0xff]
        %v974 = vld [vmem:[%s620 + $0x2] sm:$0xff]
        %v975 = vld [vmem:[%s620 + $0xa] sm:$0xff]
        %v976 = vld [vmem:[%s620 + $0x1a] sm:$0xff]
        %v977 = vld [vmem:[%s620 + $0x22] sm:$0xff]
        %v978 = vld [vmem:[%s620 + $0x32] sm:$0xff]
        %v979 = vld [vmem:[%s620 + $0x3a] sm:$0xff]
        %v980 = vld [vmem:[%s620 + $0x4a] sm:$0xff]
        %v981 = vld [vmem:[%s620 + $0x52] sm:$0xff]
        %v982 = vld [vmem:[%s620 + $0x62] sm:$0xff]
        %v983 = vld [vmem:[%s620 + $0x6a] sm:$0xff]
        %v984 = vld [vmem:[%s620 + $0x7a] sm:$0xff]
        %v985 = vld [vmem:[%s620 + $0x82] sm:$0xff]
        %v986 = vld [vmem:[%s620 + $0x92] sm:$0xff]
        %v987 = vld [vmem:[%s620 + $0x9a] sm:$0xff]
        %v988 = vld [vmem:[%s620 + $0xaa] sm:$0xff]
        %v989 = vld [vmem:[%s620 + $0xb2] sm:$0xff]
        %v990 = vld [vmem:[%s620 + $0xc2] sm:$0xff]
        %v991 = vld [vmem:[%s620 + $0xca] sm:$0xff]
        %v992 = vld [vmem:[%s620 + $0xda] sm:$0xff]
        %v993 = vld [vmem:[%s620 + $0xe2] sm:$0xff]
        %v994 = vld [vmem:[%s620 + $0xf2] sm:$0xff]
        %v995 = vld [vmem:[%s620 + $0xfa] sm:$0xff]
        %v996 = vld [vmem:[%s620 + $0x10a] sm:$0xff]
        %v997 = vld [vmem:[%s620 + $0x112] sm:$0xff]
        %v998 = vld [vmem:[%s620 + $0x122] sm:$0xff]
        %v999 = vld [vmem:[%s620 + $0x12a] sm:$0xff]
        %v1000 = vld [vmem:[%s620 + $0x13a] sm:$0xff]
        %v1001 = vld [vmem:[%s620 + $0x142] sm:$0xff]
        %v1002 = vld [vmem:[%s620 + $0x152] sm:$0xff]
        %v1003 = vld [vmem:[%s620 + $0x15a] sm:$0xff]
        %v1004 = vld [vmem:[%s620 + $0x16a] sm:$0xff]
        %v1005 = vld [vmem:[%s620 + $0x172] sm:$0xff]
        %s1006 = scalar_lea.vmem [#allocation2], 48
        %v1007 = vld [vmem:[%s1006] sm:$0xff]
        %v1008 = vld [vmem:[%s1006 + $0x8] sm:$0xff]
        %v1009 = vld [vmem:[%s1006 + $0x18] sm:$0xff]
        %v1010 = vld [vmem:[%s1006 + $0x20] sm:$0xff]
        %v1011 = vld [vmem:[%s1006 + $0x30] sm:$0xff]
        %v1012 = vld [vmem:[%s1006 + $0x38] sm:$0xff]
        %v1013 = vld [vmem:[%s1006 + $0x48] sm:$0xff]
        %v1014 = vld [vmem:[%s1006 + $0x50] sm:$0xff]
        %v1015 = vld [vmem:[%s1006 + $0x60] sm:$0xff]
        %v1016 = vld [vmem:[%s1006 + $0x68] sm:$0xff]
        %v1017 = vld [vmem:[%s1006 + $0x78] sm:$0xff]
        %v1018 = vld [vmem:[%s1006 + $0x80] sm:$0xff]
        %v1019 = vld [vmem:[%s1006 + $0x90] sm:$0xff]
        %v1020 = vld [vmem:[%s1006 + $0x98] sm:$0xff]
        %v1021 = vld [vmem:[%s1006 + $0xa8] sm:$0xff]
        %v1022 = vld [vmem:[%s1006 + $0xb0] sm:$0xff]
        %v1023 = vld [vmem:[%s1006 + $0xc0] sm:$0xff]
        %v1024 = vld [vmem:[%s1006 + $0xc8] sm:$0xff]
        %v1025 = vld [vmem:[%s1006 + $0xd8] sm:$0xff]
        %v1026 = vld [vmem:[%s1006 + $0xe0] sm:$0xff]
        %v1027 = vld [vmem:[%s1006 + $0xf0] sm:$0xff]
        %v1028 = vld [vmem:[%s1006 + $0xf8] sm:$0xff]
        %v1029 = vld [vmem:[%s1006 + $0x108] sm:$0xff]
        %v1030 = vld [vmem:[%s1006 + $0x110] sm:$0xff]
        %v1031 = vld [vmem:[%s1006 + $0x120] sm:$0xff]
        %v1032 = vld [vmem:[%s1006 + $0x128] sm:$0xff]
        %v1033 = vld [vmem:[%s1006 + $0x138] sm:$0xff]
        %v1034 = vld [vmem:[%s1006 + $0x140] sm:$0xff]
        %v1035 = vld [vmem:[%s1006 + $0x150] sm:$0xff]
        %v1036 = vld [vmem:[%s1006 + $0x158] sm:$0xff]
        %v1037 = vld [vmem:[%s1006 + $0x168] sm:$0xff]
        %v1038 = vld [vmem:[%s1006 + $0x170] sm:$0xff]
        %v1039 = vld [vmem:[%s1006 + $0x1] sm:$0xff]
        %v1040 = vld [vmem:[%s1006 + $0x9] sm:$0xff]
        %v1041 = vld [vmem:[%s1006 + $0x19] sm:$0xff]
        %v1042 = vld [vmem:[%s1006 + $0x21] sm:$0xff]
        %v1043 = vld [vmem:[%s1006 + $0x31] sm:$0xff]
        %v1044 = vld [vmem:[%s1006 + $0x39] sm:$0xff]
        %v1045 = vld [vmem:[%s1006 + $0x49] sm:$0xff]
        %v1046 = vld [vmem:[%s1006 + $0x51] sm:$0xff]
        %v1047 = vld [vmem:[%s1006 + $0x61] sm:$0xff]
        %v1048 = vld [vmem:[%s1006 + $0x69] sm:$0xff]
        %v1049 = vld [vmem:[%s1006 + $0x79] sm:$0xff]
        %v1050 = vld [vmem:[%s1006 + $0x81] sm:$0xff]
        %v1051 = vld [vmem:[%s1006 + $0x91] sm:$0xff]
        %v1052 = vld [vmem:[%s1006 + $0x99] sm:$0xff]
        %v1053 = vld [vmem:[%s1006 + $0xa9] sm:$0xff]
        %v1054 = vld [vmem:[%s1006 + $0xb1] sm:$0xff]
        %v1055 = vld [vmem:[%s1006 + $0xc1] sm:$0xff]
        %v1056 = vld [vmem:[%s1006 + $0xc9] sm:$0xff]
        %v1057 = vld [vmem:[%s1006 + $0xd9] sm:$0xff]
        %v1058 = vld [vmem:[%s1006 + $0xe1] sm:$0xff]
        %v1059 = vld [vmem:[%s1006 + $0xf1] sm:$0xff]
        %v1060 = vld [vmem:[%s1006 + $0xf9] sm:$0xff]
        %v1061 = vld [vmem:[%s1006 + $0x109] sm:$0xff]
        %v1062 = vld [vmem:[%s1006 + $0x111] sm:$0xff]
        %v1063 = vld [vmem:[%s1006 + $0x121] sm:$0xff]
        %v1064 = vld [vmem:[%s1006 + $0x129] sm:$0xff]
        %v1065 = vld [vmem:[%s1006 + $0x139] sm:$0xff]
        %v1066 = vld [vmem:[%s1006 + $0x141] sm:$0xff]
        %v1067 = vld [vmem:[%s1006 + $0x151] sm:$0xff]
        %v1068 = vld [vmem:[%s1006 + $0x159] sm:$0xff]
        %v1069 = vld [vmem:[%s1006 + $0x169] sm:$0xff]
        %v1070 = vld [vmem:[%s1006 + $0x171] sm:$0xff]
        %v1071 = vld [vmem:[%s1006 + $0x2] sm:$0xff]
        %v1072 = vld [vmem:[%s1006 + $0xa] sm:$0xff]
        %v1073 = vld [vmem:[%s1006 + $0x1a] sm:$0xff]
        %v1074 = vld [vmem:[%s1006 + $0x22] sm:$0xff]
        %v1075 = vld [vmem:[%s1006 + $0x32] sm:$0xff]
        %v1076 = vld [vmem:[%s1006 + $0x3a] sm:$0xff]
        %v1077 = vld [vmem:[%s1006 + $0x4a] sm:$0xff]
        %v1078 = vld [vmem:[%s1006 + $0x52] sm:$0xff]
        %v1079 = vld [vmem:[%s1006 + $0x62] sm:$0xff]
        %v1080 = vld [vmem:[%s1006 + $0x6a] sm:$0xff]
        %v1081 = vld [vmem:[%s1006 + $0x7a] sm:$0xff]
        %v1082 = vld [vmem:[%s1006 + $0x82] sm:$0xff]
        %v1083 = vld [vmem:[%s1006 + $0x92] sm:$0xff]
        %v1084 = vld [vmem:[%s1006 + $0x9a] sm:$0xff]
        %v1085 = vld [vmem:[%s1006 + $0xaa] sm:$0xff]
        %v1086 = vld [vmem:[%s1006 + $0xb2] sm:$0xff]
        %v1087 = vld [vmem:[%s1006 + $0xc2] sm:$0xff]
        %v1088 = vld [vmem:[%s1006 + $0xca] sm:$0xff]
        %v1089 = vld [vmem:[%s1006 + $0xda] sm:$0xff]
        %v1090 = vld [vmem:[%s1006 + $0xe2] sm:$0xff]
        %v1091 = vld [vmem:[%s1006 + $0xf2] sm:$0xff]
        %v1092 = vld [vmem:[%s1006 + $0xfa] sm:$0xff]
        %v1093 = vld [vmem:[%s1006 + $0x10a] sm:$0xff]
        %v1094 = vld [vmem:[%s1006 + $0x112] sm:$0xff]
        %v1095 = vld [vmem:[%s1006 + $0x122] sm:$0xff]
        %v1096 = vld [vmem:[%s1006 + $0x12a] sm:$0xff]
        %v1097 = vld [vmem:[%s1006 + $0x13a] sm:$0xff]
        %v1098 = vld [vmem:[%s1006 + $0x142] sm:$0xff]
        %v1099 = vld [vmem:[%s1006 + $0x152] sm:$0xff]
        %v1100 = vld [vmem:[%s1006 + $0x15a] sm:$0xff]
        %v1101 = vld [vmem:[%s1006 + $0x16a] sm:$0xff]
        %v1102 = vld [vmem:[%s1006 + $0x172] sm:$0xff]
        %1135 = vrot.lane.b32.xlu0 %v846, 24
        %v1136 = vpop.permute.xlu0 %1135
        %1137 = vrot.lane.b32.xlu0 %v847, 24
        %v1138 = vpop.permute.xlu0 %1137
        %1139 = vrot.lane.b32.xlu0 %v848, 24
        %v1140 = vpop.permute.xlu0 %1139
        %1141 = vrot.lane.b32.xlu0 %v849, 24
        %v1142 = vpop.permute.xlu0 %1141
        %1143 = vrot.lane.b32.xlu0 %v850, 24
        %v1144 = vpop.permute.xlu0 %1143
        %1145 = vrot.lane.b32.xlu0 %v851, 24
        %v1146 = vpop.permute.xlu0 %1145
        %1147 = vrot.lane.b32.xlu0 %v852, 24
        %v1148 = vpop.permute.xlu0 %1147
        %1149 = vrot.lane.b32.xlu0 %v853, 24
        %v1150 = vpop.permute.xlu0 %1149
        %1151 = vrot.lane.b32.xlu0 %v854, 24
        %v1152 = vpop.permute.xlu0 %1151
        %1153 = vrot.lane.b32.xlu0 %v855, 24
        %v1154 = vpop.permute.xlu0 %1153
        %1155 = vrot.lane.b32.xlu0 %v856, 24
        %v1156 = vpop.permute.xlu0 %1155
        %1157 = vrot.lane.b32.xlu0 %v857, 24
        %v1158 = vpop.permute.xlu0 %1157
        %1159 = vrot.lane.b32.xlu0 %v858, 24
        %v1160 = vpop.permute.xlu0 %1159
        %1161 = vrot.lane.b32.xlu0 %v859, 24
        %v1162 = vpop.permute.xlu0 %1161
        %1163 = vrot.lane.b32.xlu0 %v860, 24
        %v1164 = vpop.permute.xlu0 %1163
        %1165 = vrot.lane.b32.xlu0 %v861, 24
        %v1166 = vpop.permute.xlu0 %1165
        %1167 = vrot.lane.b32.xlu0 %v862, 24
        %v1168 = vpop.permute.xlu0 %1167
        %1169 = vrot.lane.b32.xlu0 %v863, 24
        %v1170 = vpop.permute.xlu0 %1169
        %1171 = vrot.lane.b32.xlu0 %v864, 24
        %v1172 = vpop.permute.xlu0 %1171
        %1173 = vrot.lane.b32.xlu0 %v865, 24
        %v1174 = vpop.permute.xlu0 %1173
        %1175 = vrot.lane.b32.xlu0 %v866, 24
        %v1176 = vpop.permute.xlu0 %1175
        %1177 = vrot.lane.b32.xlu0 %v867, 24
        %v1178 = vpop.permute.xlu0 %1177
        %1179 = vrot.lane.b32.xlu0 %v868, 24
        %v1180 = vpop.permute.xlu0 %1179
        %1181 = vrot.lane.b32.xlu0 %v869, 24
        %v1182 = vpop.permute.xlu0 %1181
        %1183 = vrot.lane.b32.xlu0 %v870, 24
        %v1184 = vpop.permute.xlu0 %1183
        %1185 = vrot.lane.b32.xlu0 %v871, 24
        %v1186 = vpop.permute.xlu0 %1185
        %1187 = vrot.lane.b32.xlu0 %v872, 24
        %v1188 = vpop.permute.xlu0 %1187
        %1189 = vrot.lane.b32.xlu0 %v873, 24
        %v1190 = vpop.permute.xlu0 %1189
        %1191 = vrot.lane.b32.xlu0 %v874, 24
        %v1192 = vpop.permute.xlu0 %1191
        %1193 = vrot.lane.b32.xlu0 %v875, 24
        %v1194 = vpop.permute.xlu0 %1193
        %1195 = vrot.lane.b32.xlu0 %v876, 24
        %v1196 = vpop.permute.xlu0 %1195
        %1197 = vrot.lane.b32.xlu0 %v877, 24
        %v1198 = vpop.permute.xlu0 %1197
        %1263 = vrot.lane.b32.xlu0 %v878, 48
        %v1264 = vpop.permute.xlu0 %1263
        %1265 = vrot.lane.b32.xlu0 %v879, 48
        %v1266 = vpop.permute.xlu0 %1265
        %1267 = vrot.lane.b32.xlu0 %v880, 48
        %v1268 = vpop.permute.xlu0 %1267
        %1269 = vrot.lane.b32.xlu0 %v881, 48
        %v1270 = vpop.permute.xlu0 %1269
        %1271 = vrot.lane.b32.xlu0 %v882, 48
        %v1272 = vpop.permute.xlu0 %1271
        %1273 = vrot.lane.b32.xlu0 %v883, 48
        %v1274 = vpop.permute.xlu0 %1273
        %1275 = vrot.lane.b32.xlu0 %v884, 48
        %v1276 = vpop.permute.xlu0 %1275
        %1277 = vrot.lane.b32.xlu0 %v885, 48
        %v1278 = vpop.permute.xlu0 %1277
        %1279 = vrot.lane.b32.xlu0 %v886, 48
        %v1280 = vpop.permute.xlu0 %1279
        %1281 = vrot.lane.b32.xlu0 %v887, 48
        %v1282 = vpop.permute.xlu0 %1281
        %1283 = vrot.lane.b32.xlu0 %v888, 48
        %v1284 = vpop.permute.xlu0 %1283
        %1285 = vrot.lane.b32.xlu0 %v889, 48
        %v1286 = vpop.permute.xlu0 %1285
        %1287 = vrot.lane.b32.xlu0 %v890, 48
        %v1288 = vpop.permute.xlu0 %1287
        %1289 = vrot.lane.b32.xlu0 %v891, 48
        %v1290 = vpop.permute.xlu0 %1289
        %1291 = vrot.lane.b32.xlu0 %v892, 48
        %v1292 = vpop.permute.xlu0 %1291
        %1293 = vrot.lane.b32.xlu0 %v893, 48
        %v1294 = vpop.permute.xlu0 %1293
        %1295 = vrot.lane.b32.xlu0 %v894, 48
        %v1296 = vpop.permute.xlu0 %1295
        %1297 = vrot.lane.b32.xlu0 %v895, 48
        %v1298 = vpop.permute.xlu0 %1297
        %1299 = vrot.lane.b32.xlu0 %v896, 48
        %v1300 = vpop.permute.xlu0 %1299
        %1301 = vrot.lane.b32.xlu0 %v897, 48
        %v1302 = vpop.permute.xlu0 %1301
        %1303 = vrot.lane.b32.xlu0 %v898, 48
        %v1304 = vpop.permute.xlu0 %1303
        %1305 = vrot.lane.b32.xlu0 %v899, 48
        %v1306 = vpop.permute.xlu0 %1305
        %1307 = vrot.lane.b32.xlu0 %v900, 48
        %v1308 = vpop.permute.xlu0 %1307
        %1309 = vrot.lane.b32.xlu0 %v901, 48
        %v1310 = vpop.permute.xlu0 %1309
        %1311 = vrot.lane.b32.xlu0 %v902, 48
        %v1312 = vpop.permute.xlu0 %1311
        %1313 = vrot.lane.b32.xlu0 %v903, 48
        %v1314 = vpop.permute.xlu0 %1313
        %1315 = vrot.lane.b32.xlu0 %v904, 48
        %v1316 = vpop.permute.xlu0 %1315
        %1317 = vrot.lane.b32.xlu0 %v905, 48
        %v1318 = vpop.permute.xlu0 %1317
        %1319 = vrot.lane.b32.xlu0 %v906, 48
        %v1320 = vpop.permute.xlu0 %1319
        %1321 = vrot.lane.b32.xlu0 %v907, 48
        %v1322 = vpop.permute.xlu0 %1321
        %1323 = vrot.lane.b32.xlu0 %v908, 48
        %v1324 = vpop.permute.xlu0 %1323
        %1325 = vrot.lane.b32.xlu0 %v909, 48
        %v1326 = vpop.permute.xlu0 %1325
        %1391 = vrot.lane.b32.xlu0 %v910, 72
        %v1392 = vpop.permute.xlu0 %1391
        %1393 = vrot.lane.b32.xlu0 %v911, 72
        %v1394 = vpop.permute.xlu0 %1393
        %1395 = vrot.lane.b32.xlu0 %v912, 72
        %v1396 = vpop.permute.xlu0 %1395
        %1397 = vrot.lane.b32.xlu0 %v913, 72
        %v1398 = vpop.permute.xlu0 %1397
        %1399 = vrot.lane.b32.xlu0 %v914, 72
        %v1400 = vpop.permute.xlu0 %1399
        %1401 = vrot.lane.b32.xlu0 %v915, 72
        %v1402 = vpop.permute.xlu0 %1401
        %1403 = vrot.lane.b32.xlu0 %v916, 72
        %v1404 = vpop.permute.xlu0 %1403
        %1405 = vrot.lane.b32.xlu0 %v917, 72
        %v1406 = vpop.permute.xlu0 %1405
        %1407 = vrot.lane.b32.xlu0 %v918, 72
        %v1408 = vpop.permute.xlu0 %1407
        %1409 = vrot.lane.b32.xlu0 %v919, 72
        %v1410 = vpop.permute.xlu0 %1409
        %1411 = vrot.lane.b32.xlu0 %v920, 72
        %v1412 = vpop.permute.xlu0 %1411
        %1413 = vrot.lane.b32.xlu0 %v921, 72
        %v1414 = vpop.permute.xlu0 %1413
        %1415 = vrot.lane.b32.xlu0 %v922, 72
        %v1416 = vpop.permute.xlu0 %1415
        %1417 = vrot.lane.b32.xlu0 %v923, 72
        %v1418 = vpop.permute.xlu0 %1417
        %1419 = vrot.lane.b32.xlu0 %v924, 72
        %v1420 = vpop.permute.xlu0 %1419
        %1421 = vrot.lane.b32.xlu0 %v925, 72
        %v1422 = vpop.permute.xlu0 %1421
        %1423 = vrot.lane.b32.xlu0 %v926, 72
        %v1424 = vpop.permute.xlu0 %1423
        %1425 = vrot.lane.b32.xlu0 %v927, 72
        %v1426 = vpop.permute.xlu0 %1425
        %1427 = vrot.lane.b32.xlu0 %v928, 72
        %v1428 = vpop.permute.xlu0 %1427
        %1429 = vrot.lane.b32.xlu0 %v929, 72
        %v1430 = vpop.permute.xlu0 %1429
        %1431 = vrot.lane.b32.xlu0 %v930, 72
        %v1432 = vpop.permute.xlu0 %1431
        %1433 = vrot.lane.b32.xlu0 %v931, 72
        %v1434 = vpop.permute.xlu0 %1433
        %1435 = vrot.lane.b32.xlu0 %v932, 72
        %v1436 = vpop.permute.xlu0 %1435
        %1437 = vrot.lane.b32.xlu0 %v933, 72
        %v1438 = vpop.permute.xlu0 %1437
        %1439 = vrot.lane.b32.xlu0 %v934, 72
        %v1440 = vpop.permute.xlu0 %1439
        %1441 = vrot.lane.b32.xlu0 %v935, 72
        %v1442 = vpop.permute.xlu0 %1441
        %1443 = vrot.lane.b32.xlu0 %v936, 72
        %v1444 = vpop.permute.xlu0 %1443
        %1445 = vrot.lane.b32.xlu0 %v937, 72
        %v1446 = vpop.permute.xlu0 %1445
        %1447 = vrot.lane.b32.xlu0 %v938, 72
        %v1448 = vpop.permute.xlu0 %1447
        %1449 = vrot.lane.b32.xlu0 %v939, 72
        %v1450 = vpop.permute.xlu0 %1449
        %1451 = vrot.lane.b32.xlu0 %v940, 72
        %v1452 = vpop.permute.xlu0 %1451
        %1453 = vrot.lane.b32.xlu0 %v941, 72
        %v1454 = vpop.permute.xlu0 %1453
        %1519 = vrot.lane.b32.xlu0 %v942, 96
        %v1520 = vpop.permute.xlu0 %1519
        %1521 = vrot.lane.b32.xlu0 %v943, 96
        %v1522 = vpop.permute.xlu0 %1521
        %1523 = vrot.lane.b32.xlu0 %v944, 96
        %v1524 = vpop.permute.xlu0 %1523
        %1525 = vrot.lane.b32.xlu0 %v945, 96
        %v1526 = vpop.permute.xlu0 %1525
        %1527 = vrot.lane.b32.xlu0 %v946, 96
        %v1528 = vpop.permute.xlu0 %1527
        %1529 = vrot.lane.b32.xlu0 %v947, 96
        %v1530 = vpop.permute.xlu0 %1529
        %1531 = vrot.lane.b32.xlu0 %v948, 96
        %v1532 = vpop.permute.xlu0 %1531
        %1533 = vrot.lane.b32.xlu0 %v949, 96
        %v1534 = vpop.permute.xlu0 %1533
        %1535 = vrot.lane.b32.xlu0 %v950, 96
        %v1536 = vpop.permute.xlu0 %1535
        %1537 = vrot.lane.b32.xlu0 %v951, 96
        %v1538 = vpop.permute.xlu0 %1537
        %1539 = vrot.lane.b32.xlu0 %v952, 96
        %v1540 = vpop.permute.xlu0 %1539
        %1541 = vrot.lane.b32.xlu0 %v953, 96
        %v1542 = vpop.permute.xlu0 %1541
        %1543 = vrot.lane.b32.xlu0 %v954, 96
        %v1544 = vpop.permute.xlu0 %1543
        %1545 = vrot.lane.b32.xlu0 %v955, 96
        %v1546 = vpop.permute.xlu0 %1545
        %1547 = vrot.lane.b32.xlu0 %v956, 96
        %v1548 = vpop.permute.xlu0 %1547
        %1549 = vrot.lane.b32.xlu0 %v957, 96
        %v1550 = vpop.permute.xlu0 %1549
        %1551 = vrot.lane.b32.xlu0 %v958, 96
        %v1552 = vpop.permute.xlu0 %1551
        %1553 = vrot.lane.b32.xlu0 %v959, 96
        %v1554 = vpop.permute.xlu0 %1553
        %1555 = vrot.lane.b32.xlu0 %v960, 96
        %v1556 = vpop.permute.xlu0 %1555
        %1557 = vrot.lane.b32.xlu0 %v961, 96
        %v1558 = vpop.permute.xlu0 %1557
        %1559 = vrot.lane.b32.xlu0 %v962, 96
        %v1560 = vpop.permute.xlu0 %1559
        %1561 = vrot.lane.b32.xlu0 %v963, 96
        %v1562 = vpop.permute.xlu0 %1561
        %1563 = vrot.lane.b32.xlu0 %v964, 96
        %v1564 = vpop.permute.xlu0 %1563
        %1565 = vrot.lane.b32.xlu0 %v965, 96
        %v1566 = vpop.permute.xlu0 %1565
        %1567 = vrot.lane.b32.xlu0 %v966, 96
        %v1568 = vpop.permute.xlu0 %1567
        %1569 = vrot.lane.b32.xlu0 %v967, 96
        %v1570 = vpop.permute.xlu0 %1569
        %1571 = vrot.lane.b32.xlu0 %v968, 96
        %v1572 = vpop.permute.xlu0 %1571
        %1573 = vrot.lane.b32.xlu0 %v969, 96
        %v1574 = vpop.permute.xlu0 %1573
        %1575 = vrot.lane.b32.xlu0 %v970, 96
        %v1576 = vpop.permute.xlu0 %1575
        %1577 = vrot.lane.b32.xlu0 %v971, 96
        %v1578 = vpop.permute.xlu0 %1577
        %1579 = vrot.lane.b32.xlu0 %v972, 96
        %v1580 = vpop.permute.xlu0 %1579
        %1581 = vrot.lane.b32.xlu0 %v973, 96
        %v1582 = vpop.permute.xlu0 %1581
        %1647 = vrot.lane.b32.xlu0 %v974, 120
        %v1648 = vpop.permute.xlu0 %1647
        %1649 = vrot.lane.b32.xlu0 %v975, 120
        %v1650 = vpop.permute.xlu0 %1649
        %1651 = vrot.lane.b32.xlu0 %v976, 120
        %v1652 = vpop.permute.xlu0 %1651
        %1653 = vrot.lane.b32.xlu0 %v977, 120
        %v1654 = vpop.permute.xlu0 %1653
        %1655 = vrot.lane.b32.xlu0 %v978, 120
        %v1656 = vpop.permute.xlu0 %1655
        %1657 = vrot.lane.b32.xlu0 %v979, 120
        %v1658 = vpop.permute.xlu0 %1657
        %1659 = vrot.lane.b32.xlu0 %v980, 120
        %v1660 = vpop.permute.xlu0 %1659
        %1661 = vrot.lane.b32.xlu0 %v981, 120
        %v1662 = vpop.permute.xlu0 %1661
        %1663 = vrot.lane.b32.xlu0 %v982, 120
        %v1664 = vpop.permute.xlu0 %1663
        %1665 = vrot.lane.b32.xlu0 %v983, 120
        %v1666 = vpop.permute.xlu0 %1665
        %1667 = vrot.lane.b32.xlu0 %v984, 120
        %v1668 = vpop.permute.xlu0 %1667
        %1669 = vrot.lane.b32.xlu0 %v985, 120
        %v1670 = vpop.permute.xlu0 %1669
        %1671 = vrot.lane.b32.xlu0 %v986, 120
        %v1672 = vpop.permute.xlu0 %1671
        %1673 = vrot.lane.b32.xlu0 %v987, 120
        %v1674 = vpop.permute.xlu0 %1673
        %1675 = vrot.lane.b32.xlu0 %v988, 120
        %v1676 = vpop.permute.xlu0 %1675
        %1677 = vrot.lane.b32.xlu0 %v989, 120
        %v1678 = vpop.permute.xlu0 %1677
        %1679 = vrot.lane.b32.xlu0 %v990, 120
        %v1680 = vpop.permute.xlu0 %1679
        %1681 = vrot.lane.b32.xlu0 %v991, 120
        %v1682 = vpop.permute.xlu0 %1681
        %1683 = vrot.lane.b32.xlu0 %v992, 120
        %v1684 = vpop.permute.xlu0 %1683
        %1685 = vrot.lane.b32.xlu0 %v993, 120
        %v1686 = vpop.permute.xlu0 %1685
        %1687 = vrot.lane.b32.xlu0 %v994, 120
        %v1688 = vpop.permute.xlu0 %1687
        %1689 = vrot.lane.b32.xlu0 %v995, 120
        %v1690 = vpop.permute.xlu0 %1689
        %1691 = vrot.lane.b32.xlu0 %v996, 120
        %v1692 = vpop.permute.xlu0 %1691
        %1693 = vrot.lane.b32.xlu0 %v997, 120
        %v1694 = vpop.permute.xlu0 %1693
        %1695 = vrot.lane.b32.xlu0 %v998, 120
        %v1696 = vpop.permute.xlu0 %1695
        %1697 = vrot.lane.b32.xlu0 %v999, 120
        %v1698 = vpop.permute.xlu0 %1697
        %1699 = vrot.lane.b32.xlu0 %v1000, 120
        %v1700 = vpop.permute.xlu0 %1699
        %1701 = vrot.lane.b32.xlu0 %v1001, 120
        %v1702 = vpop.permute.xlu0 %1701
        %1703 = vrot.lane.b32.xlu0 %v1002, 120
        %v1704 = vpop.permute.xlu0 %1703
        %1705 = vrot.lane.b32.xlu0 %v1003, 120
        %v1706 = vpop.permute.xlu0 %1705
        %1707 = vrot.lane.b32.xlu0 %v1004, 120
        %v1708 = vpop.permute.xlu0 %1707
        %1709 = vrot.lane.b32.xlu0 %v1005, 120
        %v1710 = vpop.permute.xlu0 %1709
        %1775 = vrot.lane.b32.xlu0 %v1007, 16
        %v1776 = vpop.permute.xlu0 %1775
        %1777 = vrot.lane.b32.xlu0 %v1008, 16
        %v1778 = vpop.permute.xlu0 %1777
        %1779 = vrot.lane.b32.xlu0 %v1009, 16
        %v1780 = vpop.permute.xlu0 %1779
        %1781 = vrot.lane.b32.xlu0 %v1010, 16
        %v1782 = vpop.permute.xlu0 %1781
        %1783 = vrot.lane.b32.xlu0 %v1011, 16
        %v1784 = vpop.permute.xlu0 %1783
        %1785 = vrot.lane.b32.xlu0 %v1012, 16
        %v1786 = vpop.permute.xlu0 %1785
        %1787 = vrot.lane.b32.xlu0 %v1013, 16
        %v1788 = vpop.permute.xlu0 %1787
        %1789 = vrot.lane.b32.xlu0 %v1014, 16
        %v1790 = vpop.permute.xlu0 %1789
        %1791 = vrot.lane.b32.xlu0 %v1015, 16
        %v1792 = vpop.permute.xlu0 %1791
        %1793 = vrot.lane.b32.xlu0 %v1016, 16
        %v1794 = vpop.permute.xlu0 %1793
        %1795 = vrot.lane.b32.xlu0 %v1017, 16
        %v1796 = vpop.permute.xlu0 %1795
        %1797 = vrot.lane.b32.xlu0 %v1018, 16
        %v1798 = vpop.permute.xlu0 %1797
        %1799 = vrot.lane.b32.xlu0 %v1019, 16
        %v1800 = vpop.permute.xlu0 %1799
        %1801 = vrot.lane.b32.xlu0 %v1020, 16
        %v1802 = vpop.permute.xlu0 %1801
        %1803 = vrot.lane.b32.xlu0 %v1021, 16
        %v1804 = vpop.permute.xlu0 %1803
        %1805 = vrot.lane.b32.xlu0 %v1022, 16
        %v1806 = vpop.permute.xlu0 %1805
        %1807 = vrot.lane.b32.xlu0 %v1023, 16
        %v1808 = vpop.permute.xlu0 %1807
        %1809 = vrot.lane.b32.xlu0 %v1024, 16
        %v1810 = vpop.permute.xlu0 %1809
        %1811 = vrot.lane.b32.xlu0 %v1025, 16
        %v1812 = vpop.permute.xlu0 %1811
        %1813 = vrot.lane.b32.xlu0 %v1026, 16
        %v1814 = vpop.permute.xlu0 %1813
        %1815 = vrot.lane.b32.xlu0 %v1027, 16
        %v1816 = vpop.permute.xlu0 %1815
        %1817 = vrot.lane.b32.xlu0 %v1028, 16
        %v1818 = vpop.permute.xlu0 %1817
        %1819 = vrot.lane.b32.xlu0 %v1029, 16
        %v1820 = vpop.permute.xlu0 %1819
        %1821 = vrot.lane.b32.xlu0 %v1030, 16
        %v1822 = vpop.permute.xlu0 %1821
        %1823 = vrot.lane.b32.xlu0 %v1031, 16
        %v1824 = vpop.permute.xlu0 %1823
        %1825 = vrot.lane.b32.xlu0 %v1032, 16
        %v1826 = vpop.permute.xlu0 %1825
        %1827 = vrot.lane.b32.xlu0 %v1033, 16
        %v1828 = vpop.permute.xlu0 %1827
        %1829 = vrot.lane.b32.xlu0 %v1034, 16
        %v1830 = vpop.permute.xlu0 %1829
        %1831 = vrot.lane.b32.xlu0 %v1035, 16
        %v1832 = vpop.permute.xlu0 %1831
        %1833 = vrot.lane.b32.xlu0 %v1036, 16
        %v1834 = vpop.permute.xlu0 %1833
        %1835 = vrot.lane.b32.xlu0 %v1037, 16
        %v1836 = vpop.permute.xlu0 %1835
        %1837 = vrot.lane.b32.xlu0 %v1038, 16
        %v1838 = vpop.permute.xlu0 %1837
        %1903 = vrot.lane.b32.xlu0 %v1039, 40
        %v1904 = vpop.permute.xlu0 %1903
        %1905 = vrot.lane.b32.xlu0 %v1040, 40
        %v1906 = vpop.permute.xlu0 %1905
        %1907 = vrot.lane.b32.xlu0 %v1041, 40
        %v1908 = vpop.permute.xlu0 %1907
        %1909 = vrot.lane.b32.xlu0 %v1042, 40
        %v1910 = vpop.permute.xlu0 %1909
        %1911 = vrot.lane.b32.xlu0 %v1043, 40
        %v1912 = vpop.permute.xlu0 %1911
        %1913 = vrot.lane.b32.xlu0 %v1044, 40
        %v1914 = vpop.permute.xlu0 %1913
        %1915 = vrot.lane.b32.xlu0 %v1045, 40
        %v1916 = vpop.permute.xlu0 %1915
        %1917 = vrot.lane.b32.xlu0 %v1046, 40
        %v1918 = vpop.permute.xlu0 %1917
        %1919 = vrot.lane.b32.xlu0 %v1047, 40
        %v1920 = vpop.permute.xlu0 %1919
        %1921 = vrot.lane.b32.xlu0 %v1048, 40
        %v1922 = vpop.permute.xlu0 %1921
        %1923 = vrot.lane.b32.xlu0 %v1049, 40
        %v1924 = vpop.permute.xlu0 %1923
        %1925 = vrot.lane.b32.xlu0 %v1050, 40
        %v1926 = vpop.permute.xlu0 %1925
        %1927 = vrot.lane.b32.xlu0 %v1051, 40
        %v1928 = vpop.permute.xlu0 %1927
        %1929 = vrot.lane.b32.xlu0 %v1052, 40
        %v1930 = vpop.permute.xlu0 %1929
        %1931 = vrot.lane.b32.xlu0 %v1053, 40
        %v1932 = vpop.permute.xlu0 %1931
        %1933 = vrot.lane.b32.xlu0 %v1054, 40
        %v1934 = vpop.permute.xlu0 %1933
        %1935 = vrot.lane.b32.xlu0 %v1055, 40
        %v1936 = vpop.permute.xlu0 %1935
        %1937 = vrot.lane.b32.xlu0 %v1056, 40
        %v1938 = vpop.permute.xlu0 %1937
        %1939 = vrot.lane.b32.xlu0 %v1057, 40
        %v1940 = vpop.permute.xlu0 %1939
        %1941 = vrot.lane.b32.xlu0 %v1058, 40
        %v1942 = vpop.permute.xlu0 %1941
        %1943 = vrot.lane.b32.xlu0 %v1059, 40
        %v1944 = vpop.permute.xlu0 %1943
        %1945 = vrot.lane.b32.xlu0 %v1060, 40
        %v1946 = vpop.permute.xlu0 %1945
        %1947 = vrot.lane.b32.xlu0 %v1061, 40
        %v1948 = vpop.permute.xlu0 %1947
        %1949 = vrot.lane.b32.xlu0 %v1062, 40
        %v1950 = vpop.permute.xlu0 %1949
        %1951 = vrot.lane.b32.xlu0 %v1063, 40
        %v1952 = vpop.permute.xlu0 %1951
        %1953 = vrot.lane.b32.xlu0 %v1064, 40
        %v1954 = vpop.permute.xlu0 %1953
        %1955 = vrot.lane.b32.xlu0 %v1065, 40
        %v1956 = vpop.permute.xlu0 %1955
        %1957 = vrot.lane.b32.xlu0 %v1066, 40
        %v1958 = vpop.permute.xlu0 %1957
        %1959 = vrot.lane.b32.xlu0 %v1067, 40
        %v1960 = vpop.permute.xlu0 %1959
        %1961 = vrot.lane.b32.xlu0 %v1068, 40
        %v1962 = vpop.permute.xlu0 %1961
        %1963 = vrot.lane.b32.xlu0 %v1069, 40
        %v1964 = vpop.permute.xlu0 %1963
        %1965 = vrot.lane.b32.xlu0 %v1070, 40
        %v1966 = vpop.permute.xlu0 %1965
        %2031 = vrot.lane.b32.xlu0 %v1071, 64
        %v2032 = vpop.permute.xlu0 %2031
        %2033 = vrot.lane.b32.xlu0 %v1072, 64
        %v2034 = vpop.permute.xlu0 %2033
        %2035 = vrot.lane.b32.xlu0 %v1073, 64
        %v2036 = vpop.permute.xlu0 %2035
        %2037 = vrot.lane.b32.xlu0 %v1074, 64
        %v2038 = vpop.permute.xlu0 %2037
        %2039 = vrot.lane.b32.xlu0 %v1075, 64
        %v2040 = vpop.permute.xlu0 %2039
        %2041 = vrot.lane.b32.xlu0 %v1076, 64
        %v2042 = vpop.permute.xlu0 %2041
        %2043 = vrot.lane.b32.xlu0 %v1077, 64
        %v2044 = vpop.permute.xlu0 %2043
        %2045 = vrot.lane.b32.xlu0 %v1078, 64
        %v2046 = vpop.permute.xlu0 %2045
        %2047 = vrot.lane.b32.xlu0 %v1079, 64
        %v2048 = vpop.permute.xlu0 %2047
        %2049 = vrot.lane.b32.xlu0 %v1080, 64
        %v2050 = vpop.permute.xlu0 %2049
        %2051 = vrot.lane.b32.xlu0 %v1081, 64
        %v2052 = vpop.permute.xlu0 %2051
        %2053 = vrot.lane.b32.xlu0 %v1082, 64
        %v2054 = vpop.permute.xlu0 %2053
        %2055 = vrot.lane.b32.xlu0 %v1083, 64
        %v2056 = vpop.permute.xlu0 %2055
        %2057 = vrot.lane.b32.xlu0 %v1084, 64
        %v2058 = vpop.permute.xlu0 %2057
        %2059 = vrot.lane.b32.xlu0 %v1085, 64
        %v2060 = vpop.permute.xlu0 %2059
        %2061 = vrot.lane.b32.xlu0 %v1086, 64
        %v2062 = vpop.permute.xlu0 %2061
        %2063 = vrot.lane.b32.xlu0 %v1087, 64
        %v2064 = vpop.permute.xlu0 %2063
        %2065 = vrot.lane.b32.xlu0 %v1088, 64
        %v2066 = vpop.permute.xlu0 %2065
        %2067 = vrot.lane.b32.xlu0 %v1089, 64
        %v2068 = vpop.permute.xlu0 %2067
        %2069 = vrot.lane.b32.xlu0 %v1090, 64
        %v2070 = vpop.permute.xlu0 %2069
        %2071 = vrot.lane.b32.xlu0 %v1091, 64
        %v2072 = vpop.permute.xlu0 %2071
        %2073 = vrot.lane.b32.xlu0 %v1092, 64
        %v2074 = vpop.permute.xlu0 %2073
        %2075 = vrot.lane.b32.xlu0 %v1093, 64
        %v2076 = vpop.permute.xlu0 %2075
        %2077 = vrot.lane.b32.xlu0 %v1094, 64
        %v2078 = vpop.permute.xlu0 %2077
        %2079 = vrot.lane.b32.xlu0 %v1095, 64
        %v2080 = vpop.permute.xlu0 %2079
        %2081 = vrot.lane.b32.xlu0 %v1096, 64
        %v2082 = vpop.permute.xlu0 %2081
        %2083 = vrot.lane.b32.xlu0 %v1097, 64
        %v2084 = vpop.permute.xlu0 %2083
        %2085 = vrot.lane.b32.xlu0 %v1098, 64
        %v2086 = vpop.permute.xlu0 %2085
        %2087 = vrot.lane.b32.xlu0 %v1099, 64
        %v2088 = vpop.permute.xlu0 %2087
        %2089 = vrot.lane.b32.xlu0 %v1100, 64
        %v2090 = vpop.permute.xlu0 %2089
        %2091 = vrot.lane.b32.xlu0 %v1101, 64
        %v2092 = vpop.permute.xlu0 %2091
        %2093 = vrot.lane.b32.xlu0 %v1102, 64
        %v2094 = vpop.permute.xlu0 %2093
        %v2127 = vsel %vm611, %v814, %v1136
        %v2128 = vsel %vm611, %v815, %v1138
        %v2129 = vsel %vm611, %v816, %v1140
        %v2130 = vsel %vm611, %v817, %v1142
        %v2131 = vsel %vm611, %v818, %v1144
        %v2132 = vsel %vm611, %v819, %v1146
        %v2133 = vsel %vm611, %v820, %v1148
        %v2134 = vsel %vm611, %v821, %v1150
        %v2135 = vsel %vm611, %v822, %v1152
        %v2136 = vsel %vm611, %v823, %v1154
        %v2137 = vsel %vm611, %v824, %v1156
        %v2138 = vsel %vm611, %v825, %v1158
        %v2139 = vsel %vm611, %v826, %v1160
        %v2140 = vsel %vm611, %v827, %v1162
        %v2141 = vsel %vm611, %v828, %v1164
        %v2142 = vsel %vm611, %v829, %v1166
        %v2143 = vsel %vm611, %v830, %v1168
        %v2144 = vsel %vm611, %v831, %v1170
        %v2145 = vsel %vm611, %v832, %v1172
        %v2146 = vsel %vm611, %v833, %v1174
        %v2147 = vsel %vm611, %v834, %v1176
        %v2148 = vsel %vm611, %v835, %v1178
        %v2149 = vsel %vm611, %v836, %v1180
        %v2150 = vsel %vm611, %v837, %v1182
        %v2151 = vsel %vm611, %v838, %v1184
        %v2152 = vsel %vm611, %v839, %v1186
        %v2153 = vsel %vm611, %v840, %v1188
        %v2154 = vsel %vm611, %v841, %v1190
        %v2155 = vsel %vm611, %v842, %v1192
        %v2156 = vsel %vm611, %v843, %v1194
        %v2157 = vsel %vm611, %v844, %v1196
        %v2158 = vsel %vm611, %v845, %v1198
        %vm2159 = vcmask 392192
        %v2160 = vsel %vm2159, %v2127, %v1264
        %v2161 = vsel %vm2159, %v2128, %v1266
        %v2162 = vsel %vm2159, %v2129, %v1268
        %v2163 = vsel %vm2159, %v2130, %v1270
        %v2164 = vsel %vm2159, %v2131, %v1272
        %v2165 = vsel %vm2159, %v2132, %v1274
        %v2166 = vsel %vm2159, %v2133, %v1276
        %v2167 = vsel %vm2159, %v2134, %v1278
        %v2168 = vsel %vm2159, %v2135, %v1280
        %v2169 = vsel %vm2159, %v2136, %v1282
        %v2170 = vsel %vm2159, %v2137, %v1284
        %v2171 = vsel %vm2159, %v2138, %v1286
        %v2172 = vsel %vm2159, %v2139, %v1288
        %v2173 = vsel %vm2159, %v2140, %v1290
        %v2174 = vsel %vm2159, %v2141, %v1292
        %v2175 = vsel %vm2159, %v2142, %v1294
        %v2176 = vsel %vm2159, %v2143, %v1296
        %v2177 = vsel %vm2159, %v2144, %v1298
        %v2178 = vsel %vm2159, %v2145, %v1300
        %v2179 = vsel %vm2159, %v2146, %v1302
        %v2180 = vsel %vm2159, %v2147, %v1304
        %v2181 = vsel %vm2159, %v2148, %v1306
        %v2182 = vsel %vm2159, %v2149, %v1308
        %v2183 = vsel %vm2159, %v2150, %v1310
        %v2184 = vsel %vm2159, %v2151, %v1312
        %v2185 = vsel %vm2159, %v2152, %v1314
        %v2186 = vsel %vm2159, %v2153, %v1316
        %v2187 = vsel %vm2159, %v2154, %v1318
        %v2188 = vsel %vm2159, %v2155, %v1320
        %v2189 = vsel %vm2159, %v2156, %v1322
        %v2190 = vsel %vm2159, %v2157, %v1324
        %v2191 = vsel %vm2159, %v2158, %v1326
        %vm2192 = vcmask 588800
        %v2193 = vsel %vm2192, %v2160, %v1392
        %v2194 = vsel %vm2192, %v2161, %v1394
        %v2195 = vsel %vm2192, %v2162, %v1396
        %v2196 = vsel %vm2192, %v2163, %v1398
        %v2197 = vsel %vm2192, %v2164, %v1400
        %v2198 = vsel %vm2192, %v2165, %v1402
        %v2199 = vsel %vm2192, %v2166, %v1404
        %v2200 = vsel %vm2192, %v2167, %v1406
        %v2201 = vsel %vm2192, %v2168, %v1408
        %v2202 = vsel %vm2192, %v2169, %v1410
        %v2203 = vsel %vm2192, %v2170, %v1412
        %v2204 = vsel %vm2192, %v2171, %v1414
        %v2205 = vsel %vm2192, %v2172, %v1416
        %v2206 = vsel %vm2192, %v2173, %v1418
        %v2207 = vsel %vm2192, %v2174, %v1420
        %v2208 = vsel %vm2192, %v2175, %v1422
        %v2209 = vsel %vm2192, %v2176, %v1424
        %v2210 = vsel %vm2192, %v2177, %v1426
        %v2211 = vsel %vm2192, %v2178, %v1428
        %v2212 = vsel %vm2192, %v2179, %v1430
        %v2213 = vsel %vm2192, %v2180, %v1432
        %v2214 = vsel %vm2192, %v2181, %v1434
        %v2215 = vsel %vm2192, %v2182, %v1436
        %v2216 = vsel %vm2192, %v2183, %v1438
        %v2217 = vsel %vm2192, %v2184, %v1440
        %v2218 = vsel %vm2192, %v2185, %v1442
        %v2219 = vsel %vm2192, %v2186, %v1444
        %v2220 = vsel %vm2192, %v2187, %v1446
        %v2221 = vsel %vm2192, %v2188, %v1448
        %v2222 = vsel %vm2192, %v2189, %v1450
        %v2223 = vsel %vm2192, %v2190, %v1452
        %v2224 = vsel %vm2192, %v2191, %v1454
        %vm2225 = vcmask 785408
        %v2226 = vsel %vm2225, %v2193, %v1520
        %v2227 = vsel %vm2225, %v2194, %v1522
        %v2228 = vsel %vm2225, %v2195, %v1524
        %v2229 = vsel %vm2225, %v2196, %v1526
        %v2230 = vsel %vm2225, %v2197, %v1528
        %v2231 = vsel %vm2225, %v2198, %v1530
        %v2232 = vsel %vm2225, %v2199, %v1532
        %v2233 = vsel %vm2225, %v2200, %v1534
        %v2234 = vsel %vm2225, %v2201, %v1536
        %v2235 = vsel %vm2225, %v2202, %v1538
        %v2236 = vsel %vm2225, %v2203, %v1540
        %v2237 = vsel %vm2225, %v2204, %v1542
        %v2238 = vsel %vm2225, %v2205, %v1544
        %v2239 = vsel %vm2225, %v2206, %v1546
        %v2240 = vsel %vm2225, %v2207, %v1548
        %v2241 = vsel %vm2225, %v2208, %v1550
        %v2242 = vsel %vm2225, %v2209, %v1552
        %v2243 = vsel %vm2225, %v2210, %v1554
        %v2244 = vsel %vm2225, %v2211, %v1556
        %v2245 = vsel %vm2225, %v2212, %v1558
        %v2246 = vsel %vm2225, %v2213, %v1560
        %v2247 = vsel %vm2225, %v2214, %v1562
        %v2248 = vsel %vm2225, %v2215, %v1564
        %v2249 = vsel %vm2225, %v2216, %v1566
        %v2250 = vsel %vm2225, %v2217, %v1568
        %v2251 = vsel %vm2225, %v2218, %v1570
        %v2252 = vsel %vm2225, %v2219, %v1572
        %v2253 = vsel %vm2225, %v2220, %v1574
        %v2254 = vsel %vm2225, %v2221, %v1576
        %v2255 = vsel %vm2225, %v2222, %v1578
        %v2256 = vsel %vm2225, %v2223, %v1580
        %v2257 = vsel %vm2225, %v2224, %v1582
        %vm2258 = vcmask 982016
        %v2259 = vsel %vm2258, %v2226, %v1648
        %v2260 = vsel %vm2258, %v2227, %v1650
        %v2261 = vsel %vm2258, %v2228, %v1652
        %v2262 = vsel %vm2258, %v2229, %v1654
        %v2263 = vsel %vm2258, %v2230, %v1656
        %v2264 = vsel %vm2258, %v2231, %v1658
        %v2265 = vsel %vm2258, %v2232, %v1660
        %v2266 = vsel %vm2258, %v2233, %v1662
        %v2267 = vsel %vm2258, %v2234, %v1664
        %v2268 = vsel %vm2258, %v2235, %v1666
        %v2269 = vsel %vm2258, %v2236, %v1668
        %v2270 = vsel %vm2258, %v2237, %v1670
        %v2271 = vsel %vm2258, %v2238, %v1672
        %v2272 = vsel %vm2258, %v2239, %v1674
        %v2273 = vsel %vm2258, %v2240, %v1676
        %v2274 = vsel %vm2258, %v2241, %v1678
        %v2275 = vsel %vm2258, %v2242, %v1680
        %v2276 = vsel %vm2258, %v2243, %v1682
        %v2277 = vsel %vm2258, %v2244, %v1684
        %v2278 = vsel %vm2258, %v2245, %v1686
        %v2279 = vsel %vm2258, %v2246, %v1688
        %v2280 = vsel %vm2258, %v2247, %v1690
        %v2281 = vsel %vm2258, %v2248, %v1692
        %v2282 = vsel %vm2258, %v2249, %v1694
        %v2283 = vsel %vm2258, %v2250, %v1696
        %v2284 = vsel %vm2258, %v2251, %v1698
        %v2285 = vsel %vm2258, %v2252, %v1700
        %v2286 = vsel %vm2258, %v2253, %v1702
        %v2287 = vsel %vm2258, %v2254, %v1704
        %v2288 = vsel %vm2258, %v2255, %v1706
        %v2289 = vsel %vm2258, %v2256, %v1708
        %v2290 = vsel %vm2258, %v2257, %v1710
        %vm2291 = vcmask 130048
        %v2292 = vsel %vm2291, %v1648, %v1776
        %v2293 = vsel %vm2291, %v1650, %v1778
        %v2294 = vsel %vm2291, %v1652, %v1780
        %v2295 = vsel %vm2291, %v1654, %v1782
        %v2296 = vsel %vm2291, %v1656, %v1784
        %v2297 = vsel %vm2291, %v1658, %v1786
        %v2298 = vsel %vm2291, %v1660, %v1788
        %v2299 = vsel %vm2291, %v1662, %v1790
        %v2300 = vsel %vm2291, %v1664, %v1792
        %v2301 = vsel %vm2291, %v1666, %v1794
        %v2302 = vsel %vm2291, %v1668, %v1796
        %v2303 = vsel %vm2291, %v1670, %v1798
        %v2304 = vsel %vm2291, %v1672, %v1800
        %v2305 = vsel %vm2291, %v1674, %v1802
        %v2306 = vsel %vm2291, %v1676, %v1804
        %v2307 = vsel %vm2291, %v1678, %v1806
        %v2308 = vsel %vm2291, %v1680, %v1808
        %v2309 = vsel %vm2291, %v1682, %v1810
        %v2310 = vsel %vm2291, %v1684, %v1812
        %v2311 = vsel %vm2291, %v1686, %v1814
        %v2312 = vsel %vm2291, %v1688, %v1816
        %v2313 = vsel %vm2291, %v1690, %v1818
        %v2314 = vsel %vm2291, %v1692, %v1820
        %v2315 = vsel %vm2291, %v1694, %v1822
        %v2316 = vsel %vm2291, %v1696, %v1824
        %v2317 = vsel %vm2291, %v1698, %v1826
        %v2318 = vsel %vm2291, %v1700, %v1828
        %v2319 = vsel %vm2291, %v1702, %v1830
        %v2320 = vsel %vm2291, %v1704, %v1832
        %v2321 = vsel %vm2291, %v1706, %v1834
        %v2322 = vsel %vm2291, %v1708, %v1836
        %v2323 = vsel %vm2291, %v1710, %v1838
        %vm2324 = vcmask 326656
        %v2325 = vsel %vm2324, %v2292, %v1904
        %v2326 = vsel %vm2324, %v2293, %v1906
        %v2327 = vsel %vm2324, %v2294, %v1908
        %v2328 = vsel %vm2324, %v2295, %v1910
        %v2329 = vsel %vm2324, %v2296, %v1912
        %v2330 = vsel %vm2324, %v2297, %v1914
        %v2331 = vsel %vm2324, %v2298, %v1916
        %v2332 = vsel %vm2324, %v2299, %v1918
        %v2333 = vsel %vm2324, %v2300, %v1920
        %v2334 = vsel %vm2324, %v2301, %v1922
        %v2335 = vsel %vm2324, %v2302, %v1924
        %v2336 = vsel %vm2324, %v2303, %v1926
        %v2337 = vsel %vm2324, %v2304, %v1928
        %v2338 = vsel %vm2324, %v2305, %v1930
        %v2339 = vsel %vm2324, %v2306, %v1932
        %v2340 = vsel %vm2324, %v2307, %v1934
        %v2341 = vsel %vm2324, %v2308, %v1936
        %v2342 = vsel %vm2324, %v2309, %v1938
        %v2343 = vsel %vm2324, %v2310, %v1940
        %v2344 = vsel %vm2324, %v2311, %v1942
        %v2345 = vsel %vm2324, %v2312, %v1944
        %v2346 = vsel %vm2324, %v2313, %v1946
        %v2347 = vsel %vm2324, %v2314, %v1948
        %v2348 = vsel %vm2324, %v2315, %v1950
        %v2349 = vsel %vm2324, %v2316, %v1952
        %v2350 = vsel %vm2324, %v2317, %v1954
        %v2351 = vsel %vm2324, %v2318, %v1956
        %v2352 = vsel %vm2324, %v2319, %v1958
        %v2353 = vsel %vm2324, %v2320, %v1960
        %v2354 = vsel %vm2324, %v2321, %v1962
        %v2355 = vsel %vm2324, %v2322, %v1964
        %v2356 = vsel %vm2324, %v2323, %v1966
        %vm2357 = vcmask 523264
        %v2358 = vsel %vm2357, %v2325, %v2032
        %v2359 = vsel %vm2357, %v2326, %v2034
        %v2360 = vsel %vm2357, %v2327, %v2036
        %v2361 = vsel %vm2357, %v2328, %v2038
        %v2362 = vsel %vm2357, %v2329, %v2040
        %v2363 = vsel %vm2357, %v2330, %v2042
        %v2364 = vsel %vm2357, %v2331, %v2044
        %v2365 = vsel %vm2357, %v2332, %v2046
        %v2366 = vsel %vm2357, %v2333, %v2048
        %v2367 = vsel %vm2357, %v2334, %v2050
        %v2368 = vsel %vm2357, %v2335, %v2052
        %v2369 = vsel %vm2357, %v2336, %v2054
        %v2370 = vsel %vm2357, %v2337, %v2056
        %v2371 = vsel %vm2357, %v2338, %v2058
        %v2372 = vsel %vm2357, %v2339, %v2060
        %v2373 = vsel %vm2357, %v2340, %v2062
        %v2374 = vsel %vm2357, %v2341, %v2064
        %v2375 = vsel %vm2357, %v2342, %v2066
        %v2376 = vsel %vm2357, %v2343, %v2068
        %v2377 = vsel %vm2357, %v2344, %v2070
        %v2378 = vsel %vm2357, %v2345, %v2072
        %v2379 = vsel %vm2357, %v2346, %v2074
        %v2380 = vsel %vm2357, %v2347, %v2076
        %v2381 = vsel %vm2357, %v2348, %v2078
        %v2382 = vsel %vm2357, %v2349, %v2080
        %v2383 = vsel %vm2357, %v2350, %v2082
        %v2384 = vsel %vm2357, %v2351, %v2084
        %v2385 = vsel %vm2357, %v2352, %v2086
        %v2386 = vsel %vm2357, %v2353, %v2088
        %v2387 = vsel %vm2357, %v2354, %v2090
        %v2388 = vsel %vm2357, %v2355, %v2092
        %v2389 = vsel %vm2357, %v2356, %v2094
        %v2390 = vpack.c.bf16 %v2260, %v2259
        %v2391 = vpack.c.bf16 %v2359, %v2358
        %v2392 = vpack.c.bf16 %v2262, %v2261
        %v2393 = vpack.c.bf16 %v2361, %v2360
        %v2394 = vpack.c.bf16 %v2264, %v2263
        %v2395 = vpack.c.bf16 %v2363, %v2362
        %v2396 = vpack.c.bf16 %v2266, %v2265
        %v2397 = vpack.c.bf16 %v2365, %v2364
        %v2398 = vpack.c.bf16 %v2268, %v2267
        %v2399 = vpack.c.bf16 %v2367, %v2366
        %v2400 = vpack.c.bf16 %v2270, %v2269
        %v2401 = vpack.c.bf16 %v2369, %v2368
        %v2402 = vpack.c.bf16 %v2272, %v2271
        %v2403 = vpack.c.bf16 %v2371, %v2370
        %v2404 = vpack.c.bf16 %v2274, %v2273
        %v2405 = vpack.c.bf16 %v2373, %v2372
        %v2406 = vpack.c.bf16 %v2276, %v2275
        %v2407 = vpack.c.bf16 %v2375, %v2374
        %v2408 = vpack.c.bf16 %v2278, %v2277
        %v2409 = vpack.c.bf16 %v2377, %v2376
        %v2410 = vpack.c.bf16 %v2280, %v2279
        %v2411 = vpack.c.bf16 %v2379, %v2378
        %v2412 = vpack.c.bf16 %v2282, %v2281
        %v2413 = vpack.c.bf16 %v2381, %v2380
        %v2414 = vpack.c.bf16 %v2284, %v2283
        %v2415 = vpack.c.bf16 %v2383, %v2382
        %v2416 = vpack.c.bf16 %v2286, %v2285
        %v2417 = vpack.c.bf16 %v2385, %v2384
        %v2418 = vpack.c.bf16 %v2288, %v2287
        %v2419 = vpack.c.bf16 %v2387, %v2386
        %v2420 = vpack.c.bf16 %v2290, %v2289
        %v2421 = vpack.c.bf16 %v2389, %v2388
        %v2422 = vld [vmem:[%s3] sm:$0xf]
        %v2423 = vld [vmem:[%s3 + $0x4] sm:$0xf]
        %v2424 = vld [vmem:[%s3 + $0x8] sm:$0xf]
        %v2425 = vld [vmem:[%s3 + $0xc] sm:$0xf]
        %v2426 = vld [vmem:[%s3 + $0x10] sm:$0xf]
        %v2427 = vld [vmem:[%s3 + $0x14] sm:$0xf]
        %v2428 = vld [vmem:[%s3 + $0x18] sm:$0xf]
        %v2429 = vld [vmem:[%s3 + $0x1c] sm:$0xf]
        %v2430 = vld [vmem:[%s3 + $0x20] sm:$0xf]
        %v2431 = vld [vmem:[%s3 + $0x24] sm:$0xf]
        %v2432 = vld [vmem:[%s3 + $0x28] sm:$0xf]
        %v2433 = vld [vmem:[%s3 + $0x2c] sm:$0xf]
        %v2434 = vld [vmem:[%s3 + $0x30] sm:$0xf]
        %v2435 = vld [vmem:[%s3 + $0x34] sm:$0xf]
        %v2436 = vld [vmem:[%s3 + $0x38] sm:$0xf]
        %v2437 = vld [vmem:[%s3 + $0x3c] sm:$0xf]
        %v2438 = vld [vmem:[%s3 + $0x40] sm:$0xf]
        %v2439 = vld [vmem:[%s3 + $0x44] sm:$0xf]
        %v2440 = vld [vmem:[%s3 + $0x48] sm:$0xf]
        %v2441 = vld [vmem:[%s3 + $0x4c] sm:$0xf]
        %v2442 = vld [vmem:[%s3 + $0x50] sm:$0xf]
        %v2443 = vld [vmem:[%s3 + $0x54] sm:$0xf]
        %v2444 = vld [vmem:[%s3 + $0x58] sm:$0xf]
        %v2445 = vld [vmem:[%s3 + $0x5c] sm:$0xf]
        %v2446 = vld [vmem:[%s3 + $0x60] sm:$0xf]
        %v2447 = vld [vmem:[%s3 + $0x64] sm:$0xf]
        %v2448 = vld [vmem:[%s3 + $0x68] sm:$0xf]
        %v2449 = vld [vmem:[%s4] sm:$0x1]
        %v2451 = vlaneseq
        %v2452 = vshrl.u32 %v2451, 7
        %v2453 = vsub.s32 0, %v2452
        %v2454 = vrot.slane %v2449, %v2453
        %v2483 = vunpack.c.l.b16 %v2422
        %v2484 = vunpack.c.l.b16 %v2423
        %v2485 = vunpack.c.l.b16 %v2424
        %v2486 = vunpack.c.l.b16 %v2425
        %v2487 = vunpack.c.l.b16 %v2426
        %v2488 = vunpack.c.l.b16 %v2427
        %v2489 = vunpack.c.l.b16 %v2428
        %v2490 = vunpack.c.l.b16 %v2429
        %v2491 = vunpack.c.l.b16 %v2430
        %v2492 = vunpack.c.l.b16 %v2431
        %v2493 = vunpack.c.l.b16 %v2432
        %v2494 = vunpack.c.l.b16 %v2433
        %v2495 = vunpack.c.l.b16 %v2434
        %v2496 = vunpack.c.l.b16 %v2435
        %v2497 = vunpack.c.l.b16 %v2436
        %v2498 = vunpack.c.l.b16 %v2437
        %v2499 = vunpack.c.l.b16 %v2438
        %v2500 = vunpack.c.l.b16 %v2439
        %v2501 = vunpack.c.l.b16 %v2440
        %v2502 = vunpack.c.l.b16 %v2441
        %v2503 = vunpack.c.l.b16 %v2442
        %v2504 = vunpack.c.l.b16 %v2443
        %v2505 = vunpack.c.l.b16 %v2444
        %v2506 = vunpack.c.l.b16 %v2445
        %v2507 = vunpack.c.l.b16 %v2446
        %v2508 = vunpack.c.l.b16 %v2447
        %v2509 = vunpack.c.l.b16 %v2448
        %v2510 = vpack.c.b16 %v2484, %v2483
        %v2511 = vpack.c.b16 %v2486, %v2485
        %v2512 = vpack.c.b16 %v2488, %v2487
        %v2513 = vpack.c.b16 %v2490, %v2489
        %v2514 = vpack.c.b16 %v2492, %v2491
        %v2515 = vpack.c.b16 %v2494, %v2493
        %v2516 = vpack.c.b16 %v2496, %v2495
        %v2517 = vpack.c.b16 %v2498, %v2497
        %v2518 = vpack.c.b16 %v2500, %v2499
        %v2519 = vpack.c.b16 %v2502, %v2501
        %v2520 = vpack.c.b16 %v2504, %v2503
        %v2521 = vpack.c.b16 %v2506, %v2505
        %v2522 = vpack.c.b16 %v2508, %v2507
        %v2523 = vpack.c.b16 %v2509, %v2509
        %vm2537 = vcmask 719872
        %v2539 = vsel %vm2537, %v2391, 0
        %v2542 = vsel %vm2537, %v2393, 0
        %v2545 = vsel %vm2537, %v2395, 0
        %v2548 = vsel %vm2537, %v2397, 0
        %v2551 = vsel %vm2537, %v2399, 0
        %v2554 = vsel %vm2537, %v2401, 0
        %v2557 = vsel %vm2537, %v2403, 0
        %v2560 = vsel %vm2537, %v2405, 0
        %v2563 = vsel %vm2537, %v2407, 0
        %v2566 = vsel %vm2537, %v2409, 0
        %v2569 = vsel %vm2537, %v2411, 0
        %v2572 = vsel %vm2537, %v2413, 0
        %v2575 = vsel %vm2537, %v2415, 0
        %v2578 = vsel %vm2537, %v2417, 0
        %v2581 = vsel %vm2537, %v2419, 0
        %v2584 = vsel %vm2537, %v2421, 0
        %vm2586 = vcmask 1043456
        %v2588 = vsel %vm2586, %v2523, 0
        %2590 = vmatprep.subr.bf16.mxu0 0
        %2591 = vmatpush1.bf16.msra.mxu0 %v2517
        %2592 = vmatprep.subr.bf16.mxu0 0
        %2593 = vmatpush1.bf16.msra.mxu0 %v2516
        %2594 = vmatprep.subr.bf16.mxu0 0
        %2595 = vmatpush1.bf16.msra.mxu0 %v2515
        %2596 = vmatprep.subr.bf16.mxu0 0
        %2597 = vmatpush1.bf16.msra.mxu0 %v2514
        %2598 = vmatprep.subr.bf16.mxu0 0
        %2599 = vmatpush1.bf16.msra.mxu0 %v2513
        %2600 = vmatprep.subr.bf16.mxu0 0
        %2601 = vmatpush1.bf16.msra.mxu0 %v2512
        %2602 = vmatprep.subr.bf16.mxu0 0
        %2603 = vmatpush1.bf16.msra.mxu0 %v2511
        %2604 = vmatprep.subr.bf16.mxu0 0
        %2605 = vmatpush1.bf16.msra.mxu0 %v2510
        %2606 = vmatprep.subr.bf16.mxu0 0
        %2607 = vmatpush2.bf16.msra.mxu0 0
        %2608 = vmatprep.subr.bf16.mxu0 0
        %2609 = vmatpush2.bf16.msra.mxu0 0
        %2610 = vmatprep.subr.bf16.mxu0 0
        %2611 = vmatpush2.bf16.msra.mxu0 %v2588
        %2612 = vmatprep.subr.bf16.mxu0 0
        %2613 = vmatpush2.bf16.msra.mxu0 %v2522
        %2614 = vmatprep.subr.bf16.mxu0 0
        %2615 = vmatpush2.bf16.msra.mxu0 %v2521
        %2616 = vmatprep.subr.bf16.mxu0 0
        %2617 = vmatpush2.bf16.msra.mxu0 %v2520
        %2618 = vmatprep.subr.bf16.mxu0 0
        %2619 = vmatpush2.bf16.msra.mxu0 %v2519
        %2620 = vmatprep.subr.bf16.mxu0 0
        %2621 = vmatpush2.bf16.msra.mxu0 %v2518
        %2622 = vmatprep.mubr.bf16.mxu0 %v2539
        %2623 = vmatmul.mubr.bf16.gmra.mxu0 %v2390
        %v2624 = vpop.f32.mrf.mxu0
        %v2625 = vadd.f32 %v2454, %v2624
        %v2626 = vpop.f32.mrf.mxu0
        %v2627 = vpop.f32.mrf.mxu0
        %v2628 = vadd.f32 %v2454, %v2627
        %v2629 = vpop.f32.mrf.mxu0
        %2630 = vmatprep.mubr.bf16.mxu0 %v2542
        %2631 = vmatmul.mubr.bf16.gmra.mxu0 %v2392
        %v2632 = vpop.f32.mrf.mxu0
        %v2633 = vadd.f32 %v2454, %v2632
        %v2634 = vpop.f32.mrf.mxu0
        %v2635 = vpop.f32.mrf.mxu0
        %v2636 = vadd.f32 %v2454, %v2635
        %v2637 = vpop.f32.mrf.mxu0
        %2638 = vmatprep.mubr.bf16.mxu0 %v2545
        %2639 = vmatmul.mubr.bf16.gmra.mxu0 %v2394
        %v2640 = vpop.f32.mrf.mxu0
        %v2641 = vadd.f32 %v2454, %v2640
        %v2642 = vpop.f32.mrf.mxu0
        %v2643 = vpop.f32.mrf.mxu0
        %v2644 = vadd.f32 %v2454, %v2643
        %v2645 = vpop.f32.mrf.mxu0
        %2646 = vmatprep.mubr.bf16.mxu0 %v2548
        %2647 = vmatmul.mubr.bf16.gmra.mxu0 %v2396
        %v2648 = vpop.f32.mrf.mxu0
        %v2649 = vadd.f32 %v2454, %v2648
        %v2650 = vpop.f32.mrf.mxu0
        %v2651 = vpop.f32.mrf.mxu0
        %v2652 = vadd.f32 %v2454, %v2651
        %v2653 = vpop.f32.mrf.mxu0
        %2654 = vmatprep.mubr.bf16.mxu0 %v2551
        %2655 = vmatmul.mubr.bf16.gmra.mxu0 %v2398
        %v2656 = vpop.f32.mrf.mxu0
        %v2657 = vadd.f32 %v2454, %v2656
        %v2658 = vpop.f32.mrf.mxu0
        %v2659 = vpop.f32.mrf.mxu0
        %v2660 = vadd.f32 %v2454, %v2659
        %v2661 = vpop.f32.mrf.mxu0
        %2662 = vmatprep.mubr.bf16.mxu0 %v2554
        %2663 = vmatmul.mubr.bf16.gmra.mxu0 %v2400
        %v2664 = vpop.f32.mrf.mxu0
        %v2665 = vadd.f32 %v2454, %v2664
        %v2666 = vpop.f32.mrf.mxu0
        %v2667 = vpop.f32.mrf.mxu0
        %v2668 = vadd.f32 %v2454, %v2667
        %v2669 = vpop.f32.mrf.mxu0
        %2670 = vmatprep.mubr.bf16.mxu0 %v2557
        %2671 = vmatmul.mubr.bf16.gmra.mxu0 %v2402
        %v2672 = vpop.f32.mrf.mxu0
        %v2673 = vadd.f32 %v2454, %v2672
        %v2674 = vpop.f32.mrf.mxu0
        %v2675 = vpop.f32.mrf.mxu0
        %v2676 = vadd.f32 %v2454, %v2675
        %v2677 = vpop.f32.mrf.mxu0
        %2678 = vmatprep.mubr.bf16.mxu0 %v2560
        %2679 = vmatmul.mubr.bf16.gmra.mxu0 %v2404
        %v2680 = vpop.f32.mrf.mxu0
        %v2681 = vadd.f32 %v2454, %v2680
        %v2682 = vpop.f32.mrf.mxu0
        %v2683 = vpop.f32.mrf.mxu0
        %v2684 = vadd.f32 %v2454, %v2683
        %v2685 = vpop.f32.mrf.mxu0
        %2686 = vmatprep.mubr.bf16.mxu0 %v2563
        %2687 = vmatmul.mubr.bf16.gmra.mxu0 %v2406
        %v2688 = vpop.f32.mrf.mxu0
        %v2689 = vadd.f32 %v2454, %v2688
        %v2690 = vpop.f32.mrf.mxu0
        %v2691 = vpop.f32.mrf.mxu0
        %v2692 = vadd.f32 %v2454, %v2691
        %v2693 = vpop.f32.mrf.mxu0
        %2694 = vmatprep.mubr.bf16.mxu0 %v2566
        %2695 = vmatmul.mubr.bf16.gmra.mxu0 %v2408
        %v2696 = vpop.f32.mrf.mxu0
        %v2697 = vadd.f32 %v2454, %v2696
        %v2698 = vpop.f32.mrf.mxu0
        %v2699 = vpop.f32.mrf.mxu0
        %v2700 = vadd.f32 %v2454, %v2699
        %v2701 = vpop.f32.mrf.mxu0
        %2702 = vmatprep.mubr.bf16.mxu0 %v2569
        %2703 = vmatmul.mubr.bf16.gmra.mxu0 %v2410
        %v2704 = vpop.f32.mrf.mxu0
        %v2705 = vadd.f32 %v2454, %v2704
        %v2706 = vpop.f32.mrf.mxu0
        %v2707 = vpop.f32.mrf.mxu0
        %v2708 = vadd.f32 %v2454, %v2707
        %v2709 = vpop.f32.mrf.mxu0
        %2710 = vmatprep.mubr.bf16.mxu0 %v2572
        %2711 = vmatmul.mubr.bf16.gmra.mxu0 %v2412
        %v2712 = vpop.f32.mrf.mxu0
        %v2713 = vadd.f32 %v2454, %v2712
        %v2714 = vpop.f32.mrf.mxu0
        %v2715 = vpop.f32.mrf.mxu0
        %v2716 = vadd.f32 %v2454, %v2715
        %v2717 = vpop.f32.mrf.mxu0
        %2718 = vmatprep.mubr.bf16.mxu0 %v2575
        %2719 = vmatmul.mubr.bf16.gmra.mxu0 %v2414
        %v2720 = vpop.f32.mrf.mxu0
        %v2721 = vadd.f32 %v2454, %v2720
        %v2722 = vpop.f32.mrf.mxu0
        %v2723 = vpop.f32.mrf.mxu0
        %v2724 = vadd.f32 %v2454, %v2723
        %v2725 = vpop.f32.mrf.mxu0
        %2726 = vmatprep.mubr.bf16.mxu0 %v2578
        %2727 = vmatmul.mubr.bf16.gmra.mxu0 %v2416
        %v2728 = vpop.f32.mrf.mxu0
        %v2729 = vadd.f32 %v2454, %v2728
        %v2730 = vpop.f32.mrf.mxu0
        %v2731 = vpop.f32.mrf.mxu0
        %v2732 = vadd.f32 %v2454, %v2731
        %v2733 = vpop.f32.mrf.mxu0
        %2734 = vmatprep.mubr.bf16.mxu0 %v2581
        %2735 = vmatmul.mubr.bf16.gmra.mxu0 %v2418
        %v2736 = vpop.f32.mrf.mxu0
        %v2737 = vadd.f32 %v2454, %v2736
        %v2738 = vpop.f32.mrf.mxu0
        %v2739 = vpop.f32.mrf.mxu0
        %v2740 = vadd.f32 %v2454, %v2739
        %v2741 = vpop.f32.mrf.mxu0
        %2742 = vmatprep.mubr.bf16.mxu0 %v2584
        %2743 = vmatmul.mubr.bf16.gmra.mxu0 %v2420
        %v2744 = vpop.f32.mrf.mxu0
        %v2745 = vadd.f32 %v2454, %v2744
        %v2746 = vpop.f32.mrf.mxu0
        %v2747 = vpop.f32.mrf.mxu0
        %v2748 = vadd.f32 %v2454, %v2747
        %v2749 = vpop.f32.mrf.mxu0
        %2750 = vdwg.mxu0
        %v2751 = vmax.f32 %v2625, 0.0
        %v2752 = vmax.f32 %v2628, 0.0
        %v2753 = vmax.f32 %v2633, 0.0
        %v2754 = vmax.f32 %v2636, 0.0
        %v2755 = vmax.f32 %v2641, 0.0
        %v2756 = vmax.f32 %v2644, 0.0
        %v2757 = vmax.f32 %v2649, 0.0
        %v2758 = vmax.f32 %v2652, 0.0
        %v2759 = vmax.f32 %v2657, 0.0
        %v2760 = vmax.f32 %v2660, 0.0
        %v2761 = vmax.f32 %v2665, 0.0
        %v2762 = vmax.f32 %v2668, 0.0
        %v2763 = vmax.f32 %v2673, 0.0
        %v2764 = vmax.f32 %v2676, 0.0
        %v2765 = vmax.f32 %v2681, 0.0
        %v2766 = vmax.f32 %v2684, 0.0
        %v2767 = vmax.f32 %v2689, 0.0
        %v2768 = vmax.f32 %v2692, 0.0
        %v2769 = vmax.f32 %v2697, 0.0
        %v2770 = vmax.f32 %v2700, 0.0
        %v2771 = vmax.f32 %v2705, 0.0
        %v2772 = vmax.f32 %v2708, 0.0
        %v2773 = vmax.f32 %v2713, 0.0
        %v2774 = vmax.f32 %v2716, 0.0
        %v2775 = vmax.f32 %v2721, 0.0
        %v2776 = vmax.f32 %v2724, 0.0
        %v2777 = vmax.f32 %v2729, 0.0
        %v2778 = vmax.f32 %v2732, 0.0
        %v2779 = vmax.f32 %v2737, 0.0
        %v2780 = vmax.f32 %v2740, 0.0
        %v2781 = vmax.f32 %v2745, 0.0
        %v2782 = vmax.f32 %v2748, 0.0
        %2783 = vst.msk [vmem:[#allocation3] sm:$0xff] %vm369, -inf
        %2784 = vst.msk [vmem:[#allocation3 + $0x8] sm:$0xff] %vm369, -inf
        %vm2785 = vcmask 254976
        %2786 = vst.msk [vmem:[#allocation3 + $0x10] sm:$0x3] %vm2785, -inf
        %s2787 = scalar_lea.vmem [#allocation3], 408
        %2788 = vst.msk [vmem:[%s2787] sm:$0xff] %vm369, -inf
        %2789 = vst.msk [vmem:[%s2787 + $0x8] sm:$0xff] %vm369, -inf
        %2790 = vst.msk [vmem:[%s2787 + $0x10] sm:$0x3] %vm2785, -inf
        %s2791 = scalar_lea.vmem [#allocation3], 24
        %vm2792 = vcmask 253952
        %2793 = vst.msk [vmem:[%s2791] sm:$0x1] %vm2792, -inf
        %2794 = vst.msk [vmem:[%s2791 + $0x18] sm:$0x1] %vm2792, -inf
        %2795 = vst.msk [vmem:[%s2791 + $0x30] sm:$0x1] %vm2792, -inf
        %2796 = vst.msk [vmem:[%s2791 + $0x48] sm:$0x1] %vm2792, -inf
        %2797 = vst.msk [vmem:[%s2791 + $0x60] sm:$0x1] %vm2792, -inf
        %2798 = vst.msk [vmem:[%s2791 + $0x78] sm:$0x1] %vm2792, -inf
        %2799 = vst.msk [vmem:[%s2791 + $0x90] sm:$0x1] %vm2792, -inf
        %2800 = vst.msk [vmem:[%s2791 + $0xa8] sm:$0x1] %vm2792, -inf
        %2801 = vst.msk [vmem:[%s2791 + $0xc0] sm:$0x1] %vm2792, -inf
        %2802 = vst.msk [vmem:[%s2791 + $0xd8] sm:$0x1] %vm2792, -inf
        %2803 = vst.msk [vmem:[%s2791 + $0xf0] sm:$0x1] %vm2792, -inf
        %2804 = vst.msk [vmem:[%s2791 + $0x108] sm:$0x1] %vm2792, -inf
        %2805 = vst.msk [vmem:[%s2791 + $0x120] sm:$0x1] %vm2792, -inf
        %2806 = vst.msk [vmem:[%s2791 + $0x138] sm:$0x1] %vm2792, -inf
        %2807 = vst.msk [vmem:[%s2791 + $0x150] sm:$0x1] %vm2792, -inf
        %2808 = vst.msk [vmem:[%s2791 + $0x168] sm:$0x1] %vm2792, -inf
        %2809 = vst.msk [vmem:[%s2791 + $0x11] sm:$0x1] %vm2792, -inf
        %2810 = vst.msk [vmem:[%s2791 + $0x29] sm:$0x1] %vm2792, -inf
        %2811 = vst.msk [vmem:[%s2791 + $0x41] sm:$0x1] %vm2792, -inf
        %2812 = vst.msk [vmem:[%s2791 + $0x59] sm:$0x1] %vm2792, -inf
        %2813 = vst.msk [vmem:[%s2791 + $0x71] sm:$0x1] %vm2792, -inf
        %2814 = vst.msk [vmem:[%s2791 + $0x89] sm:$0x1] %vm2792, -inf
        %2815 = vst.msk [vmem:[%s2791 + $0xa1] sm:$0x1] %vm2792, -inf
        %2816 = vst.msk [vmem:[%s2791 + $0xb9] sm:$0x1] %vm2792, -inf
        %2817 = vst.msk [vmem:[%s2791 + $0xd1] sm:$0x1] %vm2792, -inf
        %2818 = vst.msk [vmem:[%s2791 + $0xe9] sm:$0x1] %vm2792, -inf
        %2819 = vst.msk [vmem:[%s2791 + $0x101] sm:$0x1] %vm2792, -inf
        %2820 = vst.msk [vmem:[%s2791 + $0x119] sm:$0x1] %vm2792, -inf
        %2821 = vst.msk [vmem:[%s2791 + $0x131] sm:$0x1] %vm2792, -inf
        %2822 = vst.msk [vmem:[%s2791 + $0x149] sm:$0x1] %vm2792, -inf
        %2823 = vst.msk [vmem:[%s2791 + $0x161] sm:$0x1] %vm2792, -inf
        %2824 = vst.msk [vmem:[%s2791 + $0x179] sm:$0x1] %vm2792, -inf
        %2825 = vst.msk [vmem:[%s2791 + $0x1] sm:$0xff] %vm369, %v298
        %2826 = vst.msk [vmem:[%s2791 + $0x9] sm:$0xff] %vm369, %v299
        %2827 = vst.msk [vmem:[%s2791 + $0x19] sm:$0xff] %vm369, %v300
        %2828 = vst.msk [vmem:[%s2791 + $0x21] sm:$0xff] %vm369, %v301
        %2829 = vst.msk [vmem:[%s2791 + $0x31] sm:$0xff] %vm369, %v302
        %2830 = vst.msk [vmem:[%s2791 + $0x39] sm:$0xff] %vm369, %v303
        %2831 = vst.msk [vmem:[%s2791 + $0x49] sm:$0xff] %vm369, %v304
        %2832 = vst.msk [vmem:[%s2791 + $0x51] sm:$0xff] %vm369, %v305
        %2833 = vst.msk [vmem:[%s2791 + $0x61] sm:$0xff] %vm369, %v306
        %2834 = vst.msk [vmem:[%s2791 + $0x69] sm:$0xff] %vm369, %v307
        %2835 = vst.msk [vmem:[%s2791 + $0x79] sm:$0xff] %vm369, %v308
        %2836 = vst.msk [vmem:[%s2791 + $0x81] sm:$0xff] %vm369, %v309
        %2837 = vst.msk [vmem:[%s2791 + $0x91] sm:$0xff] %vm369, %v310
        %2838 = vst.msk [vmem:[%s2791 + $0x99] sm:$0xff] %vm369, %v311
        %2839 = vst.msk [vmem:[%s2791 + $0xa9] sm:$0xff] %vm369, %v312
        %2840 = vst.msk [vmem:[%s2791 + $0xb1] sm:$0xff] %vm369, %v313
        %2841 = vst.msk [vmem:[%s2791 + $0xc1] sm:$0xff] %vm369, %v314
        %2842 = vst.msk [vmem:[%s2791 + $0xc9] sm:$0xff] %vm369, %v315
        %2843 = vst.msk [vmem:[%s2791 + $0xd9] sm:$0xff] %vm369, %v316
        %2844 = vst.msk [vmem:[%s2791 + $0xe1] sm:$0xff] %vm369, %v317
        %2845 = vst.msk [vmem:[%s2791 + $0xf1] sm:$0xff] %vm369, %v318
        %2846 = vst.msk [vmem:[%s2791 + $0xf9] sm:$0xff] %vm369, %v319
        %2847 = vst.msk [vmem:[%s2791 + $0x109] sm:$0xff] %vm369, %v320
        %2848 = vst.msk [vmem:[%s2791 + $0x111] sm:$0xff] %vm369, %v321
        %2849 = vst.msk [vmem:[%s2791 + $0x121] sm:$0xff] %vm369, %v322
        %2850 = vst.msk [vmem:[%s2791 + $0x129] sm:$0xff] %vm369, %v323
        %2851 = vst.msk [vmem:[%s2791 + $0x139] sm:$0xff] %vm369, %v324
        %2852 = vst.msk [vmem:[%s2791 + $0x141] sm:$0xff] %vm369, %v325
        %2853 = vst.msk [vmem:[%s2791 + $0x151] sm:$0xff] %vm369, %v326
        %2854 = vst.msk [vmem:[%s2791 + $0x159] sm:$0xff] %vm369, %v327
        %2855 = vst.msk [vmem:[%s2791 + $0x169] sm:$0xff] %vm369, %v328
        %2856 = vst.msk [vmem:[%s2791 + $0x171] sm:$0xff] %vm369, %v329
        %v2857 = vld [vmem:[#allocation3] sm:$0xff]
        %v2858 = vld [vmem:[#allocation3 + $0x8] sm:$0xff]
        %v2859 = vld [vmem:[#allocation3 + $0x18] sm:$0xff]
        %v2860 = vld [vmem:[#allocation3 + $0x20] sm:$0xff]
        %v2861 = vld [vmem:[#allocation3 + $0x30] sm:$0xff]
        %v2862 = vld [vmem:[#allocation3 + $0x38] sm:$0xff]
        %v2863 = vld [vmem:[#allocation3 + $0x48] sm:$0xff]
        %v2864 = vld [vmem:[#allocation3 + $0x50] sm:$0xff]
        %v2865 = vld [vmem:[#allocation3 + $0x60] sm:$0xff]
        %v2866 = vld [vmem:[#allocation3 + $0x68] sm:$0xff]
        %v2867 = vld [vmem:[#allocation3 + $0x78] sm:$0xff]
        %v2868 = vld [vmem:[#allocation3 + $0x80] sm:$0xff]
        %v2869 = vld [vmem:[#allocation3 + $0x90] sm:$0xff]
        %v2870 = vld [vmem:[#allocation3 + $0x98] sm:$0xff]
        %v2871 = vld [vmem:[#allocation3 + $0xa8] sm:$0xff]
        %v2872 = vld [vmem:[#allocation3 + $0xb0] sm:$0xff]
        %v2873 = vld [vmem:[#allocation3 + $0xc0] sm:$0xff]
        %v2874 = vld [vmem:[#allocation3 + $0xc8] sm:$0xff]
        %v2875 = vld [vmem:[#allocation3 + $0xd8] sm:$0xff]
        %v2876 = vld [vmem:[#allocation3 + $0xe0] sm:$0xff]
        %v2877 = vld [vmem:[#allocation3 + $0xf0] sm:$0xff]
        %v2878 = vld [vmem:[#allocation3 + $0xf8] sm:$0xff]
        %v2879 = vld [vmem:[#allocation3 + $0x108] sm:$0xff]
        %v2880 = vld [vmem:[#allocation3 + $0x110] sm:$0xff]
        %v2881 = vld [vmem:[#allocation3 + $0x120] sm:$0xff]
        %v2882 = vld [vmem:[#allocation3 + $0x128] sm:$0xff]
        %v2883 = vld [vmem:[#allocation3 + $0x138] sm:$0xff]
        %v2884 = vld [vmem:[#allocation3 + $0x140] sm:$0xff]
        %v2885 = vld [vmem:[#allocation3 + $0x150] sm:$0xff]
        %v2886 = vld [vmem:[#allocation3 + $0x158] sm:$0xff]
        %v2887 = vld [vmem:[#allocation3 + $0x168] sm:$0xff]
        %v2888 = vld [vmem:[#allocation3 + $0x170] sm:$0xff]
        %v2889 = vld [vmem:[#allocation3 + $0x180] sm:$0xff]
        %v2890 = vld [vmem:[#allocation3 + $0x188] sm:$0xff]
        %v2891 = vld [vmem:[#allocation3 + $0x198] sm:$0xff]
        %v2892 = vld [vmem:[#allocation3 + $0x1a0] sm:$0xff]
        %v2893 = vld [vmem:[#allocation3 + $0x1] sm:$0xff]
        %v2894 = vld [vmem:[#allocation3 + $0x9] sm:$0xff]
        %v2895 = vld [vmem:[#allocation3 + $0x19] sm:$0xff]
        %v2896 = vld [vmem:[#allocation3 + $0x21] sm:$0xff]
        %v2897 = vld [vmem:[#allocation3 + $0x31] sm:$0xff]
        %v2898 = vld [vmem:[#allocation3 + $0x39] sm:$0xff]
        %v2899 = vld [vmem:[#allocation3 + $0x49] sm:$0xff]
        %v2900 = vld [vmem:[#allocation3 + $0x51] sm:$0xff]
        %v2901 = vld [vmem:[#allocation3 + $0x61] sm:$0xff]
        %v2902 = vld [vmem:[#allocation3 + $0x69] sm:$0xff]
        %v2903 = vld [vmem:[#allocation3 + $0x79] sm:$0xff]
        %v2904 = vld [vmem:[#allocation3 + $0x81] sm:$0xff]
        %v2905 = vld [vmem:[#allocation3 + $0x91] sm:$0xff]
        %v2906 = vld [vmem:[#allocation3 + $0x99] sm:$0xff]
        %v2907 = vld [vmem:[#allocation3 + $0xa9] sm:$0xff]
        %v2908 = vld [vmem:[#allocation3 + $0xb1] sm:$0xff]
        %v2909 = vld [vmem:[#allocation3 + $0xc1] sm:$0xff]
        %v2910 = vld [vmem:[#allocation3 + $0xc9] sm:$0xff]
        %v2911 = vld [vmem:[#allocation3 + $0xd9] sm:$0xff]
        %v2912 = vld [vmem:[#allocation3 + $0xe1] sm:$0xff]
        %v2913 = vld [vmem:[#allocation3 + $0xf1] sm:$0xff]
        %v2914 = vld [vmem:[#allocation3 + $0xf9] sm:$0xff]
        %v2915 = vld [vmem:[#allocation3 + $0x109] sm:$0xff]
        %v2916 = vld [vmem:[#allocation3 + $0x111] sm:$0xff]
        %v2917 = vld [vmem:[#allocation3 + $0x121] sm:$0xff]
        %v2918 = vld [vmem:[#allocation3 + $0x129] sm:$0xff]
        %v2919 = vld [vmem:[#allocation3 + $0x139] sm:$0xff]
        %v2920 = vld [vmem:[#allocation3 + $0x141] sm:$0xff]
        %v2921 = vld [vmem:[#allocation3 + $0x151] sm:$0xff]
        %v2922 = vld [vmem:[#allocation3 + $0x159] sm:$0xff]
        %v2923 = vld [vmem:[#allocation3 + $0x169] sm:$0xff]
        %v2924 = vld [vmem:[#allocation3 + $0x171] sm:$0xff]
        %v2925 = vld [vmem:[#allocation3 + $0x181] sm:$0xff]
        %v2926 = vld [vmem:[#allocation3 + $0x189] sm:$0xff]
        %v2927 = vld [vmem:[#allocation3 + $0x199] sm:$0xff]
        %v2928 = vld [vmem:[#allocation3 + $0x1a1] sm:$0xff]
        %v2929 = vmax.f32 %v2857, %v2893
        %v2930 = vmax.f32 %v2858, %v2894
        %v2931 = vmax.f32 %v2859, %v2895
        %v2932 = vmax.f32 %v2860, %v2896
        %v2933 = vmax.f32 %v2861, %v2897
        %v2934 = vmax.f32 %v2862, %v2898
        %v2935 = vmax.f32 %v2863, %v2899
        %v2936 = vmax.f32 %v2864, %v2900
        %v2937 = vmax.f32 %v2865, %v2901
        %v2938 = vmax.f32 %v2866, %v2902
        %v2939 = vmax.f32 %v2867, %v2903
        %v2940 = vmax.f32 %v2868, %v2904
        %v2941 = vmax.f32 %v2869, %v2905
        %v2942 = vmax.f32 %v2870, %v2906
        %v2943 = vmax.f32 %v2871, %v2907
        %v2944 = vmax.f32 %v2872, %v2908
        %v2945 = vmax.f32 %v2873, %v2909
        %v2946 = vmax.f32 %v2874, %v2910
        %v2947 = vmax.f32 %v2875, %v2911
        %v2948 = vmax.f32 %v2876, %v2912
        %v2949 = vmax.f32 %v2877, %v2913
        %v2950 = vmax.f32 %v2878, %v2914
        %v2951 = vmax.f32 %v2879, %v2915
        %v2952 = vmax.f32 %v2880, %v2916
        %v2953 = vmax.f32 %v2881, %v2917
        %v2954 = vmax.f32 %v2882, %v2918
        %v2955 = vmax.f32 %v2883, %v2919
        %v2956 = vmax.f32 %v2884, %v2920
        %v2957 = vmax.f32 %v2885, %v2921
        %v2958 = vmax.f32 %v2886, %v2922
        %v2959 = vmax.f32 %v2887, %v2923
        %v2960 = vmax.f32 %v2888, %v2924
        %v2961 = vmax.f32 %v2889, %v2925
        %v2962 = vmax.f32 %v2890, %v2926
        %v2963 = vmax.f32 %v2891, %v2927
        %v2964 = vmax.f32 %v2892, %v2928
        %v2965 = vld [vmem:[#allocation3 + $0x2] sm:$0xff]
        %v2966 = vld [vmem:[#allocation3 + $0xa] sm:$0xff]
        %v2967 = vld [vmem:[#allocation3 + $0x1a] sm:$0xff]
        %v2968 = vld [vmem:[#allocation3 + $0x22] sm:$0xff]
        %v2969 = vld [vmem:[#allocation3 + $0x32] sm:$0xff]
        %v2970 = vld [vmem:[#allocation3 + $0x3a] sm:$0xff]
        %v2971 = vld [vmem:[#allocation3 + $0x4a] sm:$0xff]
        %v2972 = vld [vmem:[#allocation3 + $0x52] sm:$0xff]
        %v2973 = vld [vmem:[#allocation3 + $0x62] sm:$0xff]
        %v2974 = vld [vmem:[#allocation3 + $0x6a] sm:$0xff]
        %v2975 = vld [vmem:[#allocation3 + $0x7a] sm:$0xff]
        %v2976 = vld [vmem:[#allocation3 + $0x82] sm:$0xff]
        %v2977 = vld [vmem:[#allocation3 + $0x92] sm:$0xff]
        %v2978 = vld [vmem:[#allocation3 + $0x9a] sm:$0xff]
        %v2979 = vld [vmem:[#allocation3 + $0xaa] sm:$0xff]
        %v2980 = vld [vmem:[#allocation3 + $0xb2] sm:$0xff]
        %v2981 = vld [vmem:[#allocation3 + $0xc2] sm:$0xff]
        %v2982 = vld [vmem:[#allocation3 + $0xca] sm:$0xff]
        %v2983 = vld [vmem:[#allocation3 + $0xda] sm:$0xff]
        %v2984 = vld [vmem:[#allocation3 + $0xe2] sm:$0xff]
        %v2985 = vld [vmem:[#allocation3 + $0xf2] sm:$0xff]
        %v2986 = vld [vmem:[#allocation3 + $0xfa] sm:$0xff]
        %v2987 = vld [vmem:[#allocation3 + $0x10a] sm:$0xff]
        %v2988 = vld [vmem:[#allocation3 + $0x112] sm:$0xff]
        %v2989 = vld [vmem:[#allocation3 + $0x122] sm:$0xff]
        %v2990 = vld [vmem:[#allocation3 + $0x12a] sm:$0xff]
        %v2991 = vld [vmem:[#allocation3 + $0x13a] sm:$0xff]
        %v2992 = vld [vmem:[#allocation3 + $0x142] sm:$0xff]
        %v2993 = vld [vmem:[#allocation3 + $0x152] sm:$0xff]
        %v2994 = vld [vmem:[#allocation3 + $0x15a] sm:$0xff]
        %v2995 = vld [vmem:[#allocation3 + $0x16a] sm:$0xff]
        %v2996 = vld [vmem:[#allocation3 + $0x172] sm:$0xff]
        %v2997 = vld [vmem:[#allocation3 + $0x182] sm:$0xff]
        %v2998 = vld [vmem:[#allocation3 + $0x18a] sm:$0xff]
        %v2999 = vld [vmem:[#allocation3 + $0x19a] sm:$0xff]
        %v3000 = vld [vmem:[#allocation3 + $0x1a2] sm:$0xff]
        %v3001 = vmax.f32 %v2929, %v2965
        %v3002 = vmax.f32 %v2930, %v2966
        %v3003 = vmax.f32 %v2931, %v2967
        %v3004 = vmax.f32 %v2932, %v2968
        %v3005 = vmax.f32 %v2933, %v2969
        %v3006 = vmax.f32 %v2934, %v2970
        %v3007 = vmax.f32 %v2935, %v2971
        %v3008 = vmax.f32 %v2936, %v2972
        %v3009 = vmax.f32 %v2937, %v2973
        %v3010 = vmax.f32 %v2938, %v2974
        %v3011 = vmax.f32 %v2939, %v2975
        %v3012 = vmax.f32 %v2940, %v2976
        %v3013 = vmax.f32 %v2941, %v2977
        %v3014 = vmax.f32 %v2942, %v2978
        %v3015 = vmax.f32 %v2943, %v2979
        %v3016 = vmax.f32 %v2944, %v2980
        %v3017 = vmax.f32 %v2945, %v2981
        %v3018 = vmax.f32 %v2946, %v2982
        %v3019 = vmax.f32 %v2947, %v2983
        %v3020 = vmax.f32 %v2948, %v2984
        %v3021 = vmax.f32 %v2949, %v2985
        %v3022 = vmax.f32 %v2950, %v2986
        %v3023 = vmax.f32 %v2951, %v2987
        %v3024 = vmax.f32 %v2952, %v2988
        %v3025 = vmax.f32 %v2953, %v2989
        %v3026 = vmax.f32 %v2954, %v2990
        %v3027 = vmax.f32 %v2955, %v2991
        %v3028 = vmax.f32 %v2956, %v2992
        %v3029 = vmax.f32 %v2957, %v2993
        %v3030 = vmax.f32 %v2958, %v2994
        %v3031 = vmax.f32 %v2959, %v2995
        %v3032 = vmax.f32 %v2960, %v2996
        %v3033 = vmax.f32 %v2961, %v2997
        %v3034 = vmax.f32 %v2962, %v2998
        %v3035 = vmax.f32 %v2963, %v2999
        %v3036 = vmax.f32 %v2964, %v3000
        %v3037 = vmax.f32 %v3001, %v3003
        %v3038 = vmax.f32 %v3002, %v3004
        %v3039 = vmax.f32 %v3003, %v3005
        %v3040 = vmax.f32 %v3004, %v3006
        %v3041 = vmax.f32 %v3005, %v3007
        %v3042 = vmax.f32 %v3006, %v3008
        %v3043 = vmax.f32 %v3007, %v3009
        %v3044 = vmax.f32 %v3008, %v3010
        %v3045 = vmax.f32 %v3009, %v3011
        %v3046 = vmax.f32 %v3010, %v3012
        %v3047 = vmax.f32 %v3011, %v3013
        %v3048 = vmax.f32 %v3012, %v3014
        %v3049 = vmax.f32 %v3013, %v3015
        %v3050 = vmax.f32 %v3014, %v3016
        %v3051 = vmax.f32 %v3015, %v3017
        %v3052 = vmax.f32 %v3016, %v3018
        %v3053 = vmax.f32 %v3017, %v3019
        %v3054 = vmax.f32 %v3018, %v3020
        %v3055 = vmax.f32 %v3019, %v3021
        %v3056 = vmax.f32 %v3020, %v3022
        %v3057 = vmax.f32 %v3021, %v3023
        %v3058 = vmax.f32 %v3022, %v3024
        %v3059 = vmax.f32 %v3023, %v3025
        %v3060 = vmax.f32 %v3024, %v3026
        %v3061 = vmax.f32 %v3025, %v3027
        %v3062 = vmax.f32 %v3026, %v3028
        %v3063 = vmax.f32 %v3027, %v3029
        %v3064 = vmax.f32 %v3028, %v3030
        %v3065 = vmax.f32 %v3029, %v3031
        %v3066 = vmax.f32 %v3030, %v3032
        %v3067 = vmax.f32 %v3031, %v3033
        %v3068 = vmax.f32 %v3032, %v3034
        %v3069 = vmax.f32 %v3037, %v3005
        %v3070 = vmax.f32 %v3038, %v3006
        %v3071 = vmax.f32 %v3039, %v3007
        %v3072 = vmax.f32 %v3040, %v3008
        %v3073 = vmax.f32 %v3041, %v3009
        %v3074 = vmax.f32 %v3042, %v3010
        %v3075 = vmax.f32 %v3043, %v3011
        %v3076 = vmax.f32 %v3044, %v3012
        %v3077 = vmax.f32 %v3045, %v3013
        %v3078 = vmax.f32 %v3046, %v3014
        %v3079 = vmax.f32 %v3047, %v3015
        %v3080 = vmax.f32 %v3048, %v3016
        %v3081 = vmax.f32 %v3049, %v3017
        %v3082 = vmax.f32 %v3050, %v3018
        %v3083 = vmax.f32 %v3051, %v3019
        %v3084 = vmax.f32 %v3052, %v3020
        %v3085 = vmax.f32 %v3053, %v3021
        %v3086 = vmax.f32 %v3054, %v3022
        %v3087 = vmax.f32 %v3055, %v3023
        %v3088 = vmax.f32 %v3056, %v3024
        %v3089 = vmax.f32 %v3057, %v3025
        %v3090 = vmax.f32 %v3058, %v3026
        %v3091 = vmax.f32 %v3059, %v3027
        %v3092 = vmax.f32 %v3060, %v3028
        %v3093 = vmax.f32 %v3061, %v3029
        %v3094 = vmax.f32 %v3062, %v3030
        %v3095 = vmax.f32 %v3063, %v3031
        %v3096 = vmax.f32 %v3064, %v3032
        %v3097 = vmax.f32 %v3065, %v3033
        %v3098 = vmax.f32 %v3066, %v3034
        %v3099 = vmax.f32 %v3067, %v3035
        %v3100 = vmax.f32 %v3068, %v3036
        %v3101 = vpack.c.bf16 %v3070, %v3069
        %v3102 = vpack.c.bf16 %v3072, %v3071
        %v3103 = vpack.c.bf16 %v3074, %v3073
        %v3104 = vpack.c.bf16 %v3076, %v3075
        %v3105 = vpack.c.bf16 %v3078, %v3077
        %v3106 = vpack.c.bf16 %v3080, %v3079
        %v3107 = vpack.c.bf16 %v3082, %v3081
        %v3108 = vpack.c.bf16 %v3084, %v3083
        %v3109 = vpack.c.bf16 %v3086, %v3085
        %v3110 = vpack.c.bf16 %v3088, %v3087
        %v3111 = vpack.c.bf16 %v3090, %v3089
        %v3112 = vpack.c.bf16 %v3092, %v3091
        %v3113 = vpack.c.bf16 %v3094, %v3093
        %v3114 = vpack.c.bf16 %v3096, %v3095
        %v3115 = vpack.c.bf16 %v3098, %v3097
        %v3116 = vpack.c.bf16 %v3100, %v3099
        %v3117 = vld [vmem:[%s5] sm:$0xf]
        %v3118 = vld [vmem:[%s5 + $0x4] sm:$0xf]
        %v3119 = vld [vmem:[%s5 + $0x8] sm:$0xf]
        %v3120 = vld [vmem:[%s5 + $0xc] sm:$0xf]
        %v3121 = vld [vmem:[%s6] sm:$0x1]
        %v3123 = vlaneseq
        %v3124 = vshrl.u32 %v3123, 7
        %v3125 = vsub.s32 0, %v3124
        %v3126 = vrot.slane %v3121, %v3125
        %v3132 = vunpack.c.l.b16 %v3117
        %v3133 = vunpack.c.l.b16 %v3118
        %v3134 = vunpack.c.l.b16 %v3119
        %v3135 = vunpack.c.l.b16 %v3120
        %v3136 = vpack.c.b16 %v3133, %v3132
        %v3137 = vpack.c.b16 %v3135, %v3134
        %v3141 = vsel %vm369, %v3101, 0
        %v3144 = vsel %vm369, %v3102, 0
        %v3147 = vsel %vm369, %v3103, 0
        %v3150 = vsel %vm369, %v3104, 0
        %v3153 = vsel %vm369, %v3105, 0
        %v3156 = vsel %vm369, %v3106, 0
        %v3159 = vsel %vm369, %v3107, 0
        %v3162 = vsel %vm369, %v3108, 0
        %v3165 = vsel %vm369, %v3109, 0
        %v3168 = vsel %vm369, %v3110, 0
        %v3171 = vsel %vm369, %v3111, 0
        %v3174 = vsel %vm369, %v3112, 0
        %v3177 = vsel %vm369, %v3113, 0
        %v3180 = vsel %vm369, %v3114, 0
        %v3183 = vsel %vm369, %v3115, 0
        %v3186 = vsel %vm369, %v3116, 0
        %3188 = vmatprep.subr.bf16.mxu0 0
        %3189 = vmatpush1.bf16.msra.mxu0 0
        %3190 = vmatprep.subr.bf16.mxu0 0
        %3191 = vmatpush1.bf16.msra.mxu0 0
        %3192 = vmatprep.subr.bf16.mxu0 0
        %3193 = vmatpush1.bf16.msra.mxu0 0
        %3194 = vmatprep.subr.bf16.mxu0 0
        %3195 = vmatpush1.bf16.msra.mxu0 0
        %3196 = vmatprep.subr.bf16.mxu0 0
        %3197 = vmatpush1.bf16.msra.mxu0 0
        %3198 = vmatprep.subr.bf16.mxu0 0
        %3199 = vmatpush1.bf16.msra.mxu0 0
        %3200 = vmatprep.subr.bf16.mxu0 0
        %3201 = vmatpush1.bf16.msra.mxu0 %v3137
        %3202 = vmatprep.subr.bf16.mxu0 0
        %3203 = vmatpush1.bf16.msra.mxu0 %v3136
        %3204 = vmatprep.subr.bf16.mxu0 0
        %3205 = vmatpush2.bf16.msra.mxu0 0
        %3206 = vmatprep.subr.bf16.mxu0 0
        %3207 = vmatpush2.bf16.msra.mxu0 0
        %3208 = vmatprep.subr.bf16.mxu0 0
        %3209 = vmatpush2.bf16.msra.mxu0 0
        %3210 = vmatprep.subr.bf16.mxu0 0
        %3211 = vmatpush2.bf16.msra.mxu0 0
        %3212 = vmatprep.subr.bf16.mxu0 0
        %3213 = vmatpush2.bf16.msra.mxu0 0
        %3214 = vmatprep.subr.bf16.mxu0 0
        %3215 = vmatpush2.bf16.msra.mxu0 0
        %3216 = vmatprep.subr.bf16.mxu0 0
        %3217 = vmatpush2.bf16.msra.mxu0 0
        %3218 = vmatprep.subr.bf16.mxu0 0
        %3219 = vmatpush2.bf16.msra.mxu0 0
        %3220 = vmatprep.mubr.bf16.mxu0 0
        %3221 = vmatmul.mubr.bf16.gmra.mxu0 %v3141
        %v3222 = vpop.f32.mrf.mxu0
        %v3223 = vadd.f32 %v3126, %v3222
        %v3224 = vpop.f32.mrf.mxu0
        %v3225 = vpop.f32.mrf.mxu0
        %v3226 = vadd.f32 %v3126, %v3225
        %v3227 = vpop.f32.mrf.mxu0
        %3228 = vmatprep.mubr.bf16.mxu0 0
        %3229 = vmatmul.mubr.bf16.gmra.mxu0 %v3144
        %v3230 = vpop.f32.mrf.mxu0
        %v3231 = vadd.f32 %v3126, %v3230
        %v3232 = vpop.f32.mrf.mxu0
        %v3233 = vpop.f32.mrf.mxu0
        %v3234 = vadd.f32 %v3126, %v3233
        %v3235 = vpop.f32.mrf.mxu0
        %3236 = vmatprep.mubr.bf16.mxu0 0
        %3237 = vmatmul.mubr.bf16.gmra.mxu0 %v3147
        %v3238 = vpop.f32.mrf.mxu0
        %v3239 = vadd.f32 %v3126, %v3238
        %v3240 = vpop.f32.mrf.mxu0
        %v3241 = vpop.f32.mrf.mxu0
        %v3242 = vadd.f32 %v3126, %v3241
        %v3243 = vpop.f32.mrf.mxu0
        %3244 = vmatprep.mubr.bf16.mxu0 0
        %3245 = vmatmul.mubr.bf16.gmra.mxu0 %v3150
        %v3246 = vpop.f32.mrf.mxu0
        %v3247 = vadd.f32 %v3126, %v3246
        %v3248 = vpop.f32.mrf.mxu0
        %v3249 = vpop.f32.mrf.mxu0
        %v3250 = vadd.f32 %v3126, %v3249
        %v3251 = vpop.f32.mrf.mxu0
        %3252 = vmatprep.mubr.bf16.mxu0 0
        %3253 = vmatmul.mubr.bf16.gmra.mxu0 %v3153
        %v3254 = vpop.f32.mrf.mxu0
        %v3255 = vadd.f32 %v3126, %v3254
        %v3256 = vpop.f32.mrf.mxu0
        %v3257 = vpop.f32.mrf.mxu0
        %v3258 = vadd.f32 %v3126, %v3257
        %v3259 = vpop.f32.mrf.mxu0
        %3260 = vmatprep.mubr.bf16.mxu0 0
        %3261 = vmatmul.mubr.bf16.gmra.mxu0 %v3156
        %v3262 = vpop.f32.mrf.mxu0
        %v3263 = vadd.f32 %v3126, %v3262
        %v3264 = vpop.f32.mrf.mxu0
        %v3265 = vpop.f32.mrf.mxu0
        %v3266 = vadd.f32 %v3126, %v3265
        %v3267 = vpop.f32.mrf.mxu0
        %3268 = vmatprep.mubr.bf16.mxu0 0
        %3269 = vmatmul.mubr.bf16.gmra.mxu0 %v3159
        %v3270 = vpop.f32.mrf.mxu0
        %v3271 = vadd.f32 %v3126, %v3270
        %v3272 = vpop.f32.mrf.mxu0
        %v3273 = vpop.f32.mrf.mxu0
        %v3274 = vadd.f32 %v3126, %v3273
        %v3275 = vpop.f32.mrf.mxu0
        %3276 = vmatprep.mubr.bf16.mxu0 0
        %3277 = vmatmul.mubr.bf16.gmra.mxu0 %v3162
        %v3278 = vpop.f32.mrf.mxu0
        %v3279 = vadd.f32 %v3126, %v3278
        %v3280 = vpop.f32.mrf.mxu0
        %v3281 = vpop.f32.mrf.mxu0
        %v3282 = vadd.f32 %v3126, %v3281
        %v3283 = vpop.f32.mrf.mxu0
        %3284 = vmatprep.mubr.bf16.mxu0 0
        %3285 = vmatmul.mubr.bf16.gmra.mxu0 %v3165
        %v3286 = vpop.f32.mrf.mxu0
        %v3287 = vadd.f32 %v3126, %v3286
        %v3288 = vpop.f32.mrf.mxu0
        %v3289 = vpop.f32.mrf.mxu0
        %v3290 = vadd.f32 %v3126, %v3289
        %v3291 = vpop.f32.mrf.mxu0
        %3292 = vmatprep.mubr.bf16.mxu0 0
        %3293 = vmatmul.mubr.bf16.gmra.mxu0 %v3168
        %v3294 = vpop.f32.mrf.mxu0
        %v3295 = vadd.f32 %v3126, %v3294
        %v3296 = vpop.f32.mrf.mxu0
        %v3297 = vpop.f32.mrf.mxu0
        %v3298 = vadd.f32 %v3126, %v3297
        %v3299 = vpop.f32.mrf.mxu0
        %3300 = vmatprep.mubr.bf16.mxu0 0
        %3301 = vmatmul.mubr.bf16.gmra.mxu0 %v3171
        %v3302 = vpop.f32.mrf.mxu0
        %v3303 = vadd.f32 %v3126, %v3302
        %v3304 = vpop.f32.mrf.mxu0
        %v3305 = vpop.f32.mrf.mxu0
        %v3306 = vadd.f32 %v3126, %v3305
        %v3307 = vpop.f32.mrf.mxu0
        %3308 = vmatprep.mubr.bf16.mxu0 0
        %3309 = vmatmul.mubr.bf16.gmra.mxu0 %v3174
        %v3310 = vpop.f32.mrf.mxu0
        %v3311 = vadd.f32 %v3126, %v3310
        %v3312 = vpop.f32.mrf.mxu0
        %v3313 = vpop.f32.mrf.mxu0
        %v3314 = vadd.f32 %v3126, %v3313
        %v3315 = vpop.f32.mrf.mxu0
        %3316 = vmatprep.mubr.bf16.mxu0 0
        %3317 = vmatmul.mubr.bf16.gmra.mxu0 %v3177
        %v3318 = vpop.f32.mrf.mxu0
        %v3319 = vadd.f32 %v3126, %v3318
        %v3320 = vpop.f32.mrf.mxu0
        %v3321 = vpop.f32.mrf.mxu0
        %v3322 = vadd.f32 %v3126, %v3321
        %v3323 = vpop.f32.mrf.mxu0
        %3324 = vmatprep.mubr.bf16.mxu0 0
        %3325 = vmatmul.mubr.bf16.gmra.mxu0 %v3180
        %v3326 = vpop.f32.mrf.mxu0
        %v3327 = vadd.f32 %v3126, %v3326
        %v3328 = vpop.f32.mrf.mxu0
        %v3329 = vpop.f32.mrf.mxu0
        %v3330 = vadd.f32 %v3126, %v3329
        %v3331 = vpop.f32.mrf.mxu0
        %3332 = vmatprep.mubr.bf16.mxu0 0
        %3333 = vmatmul.mubr.bf16.gmra.mxu0 %v3183
        %v3334 = vpop.f32.mrf.mxu0
        %v3335 = vadd.f32 %v3126, %v3334
        %v3336 = vpop.f32.mrf.mxu0
        %v3337 = vpop.f32.mrf.mxu0
        %v3338 = vadd.f32 %v3126, %v3337
        %v3339 = vpop.f32.mrf.mxu0
        %3340 = vmatprep.mubr.bf16.mxu0 0
        %3341 = vmatmul.mubr.bf16.gmra.mxu0 %v3186
        %v3342 = vpop.f32.mrf.mxu0
        %v3343 = vadd.f32 %v3126, %v3342
        %v3344 = vpop.f32.mrf.mxu0
        %v3345 = vpop.f32.mrf.mxu0
        %v3346 = vadd.f32 %v3126, %v3345
        %v3347 = vpop.f32.mrf.mxu0
        %3348 = vdwg.mxu0
        %v3349 = vmax.f32 %v3223, 0.0
        %v3350 = vmax.f32 %v3226, 0.0
        %v3351 = vmax.f32 %v3231, 0.0
        %v3352 = vmax.f32 %v3234, 0.0
        %v3353 = vmax.f32 %v3239, 0.0
        %v3354 = vmax.f32 %v3242, 0.0
        %v3355 = vmax.f32 %v3247, 0.0
        %v3356 = vmax.f32 %v3250, 0.0
        %v3357 = vmax.f32 %v3255, 0.0
        %v3358 = vmax.f32 %v3258, 0.0
        %v3359 = vmax.f32 %v3263, 0.0
        %v3360 = vmax.f32 %v3266, 0.0
        %v3361 = vmax.f32 %v3271, 0.0
        %v3362 = vmax.f32 %v3274, 0.0
        %v3363 = vmax.f32 %v3279, 0.0
        %v3364 = vmax.f32 %v3282, 0.0
        %v3365 = vmax.f32 %v3287, 0.0
        %v3366 = vmax.f32 %v3290, 0.0
        %v3367 = vmax.f32 %v3295, 0.0
        %v3368 = vmax.f32 %v3298, 0.0
        %v3369 = vmax.f32 %v3303, 0.0
        %v3370 = vmax.f32 %v3306, 0.0
        %v3371 = vmax.f32 %v3311, 0.0
        %v3372 = vmax.f32 %v3314, 0.0
        %v3373 = vmax.f32 %v3319, 0.0
        %v3374 = vmax.f32 %v3322, 0.0
        %v3375 = vmax.f32 %v3327, 0.0
        %v3376 = vmax.f32 %v3330, 0.0
        %v3377 = vmax.f32 %v3335, 0.0
        %v3378 = vmax.f32 %v3338, 0.0
        %v3379 = vmax.f32 %v3343, 0.0
        %v3380 = vmax.f32 %v3346, 0.0
        %3381 = vst.msk [vmem:[%s296] sm:$0xff] %vm369, %v579
        %3382 = vst.msk [vmem:[%s296 + $0x8] sm:$0xff] %vm369, %v580
        %3383 = vst.msk [vmem:[%s296 + $0x10] sm:$0xff] %vm369, %v581
        %3384 = vst.msk [vmem:[%s296 + $0x18] sm:$0xff] %vm369, %v582
        %3385 = vst.msk [vmem:[%s296 + $0x20] sm:$0xff] %vm369, %v583
        %3386 = vst.msk [vmem:[%s296 + $0x28] sm:$0xff] %vm369, %v584
        %3387 = vst.msk [vmem:[%s296 + $0x30] sm:$0xff] %vm369, %v585
        %3388 = vst.msk [vmem:[%s296 + $0x38] sm:$0xff] %vm369, %v586
        %3389 = vst.msk [vmem:[%s296 + $0x40] sm:$0xff] %vm369, %v587
        %3390 = vst.msk [vmem:[%s296 + $0x48] sm:$0xff] %vm369, %v588
        %3391 = vst.msk [vmem:[%s296 + $0x50] sm:$0xff] %vm369, %v589
        %3392 = vst.msk [vmem:[%s296 + $0x58] sm:$0xff] %vm369, %v590
        %3393 = vst.msk [vmem:[%s296 + $0x60] sm:$0xff] %vm369, %v591
        %3394 = vst.msk [vmem:[%s296 + $0x68] sm:$0xff] %vm369, %v592
        %3395 = vst.msk [vmem:[%s296 + $0x70] sm:$0xff] %vm369, %v593
        %3396 = vst.msk [vmem:[%s296 + $0x78] sm:$0xff] %vm369, %v594
        %3397 = vst.msk [vmem:[%s296 + $0x80] sm:$0xff] %vm369, %v595
        %3398 = vst.msk [vmem:[%s296 + $0x88] sm:$0xff] %vm369, %v596
        %3399 = vst.msk [vmem:[%s296 + $0x90] sm:$0xff] %vm369, %v597
        %3400 = vst.msk [vmem:[%s296 + $0x98] sm:$0xff] %vm369, %v598
        %3401 = vst.msk [vmem:[%s296 + $0xa0] sm:$0xff] %vm369, %v599
        %3402 = vst.msk [vmem:[%s296 + $0xa8] sm:$0xff] %vm369, %v600
        %3403 = vst.msk [vmem:[%s296 + $0xb0] sm:$0xff] %vm369, %v601
        %3404 = vst.msk [vmem:[%s296 + $0xb8] sm:$0xff] %vm369, %v602
        %3405 = vst.msk [vmem:[%s296 + $0xc0] sm:$0xff] %vm369, %v603
        %3406 = vst.msk [vmem:[%s296 + $0xc8] sm:$0xff] %vm369, %v604
        %3407 = vst.msk [vmem:[%s296 + $0xd0] sm:$0xff] %vm369, %v605
        %3408 = vst.msk [vmem:[%s296 + $0xd8] sm:$0xff] %vm369, %v606
        %3409 = vst.msk [vmem:[%s296 + $0xe0] sm:$0xff] %vm369, %v607
        %3410 = vst.msk [vmem:[%s296 + $0xe8] sm:$0xff] %vm369, %v608
        %3411 = vst.msk [vmem:[%s296 + $0xf0] sm:$0xff] %vm369, %v609
        %3412 = vst.msk [vmem:[%s296 + $0xf8] sm:$0xff] %vm369, %v610
        %3445 = vrot.lane.b32.xlu0 %v2751, 32
        %v3446 = vpop.permute.xlu0 %3445
        %3447 = vrot.lane.b32.xlu0 %v2752, 32
        %v3448 = vpop.permute.xlu0 %3447
        %3449 = vrot.lane.b32.xlu0 %v2753, 32
        %v3450 = vpop.permute.xlu0 %3449
        %3451 = vrot.lane.b32.xlu0 %v2754, 32
        %v3452 = vpop.permute.xlu0 %3451
        %3453 = vrot.lane.b32.xlu0 %v2755, 32
        %v3454 = vpop.permute.xlu0 %3453
        %3455 = vrot.lane.b32.xlu0 %v2756, 32
        %v3456 = vpop.permute.xlu0 %3455
        %3457 = vrot.lane.b32.xlu0 %v2757, 32
        %v3458 = vpop.permute.xlu0 %3457
        %3459 = vrot.lane.b32.xlu0 %v2758, 32
        %v3460 = vpop.permute.xlu0 %3459
        %3461 = vrot.lane.b32.xlu0 %v2759, 32
        %v3462 = vpop.permute.xlu0 %3461
        %3463 = vrot.lane.b32.xlu0 %v2760, 32
        %v3464 = vpop.permute.xlu0 %3463
        %3465 = vrot.lane.b32.xlu0 %v2761, 32
        %v3466 = vpop.permute.xlu0 %3465
        %3467 = vrot.lane.b32.xlu0 %v2762, 32
        %v3468 = vpop.permute.xlu0 %3467
        %3469 = vrot.lane.b32.xlu0 %v2763, 32
        %v3470 = vpop.permute.xlu0 %3469
        %3471 = vrot.lane.b32.xlu0 %v2764, 32
        %v3472 = vpop.permute.xlu0 %3471
        %3473 = vrot.lane.b32.xlu0 %v2765, 32
        %v3474 = vpop.permute.xlu0 %3473
        %3475 = vrot.lane.b32.xlu0 %v2766, 32
        %v3476 = vpop.permute.xlu0 %3475
        %3477 = vrot.lane.b32.xlu0 %v2767, 32
        %v3478 = vpop.permute.xlu0 %3477
        %3479 = vrot.lane.b32.xlu0 %v2768, 32
        %v3480 = vpop.permute.xlu0 %3479
        %3481 = vrot.lane.b32.xlu0 %v2769, 32
        %v3482 = vpop.permute.xlu0 %3481
        %3483 = vrot.lane.b32.xlu0 %v2770, 32
        %v3484 = vpop.permute.xlu0 %3483
        %3485 = vrot.lane.b32.xlu0 %v2771, 32
        %v3486 = vpop.permute.xlu0 %3485
        %3487 = vrot.lane.b32.xlu0 %v2772, 32
        %v3488 = vpop.permute.xlu0 %3487
        %3489 = vrot.lane.b32.xlu0 %v2773, 32
        %v3490 = vpop.permute.xlu0 %3489
        %3491 = vrot.lane.b32.xlu0 %v2774, 32
        %v3492 = vpop.permute.xlu0 %3491
        %3493 = vrot.lane.b32.xlu0 %v2775, 32
        %v3494 = vpop.permute.xlu0 %3493
        %3495 = vrot.lane.b32.xlu0 %v2776, 32
        %v3496 = vpop.permute.xlu0 %3495
        %3497 = vrot.lane.b32.xlu0 %v2777, 32
        %v3498 = vpop.permute.xlu0 %3497
        %3499 = vrot.lane.b32.xlu0 %v2778, 32
        %v3500 = vpop.permute.xlu0 %3499
        %3501 = vrot.lane.b32.xlu0 %v2779, 32
        %v3502 = vpop.permute.xlu0 %3501
        %3503 = vrot.lane.b32.xlu0 %v2780, 32
        %v3504 = vpop.permute.xlu0 %3503
        %3505 = vrot.lane.b32.xlu0 %v2781, 32
        %v3506 = vpop.permute.xlu0 %3505
        %3507 = vrot.lane.b32.xlu0 %v2782, 32
        %v3508 = vpop.permute.xlu0 %3507
        %vm3541 = vcmask 916736
        %3542 = vst.msk [vmem:[%s296] sm:$0xff] %vm3541, %v3446
        %3543 = vst.msk [vmem:[%s296 + $0x8] sm:$0xff] %vm3541, %v3448
        %3544 = vst.msk [vmem:[%s296 + $0x10] sm:$0xff] %vm3541, %v3450
        %3545 = vst.msk [vmem:[%s296 + $0x18] sm:$0xff] %vm3541, %v3452
        %3546 = vst.msk [vmem:[%s296 + $0x20] sm:$0xff] %vm3541, %v3454
        %3547 = vst.msk [vmem:[%s296 + $0x28] sm:$0xff] %vm3541, %v3456
        %3548 = vst.msk [vmem:[%s296 + $0x30] sm:$0xff] %vm3541, %v3458
        %3549 = vst.msk [vmem:[%s296 + $0x38] sm:$0xff] %vm3541, %v3460
        %3550 = vst.msk [vmem:[%s296 + $0x40] sm:$0xff] %vm3541, %v3462
        %3551 = vst.msk [vmem:[%s296 + $0x48] sm:$0xff] %vm3541, %v3464
        %3552 = vst.msk [vmem:[%s296 + $0x50] sm:$0xff] %vm3541, %v3466
        %3553 = vst.msk [vmem:[%s296 + $0x58] sm:$0xff] %vm3541, %v3468
        %3554 = vst.msk [vmem:[%s296 + $0x60] sm:$0xff] %vm3541, %v3470
        %3555 = vst.msk [vmem:[%s296 + $0x68] sm:$0xff] %vm3541, %v3472
        %3556 = vst.msk [vmem:[%s296 + $0x70] sm:$0xff] %vm3541, %v3474
        %3557 = vst.msk [vmem:[%s296 + $0x78] sm:$0xff] %vm3541, %v3476
        %3558 = vst.msk [vmem:[%s296 + $0x80] sm:$0xff] %vm3541, %v3478
        %3559 = vst.msk [vmem:[%s296 + $0x88] sm:$0xff] %vm3541, %v3480
        %3560 = vst.msk [vmem:[%s296 + $0x90] sm:$0xff] %vm3541, %v3482
        %3561 = vst.msk [vmem:[%s296 + $0x98] sm:$0xff] %vm3541, %v3484
        %3562 = vst.msk [vmem:[%s296 + $0xa0] sm:$0xff] %vm3541, %v3486
        %3563 = vst.msk [vmem:[%s296 + $0xa8] sm:$0xff] %vm3541, %v3488
        %3564 = vst.msk [vmem:[%s296 + $0xb0] sm:$0xff] %vm3541, %v3490
        %3565 = vst.msk [vmem:[%s296 + $0xb8] sm:$0xff] %vm3541, %v3492
        %3566 = vst.msk [vmem:[%s296 + $0xc0] sm:$0xff] %vm3541, %v3494
        %3567 = vst.msk [vmem:[%s296 + $0xc8] sm:$0xff] %vm3541, %v3496
        %3568 = vst.msk [vmem:[%s296 + $0xd0] sm:$0xff] %vm3541, %v3498
        %3569 = vst.msk [vmem:[%s296 + $0xd8] sm:$0xff] %vm3541, %v3500
        %3570 = vst.msk [vmem:[%s296 + $0xe0] sm:$0xff] %vm3541, %v3502
        %3571 = vst.msk [vmem:[%s296 + $0xe8] sm:$0xff] %vm3541, %v3504
        %3572 = vst.msk [vmem:[%s296 + $0xf0] sm:$0xff] %vm3541, %v3506
        %3573 = vst.msk [vmem:[%s296 + $0xf8] sm:$0xff] %vm3541, %v3508
        %3606 = vrot.lane.b32.xlu0 %v3349, 112
        %v3607 = vpop.permute.xlu0 %3606
        %3608 = vrot.lane.b32.xlu0 %v3350, 112
        %v3609 = vpop.permute.xlu0 %3608
        %3610 = vrot.lane.b32.xlu0 %v3351, 112
        %v3611 = vpop.permute.xlu0 %3610
        %3612 = vrot.lane.b32.xlu0 %v3352, 112
        %v3613 = vpop.permute.xlu0 %3612
        %3614 = vrot.lane.b32.xlu0 %v3353, 112
        %v3615 = vpop.permute.xlu0 %3614
        %3616 = vrot.lane.b32.xlu0 %v3354, 112
        %v3617 = vpop.permute.xlu0 %3616
        %3618 = vrot.lane.b32.xlu0 %v3355, 112
        %v3619 = vpop.permute.xlu0 %3618
        %3620 = vrot.lane.b32.xlu0 %v3356, 112
        %v3621 = vpop.permute.xlu0 %3620
        %3622 = vrot.lane.b32.xlu0 %v3357, 112
        %v3623 = vpop.permute.xlu0 %3622
        %3624 = vrot.lane.b32.xlu0 %v3358, 112
        %v3625 = vpop.permute.xlu0 %3624
        %3626 = vrot.lane.b32.xlu0 %v3359, 112
        %v3627 = vpop.permute.xlu0 %3626
        %3628 = vrot.lane.b32.xlu0 %v3360, 112
        %v3629 = vpop.permute.xlu0 %3628
        %3630 = vrot.lane.b32.xlu0 %v3361, 112
        %v3631 = vpop.permute.xlu0 %3630
        %3632 = vrot.lane.b32.xlu0 %v3362, 112
        %v3633 = vpop.permute.xlu0 %3632
        %3634 = vrot.lane.b32.xlu0 %v3363, 112
        %v3635 = vpop.permute.xlu0 %3634
        %3636 = vrot.lane.b32.xlu0 %v3364, 112
        %v3637 = vpop.permute.xlu0 %3636
        %3638 = vrot.lane.b32.xlu0 %v3365, 112
        %v3639 = vpop.permute.xlu0 %3638
        %3640 = vrot.lane.b32.xlu0 %v3366, 112
        %v3641 = vpop.permute.xlu0 %3640
        %3642 = vrot.lane.b32.xlu0 %v3367, 112
        %v3643 = vpop.permute.xlu0 %3642
        %3644 = vrot.lane.b32.xlu0 %v3368, 112
        %v3645 = vpop.permute.xlu0 %3644
        %3646 = vrot.lane.b32.xlu0 %v3369, 112
        %v3647 = vpop.permute.xlu0 %3646
        %3648 = vrot.lane.b32.xlu0 %v3370, 112
        %v3649 = vpop.permute.xlu0 %3648
        %3650 = vrot.lane.b32.xlu0 %v3371, 112
        %v3651 = vpop.permute.xlu0 %3650
        %3652 = vrot.lane.b32.xlu0 %v3372, 112
        %v3653 = vpop.permute.xlu0 %3652
        %3654 = vrot.lane.b32.xlu0 %v3373, 112
        %v3655 = vpop.permute.xlu0 %3654
        %3656 = vrot.lane.b32.xlu0 %v3374, 112
        %v3657 = vpop.permute.xlu0 %3656
        %3658 = vrot.lane.b32.xlu0 %v3375, 112
        %v3659 = vpop.permute.xlu0 %3658
        %3660 = vrot.lane.b32.xlu0 %v3376, 112
        %v3661 = vpop.permute.xlu0 %3660
        %3662 = vrot.lane.b32.xlu0 %v3377, 112
        %v3663 = vpop.permute.xlu0 %3662
        %3664 = vrot.lane.b32.xlu0 %v3378, 112
        %v3665 = vpop.permute.xlu0 %3664
        %3666 = vrot.lane.b32.xlu0 %v3379, 112
        %v3667 = vpop.permute.xlu0 %3666
        %3668 = vrot.lane.b32.xlu0 %v3380, 112
        %v3669 = vpop.permute.xlu0 %3668
        %vm3702 = vcmask 1048448
        %3703 = vst.msk [vmem:[%s296] sm:$0xff] %vm3702, %v3607
        %3704 = vst.msk [vmem:[%s296 + $0x8] sm:$0xff] %vm3702, %v3609
        %3705 = vst.msk [vmem:[%s296 + $0x10] sm:$0xff] %vm3702, %v3611
        %3706 = vst.msk [vmem:[%s296 + $0x18] sm:$0xff] %vm3702, %v3613
        %3707 = vst.msk [vmem:[%s296 + $0x20] sm:$0xff] %vm3702, %v3615
        %3708 = vst.msk [vmem:[%s296 + $0x28] sm:$0xff] %vm3702, %v3617
        %3709 = vst.msk [vmem:[%s296 + $0x30] sm:$0xff] %vm3702, %v3619
        %3710 = vst.msk [vmem:[%s296 + $0x38] sm:$0xff] %vm3702, %v3621
        %3711 = vst.msk [vmem:[%s296 + $0x40] sm:$0xff] %vm3702, %v3623
        %3712 = vst.msk [vmem:[%s296 + $0x48] sm:$0xff] %vm3702, %v3625
        %3713 = vst.msk [vmem:[%s296 + $0x50] sm:$0xff] %vm3702, %v3627
        %3714 = vst.msk [vmem:[%s296 + $0x58] sm:$0xff] %vm3702, %v3629
        %3715 = vst.msk [vmem:[%s296 + $0x60] sm:$0xff] %vm3702, %v3631
        %3716 = vst.msk [vmem:[%s296 + $0x68] sm:$0xff] %vm3702, %v3633
        %3717 = vst.msk [vmem:[%s296 + $0x70] sm:$0xff] %vm3702, %v3635
        %3718 = vst.msk [vmem:[%s296 + $0x78] sm:$0xff] %vm3702, %v3637
        %3719 = vst.msk [vmem:[%s296 + $0x80] sm:$0xff] %vm3702, %v3639
        %3720 = vst.msk [vmem:[%s296 + $0x88] sm:$0xff] %vm3702, %v3641
        %3721 = vst.msk [vmem:[%s296 + $0x90] sm:$0xff] %vm3702, %v3643
        %3722 = vst.msk [vmem:[%s296 + $0x98] sm:$0xff] %vm3702, %v3645
        %3723 = vst.msk [vmem:[%s296 + $0xa0] sm:$0xff] %vm3702, %v3647
        %3724 = vst.msk [vmem:[%s296 + $0xa8] sm:$0xff] %vm3702, %v3649
        %3725 = vst.msk [vmem:[%s296 + $0xb0] sm:$0xff] %vm3702, %v3651
        %3726 = vst.msk [vmem:[%s296 + $0xb8] sm:$0xff] %vm3702, %v3653
        %3727 = vst.msk [vmem:[%s296 + $0xc0] sm:$0xff] %vm3702, %v3655
        %3728 = vst.msk [vmem:[%s296 + $0xc8] sm:$0xff] %vm3702, %v3657
        %3729 = vst.msk [vmem:[%s296 + $0xd0] sm:$0xff] %vm3702, %v3659
        %3730 = vst.msk [vmem:[%s296 + $0xd8] sm:$0xff] %vm3702, %v3661
        %3731 = vst.msk [vmem:[%s296 + $0xe0] sm:$0xff] %vm3702, %v3663
        %3732 = vst.msk [vmem:[%s296 + $0xe8] sm:$0xff] %vm3702, %v3665
        %3733 = vst.msk [vmem:[%s296 + $0xf0] sm:$0xff] %vm3702, %v3667
        %3734 = vst.msk [vmem:[%s296 + $0xf8] sm:$0xff] %vm3702, %v3669
        %s3735 = sand.u32 %s184, 1
        %s3736 = scalar_lea.sflag [#allocation6], %s3735
        %s3737 = sand.u32 %s184, 1
        %s3738 = smul.addr %s3737, 256
        %s3739 = scalar_lea.vmem [#allocation7], %s3738
        // Predicated region
        $region53: #{inception_forward.1} parent=47 // pred_check
          %p3740 = pneg %p194
        $region54: #{inception_forward.1} parent=47 // pred_check_branch
          %3742 = sbr.rel (%p3740) target = $region56
        $region55: #{inception_forward.1} parent=47 // pred_region
          %s3744 = ssub.s32 4096, 4096
          %3745 = vsyncadd %s3736, %s3744
          %s3746 = smul.addr %s24, 32
          %s3747 = smul.addr %s3746, 128
          %s3748 = scalar_lea.hbm %s7, %s3747
          %s3749 = sshll.u32 %s3739, 4
          %s3750 = int_to_ptr.vmem [resolvable:$true] %s3749
          %3755 = dma.vmem_to_hbm [thread:$0]  %s3750, 4096, %s3748, %s3736, 128, 128, 8
        $region56: #{inception_forward.1} parent=47 // pred_fallthru
          _
      $region48: #{inception_forward.1} parent=5 // pred_fallthru
        _
      %p3756 = scmp.le.s32.totalorder 2, %s19
      // Predicated region
      $region57: #{inception_forward.1} parent=5 // pred_check
        %p3757 = pneg %p3756
      $region58: #{inception_forward.1} parent=5 // pred_check_branch
        %3759 = sbr.rel (%p3757) target = $region60
      $region59: #{inception_forward.1} parent=5 // pred_region
        %s3760 = ssub.s32 %s19, 2
        // Predicated region
        $region61: #{inception_forward.1} parent=59 // pred_check
          %p3761 = pneg %p200
        $region62: #{inception_forward.1} parent=59 // pred_check_branch
          %3763 = sbr.rel (%p3761) target = $region64
        $region63: #{inception_forward.1} parent=59 // pred_region
          %s3764 = sand.u32 %s185, 1
          %s3765 = scalar_lea.sflag [#allocation6], %s3764
          %s3766 = sand.u32 %s185, 1
          %s3767 = smul.addr %s3766, 256
          %s3768 = scalar_lea.vmem [#allocation7], %s3767
          %3769 = dma.done %s3765, 4096
        $region64: #{inception_forward.1} parent=59 // pred_fallthru
          _
      $region60: #{inception_forward.1} parent=5 // pred_fallthru
        _
    $region6: #{inception_forward.1} parent=1 // loop_footer
      %s23 = sadd.s32 1, %s19
    $region7: #{inception_forward.1} parent=1 // loop_footer_branch
      %18 = sbr.rel target = $region3
    $region8: #{inception_forward.1} parent=1 // loop_exit
      _
    %3770 = vsyncpa [#allocation5], 1
    %s3771 = scalar_lea.sflag [#allocation5], 1
    %3772 = vsyncpa %s3771, 1
    %3773 = vsyncpa [#allocation6], 1
    %s3774 = scalar_lea.sflag [#allocation6], 1
    %3775 = vsyncpa %s3774, 1

</llo_original>
